<compile_context>
chip_gen: v6e
topology: v6e:2x2x1
jax: 0.10.0
libtpu: 0.0.40
codegen_flags: <defaults>
</compile_context>

<pallas_src>
import functools

import jax
import jax.numpy as jnp
from jax import lax
from jax.experimental import pallas as pl
from jax.experimental.pallas import tpu as pltpu


# ----------------------------------------------------------------------------
# Pallas kernels
# ----------------------------------------------------------------------------
def _mm_kernel(a_ref, b_ref, o_ref):
    """Single-K-step matmul tile: (tm,Kp)x(Kp,Np) -> (tm,Np), f32 accumulate."""
    o_ref[...] = jnp.dot(a_ref[...], b_ref[...], preferred_element_type=jnp.float32)


def _mm_bias_kernel(a_ref, b_ref, bias_ref, o_ref):
    o_ref[...] = (jnp.dot(a_ref[...], b_ref[...], preferred_element_type=jnp.float32)
                  + bias_ref[...])


def _bn_act_kernel(x_ref, s_ref, t_ref, o_ref, *, relu):
    """y = x*scale + shift (per lane-dense channel), optional ReLU."""
    r = x_ref[...] * s_ref[...] + t_ref[...]
    if relu:
        r = jnp.maximum(r, 0.0)
    o_ref[...] = r


def _bn_add_relu_kernel(x_ref, s_ref, t_ref, res_ref, o_ref):
    """y = relu(x*scale + shift + residual)  (residual-block epilogue)."""
    r = x_ref[...] * s_ref[...] + t_ref[...] + res_ref[...]
    o_ref[...] = jnp.maximum(r, 0.0)


def _avgpool_kernel(x_ref, o_ref):
    """x: (B, H*W, C) -> mean over spatial axis -> (B, 1, C)."""
    o_ref[...] = jnp.mean(x_ref[...], axis=1, keepdims=True)


# ----------------------------------------------------------------------------
# Wrappers around pallas_call
# ----------------------------------------------------------------------------
def _round_up(v, m):
    return ((v + m - 1) // m) * m


def matmul(a, b, bias=None, *, tm=256):
    """a:(M,K) @ b:(K,N) [+ bias] -> (M,N) f32.  bf16 MXU operands, f32 acc.

    K and N are small for every GEMM in this net, so they are padded to one
    full tile each and only M is gridded (single K step, weights stay resident).
    """
    M, K = a.shape
    Kb, N = b.shape
    assert K == Kb
    Kp = _round_up(K, 128)
    Np = _round_up(N, 128)
    tm_eff = min(tm, _round_up(M, 8))
    Mp = _round_up(M, tm_eff)

    a_p = jnp.pad(a.astype(jnp.bfloat16), ((0, Mp - M), (0, Kp - K)))
    b_p = jnp.pad(b.astype(jnp.bfloat16), ((0, Kp - K), (0, Np - N)))

    in_specs = [
        pl.BlockSpec((tm_eff, Kp), lambda i: (i, 0)),
        pl.BlockSpec((Kp, Np), lambda i: (0, 0)),
    ]
    args = [a_p, b_p]
    kernel = _mm_kernel
    if bias is not None:
        bias_p = jnp.pad(bias.astype(jnp.float32).reshape(1, N),
                         ((0, 0), (0, Np - N)))
        in_specs.append(pl.BlockSpec((1, Np), lambda i: (0, 0)))
        args.append(bias_p)
        kernel = _mm_bias_kernel

    out = pl.pallas_call(
        kernel,
        out_shape=jax.ShapeDtypeStruct((Mp, Np), jnp.float32),
        grid=(Mp // tm_eff,),
        in_specs=in_specs,
        out_specs=pl.BlockSpec((tm_eff, Np), lambda i: (i, 0)),
        compiler_params=pltpu.CompilerParams(dimension_semantics=("parallel",)),
    )(*args)
    return out[:M, :N]


def _im2col(x, kh, kw, stride, padding):
    """x: NHWC -> patches (B*OH*OW, kh*kw*C) in (kh, kw, C) column order."""
    B, H, W, C = x.shape
    xp = jnp.pad(x, ((0, 0), (padding, padding), (padding, padding), (0, 0)))
    OH = (H + 2 * padding - kh) // stride + 1
    OW = (W + 2 * padding - kw) // stride + 1
    cols = []
    for i in range(kh):
        for j in range(kw):
            cols.append(xp[:, i:i + stride * OH:stride, j:j + stride * OW:stride, :])
    patches = jnp.stack(cols, axis=3).reshape(B * OH * OW, kh * kw * C)
    return patches, OH, OW


def conv3x3_pallas(x_nhwc, w, stride):
    """conv3x3 (padding=1, bias=False).  w: PyTorch layout (OC, IC, 3, 3).

    Returns the conv output as (B*OH*OW, OC) f32 plus the output spatial size.
    """
    OC, IC, KH, KW = w.shape
    patches, OH, OW = _im2col(x_nhwc, KH, KW, stride, padding=1)
    wm = jnp.transpose(w, (2, 3, 1, 0)).reshape(KH * KW * IC, OC)
    y = matmul(patches, wm)
    return y, OH, OW


def batchnorm_apply(y, gamma, beta, *, relu, residual=None, eps=1e-5):
    """Training-mode BatchNorm2d on a (B*H*W, C) conv output, fused with an
    optional residual add and ReLU in a lane-dense Pallas elementwise kernel."""
    M, C = y.shape
    mean = jnp.mean(y, axis=0)
    var = jnp.var(y, axis=0)                      # biased, as in PyTorch training
    scale = (gamma * lax.rsqrt(var + eps)).astype(jnp.float32)
    shift = (beta - mean * scale).astype(jnp.float32)

    # Fold channels into the 128-lane dimension when possible (C in {16,32,64}).
    if 128 % C == 0 and (M * C) % 128 == 0:
        rep = 128 // C
        R = (M * C) // 128
        x2 = y.reshape(R, 128)
        s2 = jnp.tile(scale, rep).reshape(1, 128)
        t2 = jnp.tile(shift, rep).reshape(1, 128)
        r2 = None if residual is None else residual.reshape(R, 128)
    else:  # fallback: full-array block, last dim == C
        x2, s2, t2 = y, scale.reshape(1, C), shift.reshape(1, C)
        r2 = residual

    if r2 is None:
        out2 = pl.pallas_call(
            functools.partial(_bn_act_kernel, relu=relu),
            out_shape=jax.ShapeDtypeStruct(x2.shape, jnp.float32),
        )(x2, s2, t2)
    else:
        out2 = pl.pallas_call(
            _bn_add_relu_kernel,
            out_shape=jax.ShapeDtypeStruct(x2.shape, jnp.float32),
        )(x2, s2, t2, r2)
    return out2.reshape(M, C)


def global_avgpool(x_nhwc):
    """F.avg_pool2d(kernel_size=8) for the 8x8 feature map == global mean."""
    B, H, W, C = x_nhwc.shape
    assert H == 8 and W == 8, "avg_pool2d(kernel_size=8) expects an 8x8 map here"
    x3 = x_nhwc.reshape(B, H * W, C)
    out = pl.pallas_call(
        _avgpool_kernel,
        out_shape=jax.ShapeDtypeStruct((B, 1, C), jnp.float32),
    )(x3)
    return out.reshape(B, C)


# ----------------------------------------------------------------------------
# ResNet forward (mirrors the PyTorch forward)
# ----------------------------------------------------------------------------
def residual_block(x_nhwc, p, *, stride):
    """conv3x3 -> BN -> ReLU -> conv3x3 -> BN -> (+skip) -> ReLU."""
    B = x_nhwc.shape[0]
    C_out = p["conv1_w"].shape[0]

    y1, OH, OW = conv3x3_pallas(x_nhwc, p["conv1_w"], stride)
    h1 = batchnorm_apply(y1, p["bn1_g"], p["bn1_b"], relu=True)
    h1_nhwc = h1.reshape(B, OH, OW, C_out)

    y2, _, _ = conv3x3_pallas(h1_nhwc, p["conv2_w"], 1)

    if "ds_w" in p:   # downsample = conv3x3(stride) + BN
        yd, _, _ = conv3x3_pallas(x_nhwc, p["ds_w"], stride)
        res = batchnorm_apply(yd, p["ds_g"], p["ds_b"], relu=False)
    else:             # identity skip (same shape, stride 1)
        res = x_nhwc.reshape(B * OH * OW, C_out)

    out = batchnorm_apply(y2, p["bn2_g"], p["bn2_b"], relu=True, residual=res)
    return out.reshape(B, OH, OW, C_out)


def resnet_forward(params, x_nchw):
    # Public interface is NCHW (PyTorch); convert once to NHWC internally.
    x = jnp.transpose(x_nchw.astype(jnp.float32), (0, 2, 3, 1))
    B = x.shape[0]

    # stem: conv3x3(3,16) -> BN -> ReLU
    y, OH, OW = conv3x3_pallas(x, params["conv_w"], 1)
    h = batchnorm_apply(y, params["bn_g"], params["bn_b"], relu=True)
    x = h.reshape(B, OH, OW, params["conv_w"].shape[0])

    def run_layer(x, layer_params, first_stride):
        for i, blk in enumerate(layer_params):
            x = residual_block(x, blk, stride=first_stride if i == 0 else 1)
        return x

    x = run_layer(x, params["layer1"], 1)
    x = run_layer(x, params["layer2"], 2)
    x = run_layer(x, params["layer3"], 2)

    pooled = global_avgpool(x)                                   # (B, 64)
    out = matmul(pooled, params["fc_w"].T, bias=params["fc_b"])  # (B, num_classes)
    return out


# ----------------------------------------------------------------------------
# Deterministic parameter init (shapes from ResNet.__init__ with layers=(2, 2))
# ----------------------------------------------------------------------------
def init_params(key, num_classes=10, layers=(2, 2)):
    keys = iter(jax.random.split(key, 64))

    def conv_w(oc, ic):
        fan_in = ic * 9
        return jax.random.normal(next(keys), (oc, ic, 3, 3), jnp.float32) / jnp.sqrt(fan_in)

    def bn_params(c):  # PyTorch BatchNorm2d default init: weight=1, bias=0
        return jnp.ones((c,), jnp.float32), jnp.zeros((c,), jnp.float32)

    p = {"conv_w": conv_w(16, 3)}
    p["bn_g"], p["bn_b"] = bn_params(16)

    def make_layer(in_c, out_c, n_blocks, stride):
        blocks = []
        for i in range(n_blocks):
            ic = in_c if i == 0 else out_c
            blk = {"conv1_w": conv_w(out_c, ic), "conv2_w": conv_w(out_c, out_c)}
            blk["bn1_g"], blk["bn1_b"] = bn_params(out_c)
            blk["bn2_g"], blk["bn2_b"] = bn_params(out_c)
            if i == 0 and (stride != 1 or in_c != out_c):
                blk["ds_w"] = conv_w(out_c, ic)
                blk["ds_g"], blk["ds_b"] = bn_params(out_c)
            blocks.append(blk)
        return blocks

    p["layer1"] = make_layer(16, 16, layers[0], 1)
    p["layer2"] = make_layer(16, 32, layers[0], 2)
    p["layer3"] = make_layer(32, 64, layers[1], 2)

    kf_w, kf_b = jax.random.split(next(keys))
    p["fc_w"] = jax.random.normal(kf_w, (num_classes, 64), jnp.float32) / jnp.sqrt(64.0)
    p["fc_b"] = jax.random.normal(kf_b, (num_classes,), jnp.float32) * 0.01
    return p


if __name__ == "__main__":
    num_classes = 10
    key = jax.random.PRNGKey(0)
    k_param, k_x = jax.random.split(key)

    params = init_params(k_param, num_classes=num_classes, layers=(2, 2))
    # CIFAR-style 32x32 input: 32 -> 32 -> 16 -> 8 spatial, so avg_pool2d(8)
    # flattens to exactly 64 features, matching Linear(64, num_classes).
    x = jax.random.normal(k_x, (2, 3, 32, 32), jnp.float32)

    fwd = jax.jit(resnet_forward)
    out = jax.block_until_ready(fwd(params, x))

    assert out.shape == (2, num_classes), out.shape
    assert bool(jnp.all(jnp.isfinite(out)))
    print("KERNEL_OK")
</pallas_src>

<mosaic_0001>
module attributes {stable_mosaic.version = 11 : i64} {
  func.func @_mm_kernel(%arg0: i32, %arg1: memref<256x128xbf16, #tpu.memory_space<vmem>>, %arg2: memref<128x128xbf16, #tpu.memory_space<vmem>>, %arg3: memref<256x128xf32, #tpu.memory_space<vmem>>) attributes {dimension_semantics = [#tpu.dimension_semantics<parallel>], iteration_bounds = array<i64: 8>, scalar_prefetch = 0 : i64, scratch_operands = 0 : i64, tpu.core_type = #tpu.core_type<tc>, window_params = [{transform_indices = @transform_0, window_bounds = array<i64: 256, 128>}, {pipeline_mode = #tpu.pipeline_mode<synchronous>, transform_indices = @transform_1, window_bounds = array<i64: 128, 128>}, {transform_indices = @transform_2, window_bounds = array<i64: 256, 128>}]} {
    %c0 = arith.constant 0 : index
    %c0_0 = arith.constant 0 : index
    %0 = vector.load %arg1[%c0, %c0_0] : memref<256x128xbf16, #tpu.memory_space<vmem>>, vector<256x128xbf16>
    %c0_1 = arith.constant 0 : index
    %c0_2 = arith.constant 0 : index
    %1 = vector.load %arg2[%c0_1, %c0_2] : memref<128x128xbf16, #tpu.memory_space<vmem>>, vector<128x128xbf16>
    %cst = arith.constant dense<0.000000e+00> : vector<256x128xf32>
    %2 = tpu.matmul %0, %1, %cst {dimension_numbers = #tpu.dot_dimension_numbers<[1], [0], [0], [1], [0, 0, 1, 1], [], []>} : vector<256x128xbf16>, vector<128x128xbf16>, vector<256x128xf32> -> vector<256x128xf32>
    %c0_3 = arith.constant 0 : index
    %c0_4 = arith.constant 0 : index
    %3 = vector.load %arg3[%c0_3, %c0_4] : memref<256x128xf32, #tpu.memory_space<vmem>>, vector<256x128xf32>
    tpu.vector_store %arg3[%c0_3, %c0_4], %2 {strides = array<i32>} : memref<256x128xf32, #tpu.memory_space<vmem>>, vector<256x128xf32>,
    return
  }
  func.func @transform_0(%arg0: i32) -> (i32, i32) {
    %c0_i32 = arith.constant 0 : i32
    %c0_i32_0 = arith.constant 0 : i32
    return %arg0, %c0_i32 : i32, i32
  }
  func.func @transform_1(%arg0: i32) -> (i32, i32) {
    %c0_i32 = arith.constant 0 : i32
    %c0_i32_0 = arith.constant 0 : i32
    %c0_i32_1 = arith.constant 0 : i32
    return %c0_i32, %c0_i32_0 : i32, i32
  }
  func.func @transform_2(%arg0: i32) -> (i32, i32) {
    %c0_i32 = arith.constant 0 : i32
    %c0_i32_0 = arith.constant 0 : i32
    return %arg0, %c0_i32 : i32, i32
  }
}

module attributes {stable_mosaic.version = 11 : i64} {
  func.func @_bn_act_kernel(%arg0: memref<256x128xf32, #tpu.memory_space<vmem>>, %arg1: memref<1x128xf32, #tpu.memory_space<vmem>>, %arg2: memref<1x128xf32, #tpu.memory_space<vmem>>, %arg3: memref<256x128xf32, #tpu.memory_space<vmem>>) attributes {dimension_semantics = [], scalar_prefetch = 0 : i64, scratch_operands = 0 : i64, tpu.core_type = #tpu.core_type<tc>} {
    %c0 = arith.constant 0 : index
    %c0_0 = arith.constant 0 : index
    %0 = vector.load %arg0[%c0, %c0_0] : memref<256x128xf32, #tpu.memory_space<vmem>>, vector<256x128xf32>
    %c0_1 = arith.constant 0 : index
    %c0_2 = arith.constant 0 : index
    %1 = vector.load %arg1[%c0_1, %c0_2] : memref<1x128xf32, #tpu.memory_space<vmem>>, vector<1x128xf32>
    %2 = vector.broadcast %1 : vector<1x128xf32> to vector<256x128xf32>
    %3 = arith.mulf %0, %2 : vector<256x128xf32>
    %c0_3 = arith.constant 0 : index
    %c0_4 = arith.constant 0 : index
    %4 = vector.load %arg2[%c0_3, %c0_4] : memref<1x128xf32, #tpu.memory_space<vmem>>, vector<1x128xf32>
    %5 = vector.broadcast %4 : vector<1x128xf32> to vector<256x128xf32>
    %6 = arith.addf %3, %5 : vector<256x128xf32>
    %cst = arith.constant 0.000000e+00 : f32
    %7 = vector.broadcast %cst : f32 to vector<256x128xf32>
    %8 = arith.maximumf %6, %7 : vector<256x128xf32>
    %c0_5 = arith.constant 0 : index
    %c0_6 = arith.constant 0 : index
    %9 = vector.load %arg3[%c0_5, %c0_6] : memref<256x128xf32, #tpu.memory_space<vmem>>, vector<256x128xf32>
    tpu.vector_store %arg3[%c0_5, %c0_6], %8 {strides = array<i32>} : memref<256x128xf32, #tpu.memory_space<vmem>>, vector<256x128xf32>,
    return
  }
}

module attributes {stable_mosaic.version = 11 : i64} {
  func.func @_mm_kernel(%arg0: i32, %arg1: memref<256x256xbf16, #tpu.memory_space<vmem>>, %arg2: memref<256x128xbf16, #tpu.memory_space<vmem>>, %arg3: memref<256x128xf32, #tpu.memory_space<vmem>>) attributes {dimension_semantics = [#tpu.dimension_semantics<parallel>], iteration_bounds = array<i64: 8>, scalar_prefetch = 0 : i64, scratch_operands = 0 : i64, tpu.core_type = #tpu.core_type<tc>, window_params = [{transform_indices = @transform_0, window_bounds = array<i64: 256, 256>}, {pipeline_mode = #tpu.pipeline_mode<synchronous>, transform_indices = @transform_1, window_bounds = array<i64: 256, 128>}, {transform_indices = @transform_2, window_bounds = array<i64: 256, 128>}]} {
    %c0 = arith.constant 0 : index
    %c0_0 = arith.constant 0 : index
    %0 = vector.load %arg1[%c0, %c0_0] : memref<256x256xbf16, #tpu.memory_space<vmem>>, vector<256x256xbf16>
    %c0_1 = arith.constant 0 : index
    %c0_2 = arith.constant 0 : index
    %1 = vector.load %arg2[%c0_1, %c0_2] : memref<256x128xbf16, #tpu.memory_space<vmem>>, vector<256x128xbf16>
    %cst = arith.constant dense<0.000000e+00> : vector<256x128xf32>
    %2 = tpu.matmul %0, %1, %cst {dimension_numbers = #tpu.dot_dimension_numbers<[1], [0], [0], [1], [0, 0, 1, 1], [], []>} : vector<256x256xbf16>, vector<256x128xbf16>, vector<256x128xf32> -> vector<256x128xf32>
    %c0_3 = arith.constant 0 : index
    %c0_4 = arith.constant 0 : index
    %3 = vector.load %arg3[%c0_3, %c0_4] : memref<256x128xf32, #tpu.memory_space<vmem>>, vector<256x128xf32>
    tpu.vector_store %arg3[%c0_3, %c0_4], %2 {strides = array<i32>} : memref<256x128xf32, #tpu.memory_space<vmem>>, vector<256x128xf32>,
    return
  }
  func.func @transform_0(%arg0: i32) -> (i32, i32) {
    %c0_i32 = arith.constant 0 : i32
    %c0_i32_0 = arith.constant 0 : i32
    return %arg0, %c0_i32 : i32, i32
  }
  func.func @transform_1(%arg0: i32) -> (i32, i32) {
    %c0_i32 = arith.constant 0 : i32
    %c0_i32_0 = arith.constant 0 : i32
    %c0_i32_1 = arith.constant 0 : i32
    return %c0_i32, %c0_i32_0 : i32, i32
  }
  func.func @transform_2(%arg0: i32) -> (i32, i32) {
    %c0_i32 = arith.constant 0 : i32
    %c0_i32_0 = arith.constant 0 : i32
    return %arg0, %c0_i32 : i32, i32
  }
}

module attributes {stable_mosaic.version = 11 : i64} {
  func.func @_bn_add_relu_kernel(%arg0: memref<256x128xf32, #tpu.memory_space<vmem>>, %arg1: memref<1x128xf32, #tpu.memory_space<vmem>>, %arg2: memref<1x128xf32, #tpu.memory_space<vmem>>, %arg3: memref<256x128xf32, #tpu.memory_space<vmem>>, %arg4: memref<256x128xf32, #tpu.memory_space<vmem>>) attributes {dimension_semantics = [], scalar_prefetch = 0 : i64, scratch_operands = 0 : i64, tpu.core_type = #tpu.core_type<tc>} {
    %c0 = arith.constant 0 : index
    %c0_0 = arith.constant 0 : index
    %0 = vector.load %arg0[%c0, %c0_0] : memref<256x128xf32, #tpu.memory_space<vmem>>, vector<256x128xf32>
    %c0_1 = arith.constant 0 : index
    %c0_2 = arith.constant 0 : index
    %1 = vector.load %arg1[%c0_1, %c0_2] : memref<1x128xf32, #tpu.memory_space<vmem>>, vector<1x128xf32>
    %2 = vector.broadcast %1 : vector<1x128xf32> to vector<256x128xf32>
    %3 = arith.mulf %0, %2 : vector<256x128xf32>
    %c0_3 = arith.constant 0 : index
    %c0_4 = arith.constant 0 : index
    %4 = vector.load %arg2[%c0_3, %c0_4] : memref<1x128xf32, #tpu.memory_space<vmem>>, vector<1x128xf32>
    %5 = vector.broadcast %4 : vector<1x128xf32> to vector<256x128xf32>
    %6 = arith.addf %3, %5 : vector<256x128xf32>
    %c0_5 = arith.constant 0 : index
    %c0_6 = arith.constant 0 : index
    %7 = vector.load %arg3[%c0_5, %c0_6] : memref<256x128xf32, #tpu.memory_space<vmem>>, vector<256x128xf32>
    %8 = arith.addf %6, %7 : vector<256x128xf32>
    %cst = arith.constant 0.000000e+00 : f32
    %9 = vector.broadcast %cst : f32 to vector<256x128xf32>
    %10 = arith.maximumf %8, %9 : vector<256x128xf32>
    %c0_7 = arith.constant 0 : index
    %c0_8 = arith.constant 0 : index
    %11 = vector.load %arg4[%c0_7, %c0_8] : memref<256x128xf32, #tpu.memory_space<vmem>>, vector<256x128xf32>
    tpu.vector_store %arg4[%c0_7, %c0_8], %10 {strides = array<i32>} : memref<256x128xf32, #tpu.memory_space<vmem>>, vector<256x128xf32>,
    return
  }
}

module attributes {stable_mosaic.version = 11 : i64} {
  func.func @_mm_kernel(%arg0: i32, %arg1: memref<256x256xbf16, #tpu.memory_space<vmem>>, %arg2: memref<256x128xbf16, #tpu.memory_space<vmem>>, %arg3: memref<256x128xf32, #tpu.memory_space<vmem>>) attributes {dimension_semantics = [#tpu.dimension_semantics<parallel>], iteration_bounds = array<i64: 2>, scalar_prefetch = 0 : i64, scratch_operands = 0 : i64, tpu.core_type = #tpu.core_type<tc>, window_params = [{transform_indices = @transform_0, window_bounds = array<i64: 256, 256>}, {pipeline_mode = #tpu.pipeline_mode<synchronous>, transform_indices = @transform_1, window_bounds = array<i64: 256, 128>}, {transform_indices = @transform_2, window_bounds = array<i64: 256, 128>}]} {
    %c0 = arith.constant 0 : index
    %c0_0 = arith.constant 0 : index
    %0 = vector.load %arg1[%c0, %c0_0] : memref<256x256xbf16, #tpu.memory_space<vmem>>, vector<256x256xbf16>
    %c0_1 = arith.constant 0 : index
    %c0_2 = arith.constant 0 : index
    %1 = vector.load %arg2[%c0_1, %c0_2] : memref<256x128xbf16, #tpu.memory_space<vmem>>, vector<256x128xbf16>
    %cst = arith.constant dense<0.000000e+00> : vector<256x128xf32>
    %2 = tpu.matmul %0, %1, %cst {dimension_numbers = #tpu.dot_dimension_numbers<[1], [0], [0], [1], [0, 0, 1, 1], [], []>} : vector<256x256xbf16>, vector<256x128xbf16>, vector<256x128xf32> -> vector<256x128xf32>
    %c0_3 = arith.constant 0 : index
    %c0_4 = arith.constant 0 : index
    %3 = vector.load %arg3[%c0_3, %c0_4] : memref<256x128xf32, #tpu.memory_space<vmem>>, vector<256x128xf32>
    tpu.vector_store %arg3[%c0_3, %c0_4], %2 {strides = array<i32>} : memref<256x128xf32, #tpu.memory_space<vmem>>, vector<256x128xf32>,
    return
  }
  func.func @transform_0(%arg0: i32) -> (i32, i32) {
    %c0_i32 = arith.constant 0 : i32
    %c0_i32_0 = arith.constant 0 : i32
    return %arg0, %c0_i32 : i32, i32
  }
  func.func @transform_1(%arg0: i32) -> (i32, i32) {
    %c0_i32 = arith.constant 0 : i32
    %c0_i32_0 = arith.constant 0 : i32
    %c0_i32_1 = arith.constant 0 : i32
    return %c0_i32, %c0_i32_0 : i32, i32
  }
  func.func @transform_2(%arg0: i32) -> (i32, i32) {
    %c0_i32 = arith.constant 0 : i32
    %c0_i32_0 = arith.constant 0 : i32
    return %arg0, %c0_i32 : i32, i32
  }
}

module attributes {stable_mosaic.version = 11 : i64} {
  func.func @_bn_act_kernel(%arg0: memref<128x128xf32, #tpu.memory_space<vmem>>, %arg1: memref<1x128xf32, #tpu.memory_space<vmem>>, %arg2: memref<1x128xf32, #tpu.memory_space<vmem>>, %arg3: memref<128x128xf32, #tpu.memory_space<vmem>>) attributes {dimension_semantics = [], scalar_prefetch = 0 : i64, scratch_operands = 0 : i64, tpu.core_type = #tpu.core_type<tc>} {
    %c0 = arith.constant 0 : index
    %c0_0 = arith.constant 0 : index
    %0 = vector.load %arg0[%c0, %c0_0] : memref<128x128xf32, #tpu.memory_space<vmem>>, vector<128x128xf32>
    %c0_1 = arith.constant 0 : index
    %c0_2 = arith.constant 0 : index
    %1 = vector.load %arg1[%c0_1, %c0_2] : memref<1x128xf32, #tpu.memory_space<vmem>>, vector<1x128xf32>
    %2 = vector.broadcast %1 : vector<1x128xf32> to vector<128x128xf32>
    %3 = arith.mulf %0, %2 : vector<128x128xf32>
    %c0_3 = arith.constant 0 : index
    %c0_4 = arith.constant 0 : index
    %4 = vector.load %arg2[%c0_3, %c0_4] : memref<1x128xf32, #tpu.memory_space<vmem>>, vector<1x128xf32>
    %5 = vector.broadcast %4 : vector<1x128xf32> to vector<128x128xf32>
    %6 = arith.addf %3, %5 : vector<128x128xf32>
    %c0_5 = arith.constant 0 : index
    %c0_6 = arith.constant 0 : index
    %7 = vector.load %arg3[%c0_5, %c0_6] : memref<128x128xf32, #tpu.memory_space<vmem>>, vector<128x128xf32>
    tpu.vector_store %arg3[%c0_5, %c0_6], %6 {strides = array<i32>} : memref<128x128xf32, #tpu.memory_space<vmem>>, vector<128x128xf32>,
    return
  }
}

module attributes {stable_mosaic.version = 11 : i64} {
  func.func @_bn_act_kernel(%arg0: memref<128x128xf32, #tpu.memory_space<vmem>>, %arg1: memref<1x128xf32, #tpu.memory_space<vmem>>, %arg2: memref<1x128xf32, #tpu.memory_space<vmem>>, %arg3: memref<128x128xf32, #tpu.memory_space<vmem>>) attributes {dimension_semantics = [], scalar_prefetch = 0 : i64, scratch_operands = 0 : i64, tpu.core_type = #tpu.core_type<tc>} {
    %c0 = arith.constant 0 : index
    %c0_0 = arith.constant 0 : index
    %0 = vector.load %arg0[%c0, %c0_0] : memref<128x128xf32, #tpu.memory_space<vmem>>, vector<128x128xf32>
    %c0_1 = arith.constant 0 : index
    %c0_2 = arith.constant 0 : index
    %1 = vector.load %arg1[%c0_1, %c0_2] : memref<1x128xf32, #tpu.memory_space<vmem>>, vector<1x128xf32>
    %2 = vector.broadcast %1 : vector<1x128xf32> to vector<128x128xf32>
    %3 = arith.mulf %0, %2 : vector<128x128xf32>
    %c0_3 = arith.constant 0 : index
    %c0_4 = arith.constant 0 : index
    %4 = vector.load %arg2[%c0_3, %c0_4] : memref<1x128xf32, #tpu.memory_space<vmem>>, vector<1x128xf32>
    %5 = vector.broadcast %4 : vector<1x128xf32> to vector<128x128xf32>
    %6 = arith.addf %3, %5 : vector<128x128xf32>
    %cst = arith.constant 0.000000e+00 : f32
    %7 = vector.broadcast %cst : f32 to vector<128x128xf32>
    %8 = arith.maximumf %6, %7 : vector<128x128xf32>
    %c0_5 = arith.constant 0 : index
    %c0_6 = arith.constant 0 : index
    %9 = vector.load %arg3[%c0_5, %c0_6] : memref<128x128xf32, #tpu.memory_space<vmem>>, vector<128x128xf32>
    tpu.vector_store %arg3[%c0_5, %c0_6], %8 {strides = array<i32>} : memref<128x128xf32, #tpu.memory_space<vmem>>, vector<128x128xf32>,
    return
  }
}

module attributes {stable_mosaic.version = 11 : i64} {
  func.func @_mm_kernel(%arg0: i32, %arg1: memref<256x384xbf16, #tpu.memory_space<vmem>>, %arg2: memref<384x128xbf16, #tpu.memory_space<vmem>>, %arg3: memref<256x128xf32, #tpu.memory_space<vmem>>) attributes {dimension_semantics = [#tpu.dimension_semantics<parallel>], iteration_bounds = array<i64: 2>, scalar_prefetch = 0 : i64, scratch_operands = 0 : i64, tpu.core_type = #tpu.core_type<tc>, window_params = [{transform_indices = @transform_0, window_bounds = array<i64: 256, 384>}, {pipeline_mode = #tpu.pipeline_mode<synchronous>, transform_indices = @transform_1, window_bounds = array<i64: 384, 128>}, {transform_indices = @transform_2, window_bounds = array<i64: 256, 128>}]} {
    %c0 = arith.constant 0 : index
    %c0_0 = arith.constant 0 : index
    %0 = vector.load %arg1[%c0, %c0_0] : memref<256x384xbf16, #tpu.memory_space<vmem>>, vector<256x384xbf16>
    %c0_1 = arith.constant 0 : index
    %c0_2 = arith.constant 0 : index
    %1 = vector.load %arg2[%c0_1, %c0_2] : memref<384x128xbf16, #tpu.memory_space<vmem>>, vector<384x128xbf16>
    %cst = arith.constant dense<0.000000e+00> : vector<256x128xf32>
    %2 = tpu.matmul %0, %1, %cst {dimension_numbers = #tpu.dot_dimension_numbers<[1], [0], [0], [1], [0, 0, 1, 1], [], []>} : vector<256x384xbf16>, vector<384x128xbf16>, vector<256x128xf32> -> vector<256x128xf32>
    %c0_3 = arith.constant 0 : index
    %c0_4 = arith.constant 0 : index
    %3 = vector.load %arg3[%c0_3, %c0_4] : memref<256x128xf32, #tpu.memory_space<vmem>>, vector<256x128xf32>
    tpu.vector_store %arg3[%c0_3, %c0_4], %2 {strides = array<i32>} : memref<256x128xf32, #tpu.memory_space<vmem>>, vector<256x128xf32>,
    return
  }
  func.func @transform_0(%arg0: i32) -> (i32, i32) {
    %c0_i32 = arith.constant 0 : i32
    %c0_i32_0 = arith.constant 0 : i32
    return %arg0, %c0_i32 : i32, i32
  }
  func.func @transform_1(%arg0: i32) -> (i32, i32) {
    %c0_i32 = arith.constant 0 : i32
    %c0_i32_0 = arith.constant 0 : i32
    %c0_i32_1 = arith.constant 0 : i32
    return %c0_i32, %c0_i32_0 : i32, i32
  }
  func.func @transform_2(%arg0: i32) -> (i32, i32) {
    %c0_i32 = arith.constant 0 : i32
    %c0_i32_0 = arith.constant 0 : i32
    return %arg0, %c0_i32 : i32, i32
  }
}

module attributes {stable_mosaic.version = 11 : i64} {
  func.func @_bn_add_relu_kernel(%arg0: memref<128x128xf32, #tpu.memory_space<vmem>>, %arg1: memref<1x128xf32, #tpu.memory_space<vmem>>, %arg2: memref<1x128xf32, #tpu.memory_space<vmem>>, %arg3: memref<128x128xf32, #tpu.memory_space<vmem>>, %arg4: memref<128x128xf32, #tpu.memory_space<vmem>>) attributes {dimension_semantics = [], scalar_prefetch = 0 : i64, scratch_operands = 0 : i64, tpu.core_type = #tpu.core_type<tc>} {
    %c0 = arith.constant 0 : index
    %c0_0 = arith.constant 0 : index
    %0 = vector.load %arg0[%c0, %c0_0] : memref<128x128xf32, #tpu.memory_space<vmem>>, vector<128x128xf32>
    %c0_1 = arith.constant 0 : index
    %c0_2 = arith.constant 0 : index
    %1 = vector.load %arg1[%c0_1, %c0_2] : memref<1x128xf32, #tpu.memory_space<vmem>>, vector<1x128xf32>
    %2 = vector.broadcast %1 : vector<1x128xf32> to vector<128x128xf32>
    %3 = arith.mulf %0, %2 : vector<128x128xf32>
    %c0_3 = arith.constant 0 : index
    %c0_4 = arith.constant 0 : index
    %4 = vector.load %arg2[%c0_3, %c0_4] : memref<1x128xf32, #tpu.memory_space<vmem>>, vector<1x128xf32>
    %5 = vector.broadcast %4 : vector<1x128xf32> to vector<128x128xf32>
    %6 = arith.addf %3, %5 : vector<128x128xf32>
    %c0_5 = arith.constant 0 : index
    %c0_6 = arith.constant 0 : index
    %7 = vector.load %arg3[%c0_5, %c0_6] : memref<128x128xf32, #tpu.memory_space<vmem>>, vector<128x128xf32>
    %8 = arith.addf %6, %7 : vector<128x128xf32>
    %cst = arith.constant 0.000000e+00 : f32
    %9 = vector.broadcast %cst : f32 to vector<128x128xf32>
    %10 = arith.maximumf %8, %9 : vector<128x128xf32>
    %c0_7 = arith.constant 0 : index
    %c0_8 = arith.constant 0 : index
    %11 = vector.load %arg4[%c0_7, %c0_8] : memref<128x128xf32, #tpu.memory_space<vmem>>, vector<128x128xf32>
    tpu.vector_store %arg4[%c0_7, %c0_8], %10 {strides = array<i32>} : memref<128x128xf32, #tpu.memory_space<vmem>>, vector<128x128xf32>,
    return
  }
}

module attributes {stable_mosaic.version = 11 : i64} {
  func.func @_mm_kernel(%arg0: i32, %arg1: memref<128x384xbf16, #tpu.memory_space<vmem>>, %arg2: memref<384x128xbf16, #tpu.memory_space<vmem>>, %arg3: memref<128x128xf32, #tpu.memory_space<vmem>>) attributes {dimension_semantics = [#tpu.dimension_semantics<parallel>], iteration_bounds = array<i64: 1>, scalar_prefetch = 0 : i64, scratch_operands = 0 : i64, tpu.core_type = #tpu.core_type<tc>, window_params = [{transform_indices = @transform_0, window_bounds = array<i64: 128, 384>}, {pipeline_mode = #tpu.pipeline_mode<synchronous>, transform_indices = @transform_1, window_bounds = array<i64: 384, 128>}, {transform_indices = @transform_2, window_bounds = array<i64: 128, 128>}]} {
    %c0 = arith.constant 0 : index
    %c0_0 = arith.constant 0 : index
    %0 = vector.load %arg1[%c0, %c0_0] : memref<128x384xbf16, #tpu.memory_space<vmem>>, vector<128x384xbf16>
    %c0_1 = arith.constant 0 : index
    %c0_2 = arith.constant 0 : index
    %1 = vector.load %arg2[%c0_1, %c0_2] : memref<384x128xbf16, #tpu.memory_space<vmem>>, vector<384x128xbf16>
    %cst = arith.constant dense<0.000000e+00> : vector<128x128xf32>
    %2 = tpu.matmul %0, %1, %cst {dimension_numbers = #tpu.dot_dimension_numbers<[1], [0], [0], [1], [0, 0, 1, 1], [], []>} : vector<128x384xbf16>, vector<384x128xbf16>, vector<128x128xf32> -> vector<128x128xf32>
    %c0_3 = arith.constant 0 : index
    %c0_4 = arith.constant 0 : index
    %3 = vector.load %arg3[%c0_3, %c0_4] : memref<128x128xf32, #tpu.memory_space<vmem>>, vector<128x128xf32>
    tpu.vector_store %arg3[%c0_3, %c0_4], %2 {strides = array<i32>} : memref<128x128xf32, #tpu.memory_space<vmem>>, vector<128x128xf32>,
    return
  }
  func.func @transform_0(%arg0: i32) -> (i32, i32) {
    %c0_i32 = arith.constant 0 : i32
    %c0_i32_0 = arith.constant 0 : i32
    return %arg0, %c0_i32 : i32, i32
  }
  func.func @transform_1(%arg0: i32) -> (i32, i32) {
    %c0_i32 = arith.constant 0 : i32
    %c0_i32_0 = arith.constant 0 : i32
    %c0_i32_1 = arith.constant 0 : i32
    return %c0_i32, %c0_i32_0 : i32, i32
  }
  func.func @transform_2(%arg0: i32) -> (i32, i32) {
    %c0_i32 = arith.constant 0 : i32
    %c0_i32_0 = arith.constant 0 : i32
    return %arg0, %c0_i32 : i32, i32
  }
}

module attributes {stable_mosaic.version = 11 : i64} {
  func.func @_bn_act_kernel(%arg0: memref<64x128xf32, #tpu.memory_space<vmem>>, %arg1: memref<1x128xf32, #tpu.memory_space<vmem>>, %arg2: memref<1x128xf32, #tpu.memory_space<vmem>>, %arg3: memref<64x128xf32, #tpu.memory_space<vmem>>) attributes {dimension_semantics = [], scalar_prefetch = 0 : i64, scratch_operands = 0 : i64, tpu.core_type = #tpu.core_type<tc>} {
    %c0 = arith.constant 0 : index
    %c0_0 = arith.constant 0 : index
    %0 = vector.load %arg0[%c0, %c0_0] : memref<64x128xf32, #tpu.memory_space<vmem>>, vector<64x128xf32>
    %c0_1 = arith.constant 0 : index
    %c0_2 = arith.constant 0 : index
    %1 = vector.load %arg1[%c0_1, %c0_2] : memref<1x128xf32, #tpu.memory_space<vmem>>, vector<1x128xf32>
    %2 = vector.broadcast %1 : vector<1x128xf32> to vector<64x128xf32>
    %3 = arith.mulf %0, %2 : vector<64x128xf32>
    %c0_3 = arith.constant 0 : index
    %c0_4 = arith.constant 0 : index
    %4 = vector.load %arg2[%c0_3, %c0_4] : memref<1x128xf32, #tpu.memory_space<vmem>>, vector<1x128xf32>
    %5 = vector.broadcast %4 : vector<1x128xf32> to vector<64x128xf32>
    %6 = arith.addf %3, %5 : vector<64x128xf32>
    %cst = arith.constant 0.000000e+00 : f32
    %7 = vector.broadcast %cst : f32 to vector<64x128xf32>
    %8 = arith.maximumf %6, %7 : vector<64x128xf32>
    %c0_5 = arith.constant 0 : index
    %c0_6 = arith.constant 0 : index
    %9 = vector.load %arg3[%c0_5, %c0_6] : memref<64x128xf32, #tpu.memory_space<vmem>>, vector<64x128xf32>
    tpu.vector_store %arg3[%c0_5, %c0_6], %8 {strides = array<i32>} : memref<64x128xf32, #tpu.memory_space<vmem>>, vector<64x128xf32>,
    return
  }
}

module attributes {stable_mosaic.version = 11 : i64} {
  func.func @_mm_kernel(%arg0: i32, %arg1: memref<128x640xbf16, #tpu.memory_space<vmem>>, %arg2: memref<640x128xbf16, #tpu.memory_space<vmem>>, %arg3: memref<128x128xf32, #tpu.memory_space<vmem>>) attributes {dimension_semantics = [#tpu.dimension_semantics<parallel>], iteration_bounds = array<i64: 1>, scalar_prefetch = 0 : i64, scratch_operands = 0 : i64, tpu.core_type = #tpu.core_type<tc>, window_params = [{transform_indices = @transform_0, window_bounds = array<i64: 128, 640>}, {pipeline_mode = #tpu.pipeline_mode<synchronous>, transform_indices = @transform_1, window_bounds = array<i64: 640, 128>}, {transform_indices = @transform_2, window_bounds = array<i64: 128, 128>}]} {
    %c0 = arith.constant 0 : index
    %c0_0 = arith.constant 0 : index
    %0 = vector.load %arg1[%c0, %c0_0] : memref<128x640xbf16, #tpu.memory_space<vmem>>, vector<128x640xbf16>
    %c0_1 = arith.constant 0 : index
    %c0_2 = arith.constant 0 : index
    %1 = vector.load %arg2[%c0_1, %c0_2] : memref<640x128xbf16, #tpu.memory_space<vmem>>, vector<640x128xbf16>
    %cst = arith.constant dense<0.000000e+00> : vector<128x128xf32>
    %2 = tpu.matmul %0, %1, %cst {dimension_numbers = #tpu.dot_dimension_numbers<[1], [0], [0], [1], [0, 0, 1, 1], [], []>} : vector<128x640xbf16>, vector<640x128xbf16>, vector<128x128xf32> -> vector<128x128xf32>
    %c0_3 = arith.constant 0 : index
    %c0_4 = arith.constant 0 : index
    %3 = vector.load %arg3[%c0_3, %c0_4] : memref<128x128xf32, #tpu.memory_space<vmem>>, vector<128x128xf32>
    tpu.vector_store %arg3[%c0_3, %c0_4], %2 {strides = array<i32>} : memref<128x128xf32, #tpu.memory_space<vmem>>, vector<128x128xf32>,
    return
  }
  func.func @transform_0(%arg0: i32) -> (i32, i32) {
    %c0_i32 = arith.constant 0 : i32
    %c0_i32_0 = arith.constant 0 : i32
    return %arg0, %c0_i32 : i32, i32
  }
  func.func @transform_1(%arg0: i32) -> (i32, i32) {
    %c0_i32 = arith.constant 0 : i32
    %c0_i32_0 = arith.constant 0 : i32
    %c0_i32_1 = arith.constant 0 : i32
    return %c0_i32, %c0_i32_0 : i32, i32
  }
  func.func @transform_2(%arg0: i32) -> (i32, i32) {
    %c0_i32 = arith.constant 0 : i32
    %c0_i32_0 = arith.constant 0 : i32
    return %arg0, %c0_i32 : i32, i32
  }
}

module attributes {stable_mosaic.version = 11 : i64} {
  func.func @_bn_act_kernel(%arg0: memref<64x128xf32, #tpu.memory_space<vmem>>, %arg1: memref<1x128xf32, #tpu.memory_space<vmem>>, %arg2: memref<1x128xf32, #tpu.memory_space<vmem>>, %arg3: memref<64x128xf32, #tpu.memory_space<vmem>>) attributes {dimension_semantics = [], scalar_prefetch = 0 : i64, scratch_operands = 0 : i64, tpu.core_type = #tpu.core_type<tc>} {
    %c0 = arith.constant 0 : index
    %c0_0 = arith.constant 0 : index
    %0 = vector.load %arg0[%c0, %c0_0] : memref<64x128xf32, #tpu.memory_space<vmem>>, vector<64x128xf32>
    %c0_1 = arith.constant 0 : index
    %c0_2 = arith.constant 0 : index
    %1 = vector.load %arg1[%c0_1, %c0_2] : memref<1x128xf32, #tpu.memory_space<vmem>>, vector<1x128xf32>
    %2 = vector.broadcast %1 : vector<1x128xf32> to vector<64x128xf32>
    %3 = arith.mulf %0, %2 : vector<64x128xf32>
    %c0_3 = arith.constant 0 : index
    %c0_4 = arith.constant 0 : index
    %4 = vector.load %arg2[%c0_3, %c0_4] : memref<1x128xf32, #tpu.memory_space<vmem>>, vector<1x128xf32>
    %5 = vector.broadcast %4 : vector<1x128xf32> to vector<64x128xf32>
    %6 = arith.addf %3, %5 : vector<64x128xf32>
    %c0_5 = arith.constant 0 : index
    %c0_6 = arith.constant 0 : index
    %7 = vector.load %arg3[%c0_5, %c0_6] : memref<64x128xf32, #tpu.memory_space<vmem>>, vector<64x128xf32>
    tpu.vector_store %arg3[%c0_5, %c0_6], %6 {strides = array<i32>} : memref<64x128xf32, #tpu.memory_space<vmem>>, vector<64x128xf32>,
    return
  }
}

module attributes {stable_mosaic.version = 11 : i64} {
  func.func @_bn_add_relu_kernel(%arg0: memref<64x128xf32, #tpu.memory_space<vmem>>, %arg1: memref<1x128xf32, #tpu.memory_space<vmem>>, %arg2: memref<1x128xf32, #tpu.memory_space<vmem>>, %arg3: memref<64x128xf32, #tpu.memory_space<vmem>>, %arg4: memref<64x128xf32, #tpu.memory_space<vmem>>) attributes {dimension_semantics = [], scalar_prefetch = 0 : i64, scratch_operands = 0 : i64, tpu.core_type = #tpu.core_type<tc>} {
    %c0 = arith.constant 0 : index
    %c0_0 = arith.constant 0 : index
    %0 = vector.load %arg0[%c0, %c0_0] : memref<64x128xf32, #tpu.memory_space<vmem>>, vector<64x128xf32>
    %c0_1 = arith.constant 0 : index
    %c0_2 = arith.constant 0 : index
    %1 = vector.load %arg1[%c0_1, %c0_2] : memref<1x128xf32, #tpu.memory_space<vmem>>, vector<1x128xf32>
    %2 = vector.broadcast %1 : vector<1x128xf32> to vector<64x128xf32>
    %3 = arith.mulf %0, %2 : vector<64x128xf32>
    %c0_3 = arith.constant 0 : index
    %c0_4 = arith.constant 0 : index
    %4 = vector.load %arg2[%c0_3, %c0_4] : memref<1x128xf32, #tpu.memory_space<vmem>>, vector<1x128xf32>
    %5 = vector.broadcast %4 : vector<1x128xf32> to vector<64x128xf32>
    %6 = arith.addf %3, %5 : vector<64x128xf32>
    %c0_5 = arith.constant 0 : index
    %c0_6 = arith.constant 0 : index
    %7 = vector.load %arg3[%c0_5, %c0_6] : memref<64x128xf32, #tpu.memory_space<vmem>>, vector<64x128xf32>
    %8 = arith.addf %6, %7 : vector<64x128xf32>
    %cst = arith.constant 0.000000e+00 : f32
    %9 = vector.broadcast %cst : f32 to vector<64x128xf32>
    %10 = arith.maximumf %8, %9 : vector<64x128xf32>
    %c0_7 = arith.constant 0 : index
    %c0_8 = arith.constant 0 : index
    %11 = vector.load %arg4[%c0_7, %c0_8] : memref<64x128xf32, #tpu.memory_space<vmem>>, vector<64x128xf32>
    tpu.vector_store %arg4[%c0_7, %c0_8], %10 {strides = array<i32>} : memref<64x128xf32, #tpu.memory_space<vmem>>, vector<64x128xf32>,
    return
  }
}

module attributes {stable_mosaic.version = 11 : i64} {
  func.func @_avgpool_kernel(%arg0: memref<2x64x64xf32, #tpu.memory_space<vmem>>, %arg1: memref<2x1x64xf32, #tpu.memory_space<vmem>>) attributes {dimension_semantics = [], scalar_prefetch = 0 : i64, scratch_operands = 0 : i64, tpu.core_type = #tpu.core_type<tc>} {
    %c0 = arith.constant 0 : index
    %c0_0 = arith.constant 0 : index
    %c0_1 = arith.constant 0 : index
    %0 = vector.load %arg0[%c0, %c0_0, %c0_1] : memref<2x64x64xf32, #tpu.memory_space<vmem>>, vector<2x64x64xf32>
    %cst = arith.constant dense<0.000000e+00> : vector<2x64xf32>
    %1 = vector.multi_reduction <add>, %0, %cst [1] : vector<2x64x64xf32> to vector<2x64xf32>
    %2 = vector.shape_cast %1 : vector<2x64xf32> to vector<2x1x64xf32>
    %cst_2 = arith.constant 6.400000e+01 : f32
    %3 = vector.broadcast %cst_2 : f32 to vector<2x1x64xf32>
    %4 = arith.divf %2, %3 : vector<2x1x64xf32>
    %c0_3 = arith.constant 0 : index
    %c0_4 = arith.constant 0 : index
    %c0_5 = arith.constant 0 : index
    %5 = vector.load %arg1[%c0_3, %c0_4, %c0_5] : memref<2x1x64xf32, #tpu.memory_space<vmem>>, vector<2x1x64xf32>
    tpu.vector_store %arg1[%c0_3, %c0_4, %c0_5], %4 {strides = array<i32>} : memref<2x1x64xf32, #tpu.memory_space<vmem>>, vector<2x1x64xf32>,
    return
  }
}

module attributes {stable_mosaic.version = 11 : i64} {
  func.func @_mm_bias_kernel(%arg0: i32, %arg1: memref<8x128xbf16, #tpu.memory_space<vmem>>, %arg2: memref<128x128xbf16, #tpu.memory_space<vmem>>, %arg3: memref<1x128xf32, #tpu.memory_space<vmem>>, %arg4: memref<8x128xf32, #tpu.memory_space<vmem>>) attributes {dimension_semantics = [#tpu.dimension_semantics<parallel>], iteration_bounds = array<i64: 1>, scalar_prefetch = 0 : i64, scratch_operands = 0 : i64, tpu.core_type = #tpu.core_type<tc>, window_params = [{transform_indices = @transform_0, window_bounds = array<i64: 8, 128>}, {pipeline_mode = #tpu.pipeline_mode<synchronous>, transform_indices = @transform_1, window_bounds = array<i64: 128, 128>}, {pipeline_mode = #tpu.pipeline_mode<synchronous>, transform_indices = @transform_2, window_bounds = array<i64: 1, 128>}, {transform_indices = @transform_3, window_bounds = array<i64: 8, 128>}]} {
    %c0 = arith.constant 0 : index
    %c0_0 = arith.constant 0 : index
    %0 = vector.load %arg1[%c0, %c0_0] : memref<8x128xbf16, #tpu.memory_space<vmem>>, vector<8x128xbf16>
    %c0_1 = arith.constant 0 : index
    %c0_2 = arith.constant 0 : index
    %1 = vector.load %arg2[%c0_1, %c0_2] : memref<128x128xbf16, #tpu.memory_space<vmem>>, vector<128x128xbf16>
    %cst = arith.constant dense<0.000000e+00> : vector<8x128xf32>
    %2 = tpu.matmul %0, %1, %cst {dimension_numbers = #tpu.dot_dimension_numbers<[1], [0], [0], [1], [0, 0, 1, 1], [], []>} : vector<8x128xbf16>, vector<128x128xbf16>, vector<8x128xf32> -> vector<8x128xf32>
    %c0_3 = arith.constant 0 : index
    %c0_4 = arith.constant 0 : index
    %3 = vector.load %arg3[%c0_3, %c0_4] : memref<1x128xf32, #tpu.memory_space<vmem>>, vector<1x128xf32>
    %4 = vector.broadcast %3 : vector<1x128xf32> to vector<8x128xf32>
    %5 = arith.addf %2, %4 : vector<8x128xf32>
    %c0_5 = arith.constant 0 : index
    %c0_6 = arith.constant 0 : index
    %6 = vector.load %arg4[%c0_5, %c0_6] : memref<8x128xf32, #tpu.memory_space<vmem>>, vector<8x128xf32>
    tpu.vector_store %arg4[%c0_5, %c0_6], %5 {strides = array<i32>} : memref<8x128xf32, #tpu.memory_space<vmem>>, vector<8x128xf32>,
    return
  }
  func.func @transform_0(%arg0: i32) -> (i32, i32) {
    %c0_i32 = arith.constant 0 : i32
    %c0_i32_0 = arith.constant 0 : i32
    return %arg0, %c0_i32 : i32, i32
  }
  func.func @transform_1(%arg0: i32) -> (i32, i32) {
    %c0_i32 = arith.constant 0 : i32
    %c0_i32_0 = arith.constant 0 : i32
    %c0_i32_1 = arith.constant 0 : i32
    return %c0_i32, %c0_i32_0 : i32, i32
  }
  func.func @transform_2(%arg0: i32) -> (i32, i32) {
    %c0_i32 = arith.constant 0 : i32
    %c0_i32_0 = arith.constant 0 : i32
    %c0_i32_1 = arith.constant 0 : i32
    return %c0_i32, %c0_i32_0 : i32, i32
  }
  func.func @transform_3(%arg0: i32) -> (i32, i32) {
    %c0_i32 = arith.constant 0 : i32
    %c0_i32_0 = arith.constant 0 : i32
    return %arg0, %c0_i32 : i32, i32
  }
}

</mosaic_0001>

<llo_original>
// kernel: resnet_forward.32
$region0: #{resnet_forward.32}
  #allocation0 [shape = 'u32[]', space=smem, size = 0x4, offset = 0x4, fixed_abs, tag = 'smem constant byte address 0x4 - core index']
  #allocation1 [shape = 'u32[144,128]{1,0:T(1,128)}', space=vmem, size = 0x12000, scoped, tag = 'internal scratch']
  %s0 = inlined_call_operand.vmem [shape: bf16[2048,128], index: 0, kind: input, shape index: {}]
  %s1 = inlined_call_operand.vmem [shape: bf16[128,128], index: 1, kind: input, shape index: {}]
  %s2 = inlined_call_operand.vmem [shape: f32[2048,128], index: 2, kind: output, shape index: {}]
  %s3 = sld [smem:[#allocation0]]
  $region41: #{resnet_forward.32} parent=0
    _
  %s5 = ssub.s32 1, %s3
  %s6 = scalar_select 0, %s5, %s3
  loop: start=0, step=1, limit=10
  $region2: #{resnet_forward.32} parent=0 // loop_pre_header
    _
  $region3: #{resnet_forward.32} parent=0 // loop_header
    %s8 = sphi 0, %s12
    %p9 = scmp.ge.s32.totalorder %s8, 10
    %s18 = sphi 0, %s20
    %s21 = sphi 0, %s18
    %s22 = sphi 0, %s21
    %s38 = sphi 0, %s22
    %s42 = sphi 0, %s42
    %s44 = sphi 0, %s42
    %s45 = sphi 0, %s44
    %s59 = sphi 0, %s45
    %s65 = sphi 0, %s67
    %s68 = sphi 0, %s65
    %s69 = sphi 0, %s68
    %s85 = sphi 0, %s69
  $region4: #{resnet_forward.32} parent=0 // loop_header_branch
    %11 = sbr.rel (%p9) target = $region8
  $region5: #{resnet_forward.32} parent=0 // loop_body
    %s13 = ssub.s32 %s8, 1
    %s14 = ssub.s32 %s8, 2
    %s15 = sadd.s32 %s8, 1
    %s16 = ssub.s32 %s8, %s15
    %p17 = scmp.eq.s32.totalorder %s16, 0
    %s19 = sadd.s32 %s18, 1
    %s20 = scalar_select %p17, %s18, %s19
    %p23 = pneg %p17
    %p24 = scmp.eq.s32.totalorder %s8, 7
    %p25 = por %p23, %p24
    %p26 = scmp.ne.s32.totalorder %s18, %s21
    %p27 = scmp.eq.s32.totalorder %s8, 0
    %p28 = por %p26, %p27
    %p29 = scmp.ne.s32.totalorder %s18, %s21
    %p30 = scmp.eq.s32.totalorder %s13, 7
    %p31 = por %p29, %p30
    %p32 = scmp.ne.s32.totalorder %s21, %s22
    %p33 = scmp.eq.s32.totalorder %s13, 0
    %p34 = por %p32, %p33
    %p35 = scmp.ne.s32.totalorder %s21, %s22
    %p36 = scmp.eq.s32.totalorder %s14, 7
    %p37 = por %p35, %p36
    %p39 = scmp.ne.s32.totalorder %s22, %s38
    %p40 = scmp.eq.s32.totalorder %s14, 0
    %p41 = por %p39, %p40
    %s43 = sadd.s32 %s42, 1
    %p46 = scmp.eq.s32.totalorder %s8, 7
    %p47 = scmp.ne.s32.totalorder %s42, %s44
    %p48 = scmp.eq.s32.totalorder %s8, 0
    %p49 = por %p47, %p48
    %p50 = scmp.ne.s32.totalorder %s42, %s44
    %p51 = scmp.eq.s32.totalorder %s13, 7
    %p52 = por %p50, %p51
    %p53 = scmp.ne.s32.totalorder %s44, %s45
    %p54 = scmp.eq.s32.totalorder %s13, 0
    %p55 = por %p53, %p54
    %p56 = scmp.ne.s32.totalorder %s44, %s45
    %p57 = scmp.eq.s32.totalorder %s14, 7
    %p58 = por %p56, %p57
    %p60 = scmp.ne.s32.totalorder %s45, %s59
    %p61 = scmp.eq.s32.totalorder %s14, 0
    %p62 = por %p60, %p61
    %s63 = ssub.s32 %s8, %s15
    %p64 = scmp.eq.s32.totalorder %s63, 0
    %s66 = sadd.s32 %s65, 1
    %s67 = scalar_select %p64, %s65, %s66
    %p70 = pneg %p64
    %p71 = scmp.eq.s32.totalorder %s8, 7
    %p72 = por %p70, %p71
    %p73 = scmp.ne.s32.totalorder %s65, %s68
    %p74 = scmp.eq.s32.totalorder %s8, 0
    %p75 = por %p73, %p74
    %p76 = scmp.ne.s32.totalorder %s65, %s68
    %p77 = scmp.eq.s32.totalorder %s13, 7
    %p78 = por %p76, %p77
    %p79 = scmp.ne.s32.totalorder %s68, %s69
    %p80 = scmp.eq.s32.totalorder %s13, 0
    %p81 = por %p79, %p80
    %p82 = scmp.ne.s32.totalorder %s68, %s69
    %p83 = scmp.eq.s32.totalorder %s14, 7
    %p84 = por %p82, %p83
    %p86 = scmp.ne.s32.totalorder %s69, %s85
    %p87 = scmp.eq.s32.totalorder %s14, 0
    %p88 = por %p86, %p87
    %p89 = scmp.le.s32.totalorder 1, %s8
    %p90 = scmp.lt.s32.totalorder %s8, 9
    %p91 = pnand %p89, %p90
    %p92 = pneg %p91
    // Predicated region
    $region9: #{resnet_forward.32} parent=5 // pred_check
      _
    $region10: #{resnet_forward.32} parent=5 // pred_check_branch
      %94 = sbr.rel (%p91) target = $region12
    $region11: #{resnet_forward.32} parent=5 // pred_region
      %s95 = ssub.s32 %s8, 1
      // Predicated region
      $region13: #{resnet_forward.32} parent=11 // pred_check
        %p96 = pneg %p55
      $region14: #{resnet_forward.32} parent=11 // pred_check_branch
        %98 = sbr.rel (%p96) target = $region16
      $region15: #{resnet_forward.32} parent=11 // pred_region
        _
      $region16: #{resnet_forward.32} parent=11 // pred_fallthru
        _
    $region12: #{resnet_forward.32} parent=5 // pred_fallthru
      _
    %p99 = scmp.lt.s32.totalorder %s8, 8
    // Predicated region
    $region17: #{resnet_forward.32} parent=5 // pred_check
      %p100 = pneg %p99
    $region18: #{resnet_forward.32} parent=5 // pred_check_branch
      %102 = sbr.rel (%p100) target = $region20
    $region19: #{resnet_forward.32} parent=5 // pred_region
      // Predicated region
      $region21: #{resnet_forward.32} parent=19 // pred_check
        %p103 = pneg %p28
      $region22: #{resnet_forward.32} parent=19 // pred_check_branch
        %105 = sbr.rel (%p103) target = $region24
      $region23: #{resnet_forward.32} parent=19 // pred_region
        %s106 = smul.u32 32, %s8
        %p107 = scmp.lt.s32.totalorder %s106, 255
        %s108 = scalar_select %p107, %s106, 255
        %s109 = smul.addr %s108, 4
        %s110 = scalar_lea.vmem %s0, %s109
        %s111 = smul.u32 32, %s8
      $region24: #{resnet_forward.32} parent=19 // pred_fallthru
        _
    $region20: #{resnet_forward.32} parent=5 // pred_fallthru
      _
    %p112 = scmp.le.s32.totalorder 1, %s8
    %p113 = scmp.lt.s32.totalorder %s8, 9
    %p114 = pnand %p112, %p113
    %p115 = pneg %p114
    // Predicated region
    $region25: #{resnet_forward.32} parent=5 // pred_check
      _
    $region26: #{resnet_forward.32} parent=5 // pred_check_branch
      %117 = sbr.rel (%p114) target = $region28
    $region27: #{resnet_forward.32} parent=5 // pred_region
      %s118 = ssub.s32 %s8, 1
      %s119 = smul.u32 32, %s13
      %p120 = scmp.lt.s32.totalorder %s119, 255
      %s121 = scalar_select %p120, %s119, 255
      %s122 = smul.addr %s121, 4
      %s123 = scalar_lea.vmem %s0, %s122
      %p124 = pneg %p34
      %p125 = pneg %p31
      %p126 = pneg %p55
      %p127 = pneg %p52
      %p128 = pneg %p81
      %p129 = pneg %p78
      %s130 = smul.u32 32, %s13
      %p131 = scmp.lt.s32.totalorder %s130, 255
      %s132 = scalar_select %p131, %s130, 255
      %s133 = smul.addr %s132, 8
      %s134 = scalar_lea.vmem %s2, %s133
      %s135 = smul.u32 32, %s13
      %p136 = scmp.lt.s32.totalorder %s135, 255
      %s137 = scalar_select %p136, %s135, 255
      %s138 = smul.addr %s137, 4
      %s139 = scalar_lea.vmem %s0, %s138
      %s140 = smul.u32 32, %s13
      %s141 = smul.u32 32, %s13
      %p142 = scmp.lt.s32.totalorder %s141, 255
      %s143 = scalar_select %p142, %s141, 255
      %s144 = smul.addr %s143, 8
      %s145 = scalar_lea.vmem %s2, %s144
      %s146 = smul.u32 32, %s13
      %v148 = vld [vmem:[%s139] sm:$0xf]
      %v149 = vld [vmem:[%s139 + $0x4] sm:$0xf]
      %v150 = vld [vmem:[%s139 + $0x8] sm:$0xf]
      %v151 = vld [vmem:[%s139 + $0xc] sm:$0xf]
      %v152 = vld [vmem:[%s139 + $0x10] sm:$0xf]
      %v153 = vld [vmem:[%s139 + $0x14] sm:$0xf]
      %v154 = vld [vmem:[%s139 + $0x18] sm:$0xf]
      %v155 = vld [vmem:[%s139 + $0x1c] sm:$0xf]
      %v156 = vld [vmem:[%s139 + $0x20] sm:$0xf]
      %v157 = vld [vmem:[%s139 + $0x24] sm:$0xf]
      %v158 = vld [vmem:[%s139 + $0x28] sm:$0xf]
      %v159 = vld [vmem:[%s139 + $0x2c] sm:$0xf]
      %v160 = vld [vmem:[%s139 + $0x30] sm:$0xf]
      %v161 = vld [vmem:[%s139 + $0x34] sm:$0xf]
      %v162 = vld [vmem:[%s139 + $0x38] sm:$0xf]
      %v163 = vld [vmem:[%s139 + $0x3c] sm:$0xf]
      %v164 = vld [vmem:[%s139 + $0x40] sm:$0xf]
      %v165 = vld [vmem:[%s139 + $0x44] sm:$0xf]
      %v166 = vld [vmem:[%s139 + $0x48] sm:$0xf]
      %v167 = vld [vmem:[%s139 + $0x4c] sm:$0xf]
      %v168 = vld [vmem:[%s139 + $0x50] sm:$0xf]
      %v169 = vld [vmem:[%s139 + $0x54] sm:$0xf]
      %v170 = vld [vmem:[%s139 + $0x58] sm:$0xf]
      %v171 = vld [vmem:[%s139 + $0x5c] sm:$0xf]
      %v172 = vld [vmem:[%s139 + $0x60] sm:$0xf]
      %v173 = vld [vmem:[%s139 + $0x64] sm:$0xf]
      %v174 = vld [vmem:[%s139 + $0x68] sm:$0xf]
      %v175 = vld [vmem:[%s139 + $0x6c] sm:$0xf]
      %v176 = vld [vmem:[%s139 + $0x70] sm:$0xf]
      %v177 = vld [vmem:[%s139 + $0x74] sm:$0xf]
      %v178 = vld [vmem:[%s139 + $0x78] sm:$0xf]
      %v179 = vld [vmem:[%s139 + $0x7c] sm:$0xf]
      %v180 = vld [vmem:[%s1] sm:$0xf]
      %v181 = vld [vmem:[%s1 + $0x4] sm:$0xf]
      %v182 = vld [vmem:[%s1 + $0x8] sm:$0xf]
      %v183 = vld [vmem:[%s1 + $0xc] sm:$0xf]
      %v184 = vld [vmem:[%s1 + $0x10] sm:$0xf]
      %v185 = vld [vmem:[%s1 + $0x14] sm:$0xf]
      %v186 = vld [vmem:[%s1 + $0x18] sm:$0xf]
      %v187 = vld [vmem:[%s1 + $0x1c] sm:$0xf]
      %v188 = vld [vmem:[%s1 + $0x20] sm:$0xf]
      %v189 = vld [vmem:[%s1 + $0x24] sm:$0xf]
      %v190 = vld [vmem:[%s1 + $0x28] sm:$0xf]
      %v191 = vld [vmem:[%s1 + $0x2c] sm:$0xf]
      %v192 = vld [vmem:[%s1 + $0x30] sm:$0xf]
      %v193 = vld [vmem:[%s1 + $0x34] sm:$0xf]
      %v194 = vld [vmem:[%s1 + $0x38] sm:$0xf]
      %v195 = vld [vmem:[%s1 + $0x3c] sm:$0xf]
      %v228 = vunpack.c.l.b16 %v148
      %v229 = vunpack.c.l.b16 %v149
      %v230 = vunpack.c.l.b16 %v150
      %v231 = vunpack.c.l.b16 %v151
      %v232 = vunpack.c.l.b16 %v152
      %v233 = vunpack.c.l.b16 %v153
      %v234 = vunpack.c.l.b16 %v154
      %v235 = vunpack.c.l.b16 %v155
      %v236 = vunpack.c.l.b16 %v156
      %v237 = vunpack.c.l.b16 %v157
      %v238 = vunpack.c.l.b16 %v158
      %v239 = vunpack.c.l.b16 %v159
      %v240 = vunpack.c.l.b16 %v160
      %v241 = vunpack.c.l.b16 %v161
      %v242 = vunpack.c.l.b16 %v162
      %v243 = vunpack.c.l.b16 %v163
      %v244 = vunpack.c.l.b16 %v164
      %v245 = vunpack.c.l.b16 %v165
      %v246 = vunpack.c.l.b16 %v166
      %v247 = vunpack.c.l.b16 %v167
      %v248 = vunpack.c.l.b16 %v168
      %v249 = vunpack.c.l.b16 %v169
      %v250 = vunpack.c.l.b16 %v170
      %v251 = vunpack.c.l.b16 %v171
      %v252 = vunpack.c.l.b16 %v172
      %v253 = vunpack.c.l.b16 %v173
      %v254 = vunpack.c.l.b16 %v174
      %v255 = vunpack.c.l.b16 %v175
      %v256 = vunpack.c.l.b16 %v176
      %v257 = vunpack.c.l.b16 %v177
      %v258 = vunpack.c.l.b16 %v178
      %v259 = vunpack.c.l.b16 %v179
      %v260 = vpack.c.b16 %v229, %v228
      %v261 = vpack.c.b16 %v231, %v230
      %v262 = vpack.c.b16 %v233, %v232
      %v263 = vpack.c.b16 %v235, %v234
      %v264 = vpack.c.b16 %v237, %v236
      %v265 = vpack.c.b16 %v239, %v238
      %v266 = vpack.c.b16 %v241, %v240
      %v267 = vpack.c.b16 %v243, %v242
      %v268 = vpack.c.b16 %v245, %v244
      %v269 = vpack.c.b16 %v247, %v246
      %v270 = vpack.c.b16 %v249, %v248
      %v271 = vpack.c.b16 %v251, %v250
      %v272 = vpack.c.b16 %v253, %v252
      %v273 = vpack.c.b16 %v255, %v254
      %v274 = vpack.c.b16 %v257, %v256
      %v275 = vpack.c.b16 %v259, %v258
      %v308 = vunpack.c.l.b16 %v180
      %v309 = vunpack.c.l.b16 %v181
      %v310 = vunpack.c.l.b16 %v182
      %v311 = vunpack.c.l.b16 %v183
      %v312 = vunpack.c.l.b16 %v184
      %v313 = vunpack.c.l.b16 %v185
      %v314 = vunpack.c.l.b16 %v186
      %v315 = vunpack.c.l.b16 %v187
      %v316 = vunpack.c.l.b16 %v188
      %v317 = vunpack.c.l.b16 %v189
      %v318 = vunpack.c.l.b16 %v190
      %v319 = vunpack.c.l.b16 %v191
      %v320 = vunpack.c.l.b16 %v192
      %v321 = vunpack.c.l.b16 %v193
      %v322 = vunpack.c.l.b16 %v194
      %v323 = vunpack.c.l.b16 %v195
      %v324 = vpack.c.b16 %v309, %v308
      %v325 = vpack.c.b16 %v311, %v310
      %v326 = vpack.c.b16 %v313, %v312
      %v327 = vpack.c.b16 %v315, %v314
      %v328 = vpack.c.b16 %v317, %v316
      %v329 = vpack.c.b16 %v319, %v318
      %v330 = vpack.c.b16 %v321, %v320
      %v331 = vpack.c.b16 %v323, %v322
      %340 = vmatprep.subr.bf16.mxu0 0
      %341 = vmatpush1.bf16.msra.mxu0 %v331
      %342 = vmatprep.subr.bf16.mxu0 0
      %343 = vmatpush1.bf16.msra.mxu0 %v330
      %344 = vmatprep.subr.bf16.mxu0 0
      %345 = vmatpush1.bf16.msra.mxu0 %v329
      %346 = vmatprep.subr.bf16.mxu0 0
      %347 = vmatpush1.bf16.msra.mxu0 %v328
      %348 = vmatprep.subr.bf16.mxu0 0
      %349 = vmatpush1.bf16.msra.mxu0 %v327
      %350 = vmatprep.subr.bf16.mxu0 0
      %351 = vmatpush1.bf16.msra.mxu0 %v326
      %352 = vmatprep.subr.bf16.mxu0 0
      %353 = vmatpush1.bf16.msra.mxu0 %v325
      %354 = vmatprep.subr.bf16.mxu0 0
      %355 = vmatpush1.bf16.msra.mxu0 %v324
      %356 = vmatprep.subr.bf16.mxu0 0
      %357 = vmatpush2.bf16.msra.mxu0 0
      %358 = vmatprep.subr.bf16.mxu0 0
      %359 = vmatpush2.bf16.msra.mxu0 0
      %360 = vmatprep.subr.bf16.mxu0 0
      %361 = vmatpush2.bf16.msra.mxu0 0
      %362 = vmatprep.subr.bf16.mxu0 0
      %363 = vmatpush2.bf16.msra.mxu0 0
      %364 = vmatprep.subr.bf16.mxu0 0
      %365 = vmatpush2.bf16.msra.mxu0 0
      %366 = vmatprep.subr.bf16.mxu0 0
      %367 = vmatpush2.bf16.msra.mxu0 0
      %368 = vmatprep.subr.bf16.mxu0 0
      %369 = vmatpush2.bf16.msra.mxu0 0
      %370 = vmatprep.subr.bf16.mxu0 0
      %371 = vmatpush2.bf16.msra.mxu0 0
      %372 = vmatprep.mubr.bf16.mxu0 0
      %373 = vmatmul.mubr.bf16.gmra.mxu0 %v260
      %v374 = vpop.f32.mrf.mxu0
      %v375 = vadd.f32 0.0, %v374
      %v376 = vpop.f32.mrf.mxu0
      %v377 = vpop.f32.mrf.mxu0
      %v378 = vadd.f32 0.0, %v377
      %v379 = vpop.f32.mrf.mxu0
      %380 = vmatprep.mubr.bf16.mxu0 0
      %381 = vmatmul.mubr.bf16.gmra.mxu0 %v261
      %v382 = vpop.f32.mrf.mxu0
      %v383 = vadd.f32 0.0, %v382
      %v384 = vpop.f32.mrf.mxu0
      %v385 = vpop.f32.mrf.mxu0
      %v386 = vadd.f32 0.0, %v385
      %v387 = vpop.f32.mrf.mxu0
      %388 = vmatprep.mubr.bf16.mxu0 0
      %389 = vmatmul.mubr.bf16.gmra.mxu0 %v262
      %v390 = vpop.f32.mrf.mxu0
      %v391 = vadd.f32 0.0, %v390
      %v392 = vpop.f32.mrf.mxu0
      %v393 = vpop.f32.mrf.mxu0
      %v394 = vadd.f32 0.0, %v393
      %v395 = vpop.f32.mrf.mxu0
      %396 = vmatprep.mubr.bf16.mxu0 0
      %397 = vmatmul.mubr.bf16.gmra.mxu0 %v263
      %v398 = vpop.f32.mrf.mxu0
      %v399 = vadd.f32 0.0, %v398
      %v400 = vpop.f32.mrf.mxu0
      %v401 = vpop.f32.mrf.mxu0
      %v402 = vadd.f32 0.0, %v401
      %v403 = vpop.f32.mrf.mxu0
      %404 = vmatprep.mubr.bf16.mxu0 0
      %405 = vmatmul.mubr.bf16.gmra.mxu0 %v264
      %v406 = vpop.f32.mrf.mxu0
      %v407 = vadd.f32 0.0, %v406
      %v408 = vpop.f32.mrf.mxu0
      %v409 = vpop.f32.mrf.mxu0
      %v410 = vadd.f32 0.0, %v409
      %v411 = vpop.f32.mrf.mxu0
      %412 = vmatprep.mubr.bf16.mxu0 0
      %413 = vmatmul.mubr.bf16.gmra.mxu0 %v265
      %v414 = vpop.f32.mrf.mxu0
      %v415 = vadd.f32 0.0, %v414
      %v416 = vpop.f32.mrf.mxu0
      %v417 = vpop.f32.mrf.mxu0
      %v418 = vadd.f32 0.0, %v417
      %v419 = vpop.f32.mrf.mxu0
      %420 = vmatprep.mubr.bf16.mxu0 0
      %421 = vmatmul.mubr.bf16.gmra.mxu0 %v266
      %v422 = vpop.f32.mrf.mxu0
      %v423 = vadd.f32 0.0, %v422
      %v424 = vpop.f32.mrf.mxu0
      %v425 = vpop.f32.mrf.mxu0
      %v426 = vadd.f32 0.0, %v425
      %v427 = vpop.f32.mrf.mxu0
      %428 = vmatprep.mubr.bf16.mxu0 0
      %429 = vmatmul.mubr.bf16.gmra.mxu0 %v267
      %v430 = vpop.f32.mrf.mxu0
      %v431 = vadd.f32 0.0, %v430
      %v432 = vpop.f32.mrf.mxu0
      %v433 = vpop.f32.mrf.mxu0
      %v434 = vadd.f32 0.0, %v433
      %v435 = vpop.f32.mrf.mxu0
      %436 = vmatprep.mubr.bf16.mxu0 0
      %437 = vmatmul.mubr.bf16.gmra.mxu0 %v268
      %v438 = vpop.f32.mrf.mxu0
      %v439 = vadd.f32 0.0, %v438
      %v440 = vpop.f32.mrf.mxu0
      %v441 = vpop.f32.mrf.mxu0
      %v442 = vadd.f32 0.0, %v441
      %v443 = vpop.f32.mrf.mxu0
      %444 = vmatprep.mubr.bf16.mxu0 0
      %445 = vmatmul.mubr.bf16.gmra.mxu0 %v269
      %v446 = vpop.f32.mrf.mxu0
      %v447 = vadd.f32 0.0, %v446
      %v448 = vpop.f32.mrf.mxu0
      %v449 = vpop.f32.mrf.mxu0
      %v450 = vadd.f32 0.0, %v449
      %v451 = vpop.f32.mrf.mxu0
      %452 = vmatprep.mubr.bf16.mxu0 0
      %453 = vmatmul.mubr.bf16.gmra.mxu0 %v270
      %v454 = vpop.f32.mrf.mxu0
      %v455 = vadd.f32 0.0, %v454
      %v456 = vpop.f32.mrf.mxu0
      %v457 = vpop.f32.mrf.mxu0
      %v458 = vadd.f32 0.0, %v457
      %v459 = vpop.f32.mrf.mxu0
      %460 = vmatprep.mubr.bf16.mxu0 0
      %461 = vmatmul.mubr.bf16.gmra.mxu0 %v271
      %v462 = vpop.f32.mrf.mxu0
      %v463 = vadd.f32 0.0, %v462
      %v464 = vpop.f32.mrf.mxu0
      %v465 = vpop.f32.mrf.mxu0
      %v466 = vadd.f32 0.0, %v465
      %v467 = vpop.f32.mrf.mxu0
      %468 = vmatprep.mubr.bf16.mxu0 0
      %469 = vmatmul.mubr.bf16.gmra.mxu0 %v272
      %v470 = vpop.f32.mrf.mxu0
      %v471 = vadd.f32 0.0, %v470
      %v472 = vpop.f32.mrf.mxu0
      %v473 = vpop.f32.mrf.mxu0
      %v474 = vadd.f32 0.0, %v473
      %v475 = vpop.f32.mrf.mxu0
      %476 = vmatprep.mubr.bf16.mxu0 0
      %477 = vmatmul.mubr.bf16.gmra.mxu0 %v273
      %v478 = vpop.f32.mrf.mxu0
      %v479 = vadd.f32 0.0, %v478
      %v480 = vpop.f32.mrf.mxu0
      %v481 = vpop.f32.mrf.mxu0
      %v482 = vadd.f32 0.0, %v481
      %v483 = vpop.f32.mrf.mxu0
      %484 = vmatprep.mubr.bf16.mxu0 0
      %485 = vmatmul.mubr.bf16.gmra.mxu0 %v274
      %v486 = vpop.f32.mrf.mxu0
      %v487 = vadd.f32 0.0, %v486
      %v488 = vpop.f32.mrf.mxu0
      %v489 = vpop.f32.mrf.mxu0
      %v490 = vadd.f32 0.0, %v489
      %v491 = vpop.f32.mrf.mxu0
      %492 = vmatprep.mubr.bf16.mxu0 0
      %493 = vmatmul.mubr.bf16.gmra.mxu0 %v275
      %v494 = vpop.f32.mrf.mxu0
      %v495 = vadd.f32 0.0, %v494
      %v496 = vpop.f32.mrf.mxu0
      %v497 = vpop.f32.mrf.mxu0
      %v498 = vadd.f32 0.0, %v497
      %v499 = vpop.f32.mrf.mxu0
      %500 = vdwg.mxu0
      %501 = vst [vmem:[%s145] sm:$0xff] %v375
      %502 = vst [vmem:[%s145 + $0x8] sm:$0xff] %v378
      %503 = vst [vmem:[%s145 + $0x10] sm:$0xff] %v383
      %504 = vst [vmem:[%s145 + $0x18] sm:$0xff] %v386
      %505 = vst [vmem:[%s145 + $0x20] sm:$0xff] %v391
      %506 = vst [vmem:[%s145 + $0x28] sm:$0xff] %v394
      %507 = vst [vmem:[%s145 + $0x30] sm:$0xff] %v399
      %508 = vst [vmem:[%s145 + $0x38] sm:$0xff] %v402
      %509 = vst [vmem:[%s145 + $0x40] sm:$0xff] %v407
      %510 = vst [vmem:[%s145 + $0x48] sm:$0xff] %v410
      %511 = vst [vmem:[%s145 + $0x50] sm:$0xff] %v415
      %512 = vst [vmem:[%s145 + $0x58] sm:$0xff] %v418
      %513 = vst [vmem:[%s145 + $0x60] sm:$0xff] %v423
      %514 = vst [vmem:[%s145 + $0x68] sm:$0xff] %v426
      %515 = vst [vmem:[%s145 + $0x70] sm:$0xff] %v431
      %516 = vst [vmem:[%s145 + $0x78] sm:$0xff] %v434
      %517 = vst [vmem:[%s145 + $0x80] sm:$0xff] %v439
      %518 = vst [vmem:[%s145 + $0x88] sm:$0xff] %v442
      %519 = vst [vmem:[%s145 + $0x90] sm:$0xff] %v447
      %520 = vst [vmem:[%s145 + $0x98] sm:$0xff] %v450
      %521 = vst [vmem:[%s145 + $0xa0] sm:$0xff] %v455
      %522 = vst [vmem:[%s145 + $0xa8] sm:$0xff] %v458
      %523 = vst [vmem:[%s145 + $0xb0] sm:$0xff] %v463
      %524 = vst [vmem:[%s145 + $0xb8] sm:$0xff] %v466
      %525 = vst [vmem:[%s145 + $0xc0] sm:$0xff] %v471
      %526 = vst [vmem:[%s145 + $0xc8] sm:$0xff] %v474
      %527 = vst [vmem:[%s145 + $0xd0] sm:$0xff] %v479
      %528 = vst [vmem:[%s145 + $0xd8] sm:$0xff] %v482
      %529 = vst [vmem:[%s145 + $0xe0] sm:$0xff] %v487
      %530 = vst [vmem:[%s145 + $0xe8] sm:$0xff] %v490
      %531 = vst [vmem:[%s145 + $0xf0] sm:$0xff] %v495
      %532 = vst [vmem:[%s145 + $0xf8] sm:$0xff] %v498
      %s533 = smul.u32 32, %s13
      %p534 = scmp.lt.s32.totalorder %s533, 255
      %s535 = scalar_select %p534, %s533, 255
      %s536 = smul.addr %s535, 8
      %s537 = scalar_lea.vmem %s2, %s536
      // Predicated region
      $region29: #{resnet_forward.32} parent=27 // pred_check
        %p538 = pneg %p78
      $region30: #{resnet_forward.32} parent=27 // pred_check_branch
        %540 = sbr.rel (%p538) target = $region32
      $region31: #{resnet_forward.32} parent=27 // pred_region
        %s541 = smul.u32 32, %s13
      $region32: #{resnet_forward.32} parent=27 // pred_fallthru
        _
    $region28: #{resnet_forward.32} parent=5 // pred_fallthru
      _
    %p542 = scmp.le.s32.totalorder 2, %s8
    // Predicated region
    $region33: #{resnet_forward.32} parent=5 // pred_check
      %p543 = pneg %p542
    $region34: #{resnet_forward.32} parent=5 // pred_check_branch
      %545 = sbr.rel (%p543) target = $region36
    $region35: #{resnet_forward.32} parent=5 // pred_region
      %s546 = ssub.s32 %s8, 2
      // Predicated region
      $region37: #{resnet_forward.32} parent=35 // pred_check
        %p547 = pneg %p84
      $region38: #{resnet_forward.32} parent=35 // pred_check_branch
        %549 = sbr.rel (%p547) target = $region40
      $region39: #{resnet_forward.32} parent=35 // pred_region
        %s550 = smul.u32 32, %s14
        %p551 = scmp.lt.s32.totalorder %s550, 255
        %s552 = scalar_select %p551, %s550, 255
        %s553 = smul.addr %s552, 8
        %s554 = scalar_lea.vmem %s2, %s553
      $region40: #{resnet_forward.32} parent=35 // pred_fallthru
        _
    $region36: #{resnet_forward.32} parent=5 // pred_fallthru
      _
  $region6: #{resnet_forward.32} parent=0 // loop_footer
    %s12 = sadd.s32 1, %s8
  $region7: #{resnet_forward.32} parent=0 // loop_footer_branch
    %7 = sbr.rel target = $region3
  $region8: #{resnet_forward.32} parent=0 // loop_exit
    _

// kernel: tile.153
$region0: #{tile.153}
  #allocation0 [shape = 's32[1]{0}', space=sflag, size = 0x4, scoped, tag = 'scoped memory for tile.153']
  %s0 = inlined_call_operand.vmem [shape: f32[16], index: 0, kind: input, shape index: {}]
  %s1 = inlined_call_operand.vmem [shape: f32[8,16], index: 1, kind: output, shape index: {}]
  // Predicated region
  $region2: #{tile.153} parent=0 // pred_check
    _
  $region3: #{tile.153} parent=0 // pred_check_branch
    %3 = sbr.rel (0) target = $region5
  $region4: #{tile.153} parent=0 // pred_region
    _
  $region5: #{tile.153} parent=0 // pred_fallthru
    _
  %v4 = vld [vmem:[%s0] ss:$0 sm:$0xff]
  %5 = vst [vmem:[%s1] sm:$0xff] %v4

// kernel: tile.154
$region0: #{tile.154}
  %s0 = inlined_call_operand.vmem [shape: f32[8,16], index: 0, kind: input, shape index: {}]
  %s1 = inlined_call_operand.vmem [shape: f32[1,128], index: 1, kind: output, shape index: {}]
  $region1: #{tile.154} parent=0
    #allocation0 [shape = 'u8[4096]{0}', space=vmem, size = 0x1000, scoped, tag = 'scoped mem for output reshape']
    %v2 = vld [vmem:[%s0] sm:$0x1]
    %vm3 = vcmask 130048
    %4 = vst.msk [vmem:[#allocation0] sm:$0x1] %vm3, %v2
    %s5 = scalar_lea.vmem %s0, 7
    %v6 = vld [vmem:[%s5] sm:$0x1]
    %7 = vrot.lane.b32.xlu0 %v6, 112
    %v8 = vpop.permute.xlu0 %7
    %vm9 = vcmask 1048448
    %10 = vst.msk [vmem:[#allocation0] sm:$0x1] %vm9, %v8
    %s11 = scalar_lea.vmem %s0, 6
    %v12 = vld [vmem:[%s11] sm:$0x1]
    %13 = vrot.lane.b32.xlu0 %v12, 96
    %v14 = vpop.permute.xlu0 %13
    %vm15 = vcmask 917248
    %16 = vst.msk [vmem:[#allocation0] sm:$0x1] %vm15, %v14
    %s17 = scalar_lea.vmem %s0, 5
    %v18 = vld [vmem:[%s17] sm:$0x1]
    %19 = vrot.lane.b32.xlu0 %v18, 80
    %v20 = vpop.permute.xlu0 %19
    %vm21 = vcmask 786048
    %22 = vst.msk [vmem:[#allocation0] sm:$0x1] %vm21, %v20
    %s23 = scalar_lea.vmem %s0, 4
    %v24 = vld [vmem:[%s23] sm:$0x1]
    %25 = vrot.lane.b32.xlu0 %v24, 64
    %v26 = vpop.permute.xlu0 %25
    %vm27 = vcmask 654848
    %28 = vst.msk [vmem:[#allocation0] sm:$0x1] %vm27, %v26
    %s29 = scalar_lea.vmem %s0, 3
    %v30 = vld [vmem:[%s29] sm:$0x1]
    %31 = vrot.lane.b32.xlu0 %v30, 48
    %v32 = vpop.permute.xlu0 %31
    %vm33 = vcmask 523648
    %34 = vst.msk [vmem:[#allocation0] sm:$0x1] %vm33, %v32
    %s35 = scalar_lea.vmem %s0, 2
    %v36 = vld [vmem:[%s35] sm:$0x1]
    %37 = vrot.lane.b32.xlu0 %v36, 32
    %v38 = vpop.permute.xlu0 %37
    %vm39 = vcmask 392448
    %40 = vst.msk [vmem:[#allocation0] sm:$0x1] %vm39, %v38
    %s41 = scalar_lea.vmem %s0, 1
    %v42 = vld [vmem:[%s41] sm:$0x1]
    %43 = vrot.lane.b32.xlu0 %v42, 16
    %v44 = vpop.permute.xlu0 %43
    %vm45 = vcmask 261248
    %46 = vst.msk [vmem:[#allocation0] sm:$0x1] %vm45, %v44
    %s48 = sshll.u32 1, 1
    %s49 = ssub.s32 %s48, 1
    %v51 = vld [vmem:[#allocation0] sm:%s49]
    %s52 = sshll.u32 1, 1
    %s53 = ssub.s32 %s52, 1
    %54 = vst [vmem:[%s1] sm:%s53] %v51

// kernel: resnet_forward.33
$region0: #{resnet_forward.33}
  #allocation0 [shape = 'u32[]', space=smem, size = 0x4, offset = 0x4, fixed_abs, tag = 'smem constant byte address 0x4 - core index']
  #allocation1 [shape = 'u32[144,128]{1,0:T(1,128)}', space=vmem, size = 0x12000, scoped, tag = 'internal scratch']
  %s0 = inlined_call_operand.vmem [shape: f32[256,128], index: 0, kind: input, shape index: {}]
  %s1 = inlined_call_operand.vmem [shape: f32[1,128], index: 1, kind: input, shape index: {}]
  %s2 = inlined_call_operand.vmem [shape: f32[1,128], index: 2, kind: input, shape index: {}]
  %s3 = inlined_call_operand.vmem [shape: f32[256,128], index: 3, kind: output, shape index: {}]
  %s4 = sld [smem:[#allocation0]]
  $region22: #{resnet_forward.33} parent=0
    _
  %s6 = ssub.s32 1, %s4
  %s7 = scalar_select 0, %s6, %s4
  // Predicated region
  $region2: #{resnet_forward.33} parent=0 // pred_check
    _
  $region3: #{resnet_forward.33} parent=0 // pred_check_branch
    %9 = sbr.rel (0) target = $region5
  $region4: #{resnet_forward.33} parent=0 // pred_region
    _
  $region5: #{resnet_forward.33} parent=0 // pred_fallthru
    _
  // Predicated region
  $region6: #{resnet_forward.33} parent=0 // pred_check
    _
  $region7: #{resnet_forward.33} parent=0 // pred_check_branch
    %11 = sbr.rel (0) target = $region9
  $region8: #{resnet_forward.33} parent=0 // pred_region
    _
  $region9: #{resnet_forward.33} parent=0 // pred_fallthru
    _
  // Predicated region
  $region10: #{resnet_forward.33} parent=0 // pred_check
    _
  $region11: #{resnet_forward.33} parent=0 // pred_check_branch
    %13 = sbr.rel (0) target = $region13
  $region12: #{resnet_forward.33} parent=0 // pred_region
    _
  $region13: #{resnet_forward.33} parent=0 // pred_fallthru
    _
  %v14 = vld [vmem:[%s0] sm:$0xff]
  %v15 = vld [vmem:[%s0 + $0x8] sm:$0xff]
  %v16 = vld [vmem:[%s0 + $0x10] sm:$0xff]
  %v17 = vld [vmem:[%s0 + $0x18] sm:$0xff]
  %v18 = vld [vmem:[%s0 + $0x20] sm:$0xff]
  %v19 = vld [vmem:[%s0 + $0x28] sm:$0xff]
  %v20 = vld [vmem:[%s0 + $0x30] sm:$0xff]
  %v21 = vld [vmem:[%s0 + $0x38] sm:$0xff]
  %v22 = vld [vmem:[%s0 + $0x40] sm:$0xff]
  %v23 = vld [vmem:[%s0 + $0x48] sm:$0xff]
  %v24 = vld [vmem:[%s0 + $0x50] sm:$0xff]
  %v25 = vld [vmem:[%s0 + $0x58] sm:$0xff]
  %v26 = vld [vmem:[%s0 + $0x60] sm:$0xff]
  %v27 = vld [vmem:[%s0 + $0x68] sm:$0xff]
  %v28 = vld [vmem:[%s0 + $0x70] sm:$0xff]
  %v29 = vld [vmem:[%s0 + $0x78] sm:$0xff]
  %v30 = vld [vmem:[%s0 + $0x80] sm:$0xff]
  %v31 = vld [vmem:[%s0 + $0x88] sm:$0xff]
  %v32 = vld [vmem:[%s0 + $0x90] sm:$0xff]
  %v33 = vld [vmem:[%s0 + $0x98] sm:$0xff]
  %v34 = vld [vmem:[%s0 + $0xa0] sm:$0xff]
  %v35 = vld [vmem:[%s0 + $0xa8] sm:$0xff]
  %v36 = vld [vmem:[%s0 + $0xb0] sm:$0xff]
  %v37 = vld [vmem:[%s0 + $0xb8] sm:$0xff]
  %v38 = vld [vmem:[%s0 + $0xc0] sm:$0xff]
  %v39 = vld [vmem:[%s0 + $0xc8] sm:$0xff]
  %v40 = vld [vmem:[%s0 + $0xd0] sm:$0xff]
  %v41 = vld [vmem:[%s0 + $0xd8] sm:$0xff]
  %v42 = vld [vmem:[%s0 + $0xe0] sm:$0xff]
  %v43 = vld [vmem:[%s0 + $0xe8] sm:$0xff]
  %v44 = vld [vmem:[%s0 + $0xf0] sm:$0xff]
  %v45 = vld [vmem:[%s0 + $0xf8] sm:$0xff]
  %v46 = vld [vmem:[%s1] sm:$0x1]
  %v48 = vlaneseq
  %v49 = vshrl.u32 %v48, 7
  %v50 = vsub.s32 0, %v49
  %v51 = vrot.slane %v46, %v50
  %v53 = vmul.f32 %v14, %v51
  %v54 = vmul.f32 %v15, %v51
  %v55 = vmul.f32 %v16, %v51
  %v56 = vmul.f32 %v17, %v51
  %v57 = vmul.f32 %v18, %v51
  %v58 = vmul.f32 %v19, %v51
  %v59 = vmul.f32 %v20, %v51
  %v60 = vmul.f32 %v21, %v51
  %v61 = vmul.f32 %v22, %v51
  %v62 = vmul.f32 %v23, %v51
  %v63 = vmul.f32 %v24, %v51
  %v64 = vmul.f32 %v25, %v51
  %v65 = vmul.f32 %v26, %v51
  %v66 = vmul.f32 %v27, %v51
  %v67 = vmul.f32 %v28, %v51
  %v68 = vmul.f32 %v29, %v51
  %v69 = vmul.f32 %v30, %v51
  %v70 = vmul.f32 %v31, %v51
  %v71 = vmul.f32 %v32, %v51
  %v72 = vmul.f32 %v33, %v51
  %v73 = vmul.f32 %v34, %v51
  %v74 = vmul.f32 %v35, %v51
  %v75 = vmul.f32 %v36, %v51
  %v76 = vmul.f32 %v37, %v51
  %v77 = vmul.f32 %v38, %v51
  %v78 = vmul.f32 %v39, %v51
  %v79 = vmul.f32 %v40, %v51
  %v80 = vmul.f32 %v41, %v51
  %v81 = vmul.f32 %v42, %v51
  %v82 = vmul.f32 %v43, %v51
  %v83 = vmul.f32 %v44, %v51
  %v84 = vmul.f32 %v45, %v51
  %v85 = vld [vmem:[%s2] sm:$0x1]
  %v87 = vlaneseq
  %v88 = vshrl.u32 %v87, 7
  %v89 = vsub.s32 0, %v88
  %v90 = vrot.slane %v85, %v89
  %v92 = vadd.f32 %v53, %v90
  %v93 = vadd.f32 %v54, %v90
  %v94 = vadd.f32 %v55, %v90
  %v95 = vadd.f32 %v56, %v90
  %v96 = vadd.f32 %v57, %v90
  %v97 = vadd.f32 %v58, %v90
  %v98 = vadd.f32 %v59, %v90
  %v99 = vadd.f32 %v60, %v90
  %v100 = vadd.f32 %v61, %v90
  %v101 = vadd.f32 %v62, %v90
  %v102 = vadd.f32 %v63, %v90
  %v103 = vadd.f32 %v64, %v90
  %v104 = vadd.f32 %v65, %v90
  %v105 = vadd.f32 %v66, %v90
  %v106 = vadd.f32 %v67, %v90
  %v107 = vadd.f32 %v68, %v90
  %v108 = vadd.f32 %v69, %v90
  %v109 = vadd.f32 %v70, %v90
  %v110 = vadd.f32 %v71, %v90
  %v111 = vadd.f32 %v72, %v90
  %v112 = vadd.f32 %v73, %v90
  %v113 = vadd.f32 %v74, %v90
  %v114 = vadd.f32 %v75, %v90
  %v115 = vadd.f32 %v76, %v90
  %v116 = vadd.f32 %v77, %v90
  %v117 = vadd.f32 %v78, %v90
  %v118 = vadd.f32 %v79, %v90
  %v119 = vadd.f32 %v80, %v90
  %v120 = vadd.f32 %v81, %v90
  %v121 = vadd.f32 %v82, %v90
  %v122 = vadd.f32 %v83, %v90
  %v123 = vadd.f32 %v84, %v90
  %v124 = vmax.f32 %v92, 0.0
  %v125 = vmax.f32 %v93, 0.0
  %v126 = vmax.f32 %v94, 0.0
  %v127 = vmax.f32 %v95, 0.0
  %v128 = vmax.f32 %v96, 0.0
  %v129 = vmax.f32 %v97, 0.0
  %v130 = vmax.f32 %v98, 0.0
  %v131 = vmax.f32 %v99, 0.0
  %v132 = vmax.f32 %v100, 0.0
  %v133 = vmax.f32 %v101, 0.0
  %v134 = vmax.f32 %v102, 0.0
  %v135 = vmax.f32 %v103, 0.0
  %v136 = vmax.f32 %v104, 0.0
  %v137 = vmax.f32 %v105, 0.0
  %v138 = vmax.f32 %v106, 0.0
  %v139 = vmax.f32 %v107, 0.0
  %v140 = vmax.f32 %v108, 0.0
  %v141 = vmax.f32 %v109, 0.0
  %v142 = vmax.f32 %v110, 0.0
  %v143 = vmax.f32 %v111, 0.0
  %v144 = vmax.f32 %v112, 0.0
  %v145 = vmax.f32 %v113, 0.0
  %v146 = vmax.f32 %v114, 0.0
  %v147 = vmax.f32 %v115, 0.0
  %v148 = vmax.f32 %v116, 0.0
  %v149 = vmax.f32 %v117, 0.0
  %v150 = vmax.f32 %v118, 0.0
  %v151 = vmax.f32 %v119, 0.0
  %v152 = vmax.f32 %v120, 0.0
  %v153 = vmax.f32 %v121, 0.0
  %v154 = vmax.f32 %v122, 0.0
  %v155 = vmax.f32 %v123, 0.0
  %156 = vst [vmem:[%s3] sm:$0xff] %v124
  %157 = vst [vmem:[%s3 + $0x8] sm:$0xff] %v125
  %158 = vst [vmem:[%s3 + $0x10] sm:$0xff] %v126
  %159 = vst [vmem:[%s3 + $0x18] sm:$0xff] %v127
  %160 = vst [vmem:[%s3 + $0x20] sm:$0xff] %v128
  %161 = vst [vmem:[%s3 + $0x28] sm:$0xff] %v129
  %162 = vst [vmem:[%s3 + $0x30] sm:$0xff] %v130
  %163 = vst [vmem:[%s3 + $0x38] sm:$0xff] %v131
  %164 = vst [vmem:[%s3 + $0x40] sm:$0xff] %v132
  %165 = vst [vmem:[%s3 + $0x48] sm:$0xff] %v133
  %166 = vst [vmem:[%s3 + $0x50] sm:$0xff] %v134
  %167 = vst [vmem:[%s3 + $0x58] sm:$0xff] %v135
  %168 = vst [vmem:[%s3 + $0x60] sm:$0xff] %v136
  %169 = vst [vmem:[%s3 + $0x68] sm:$0xff] %v137
  %170 = vst [vmem:[%s3 + $0x70] sm:$0xff] %v138
  %171 = vst [vmem:[%s3 + $0x78] sm:$0xff] %v139
  %172 = vst [vmem:[%s3 + $0x80] sm:$0xff] %v140
  %173 = vst [vmem:[%s3 + $0x88] sm:$0xff] %v141
  %174 = vst [vmem:[%s3 + $0x90] sm:$0xff] %v142
  %175 = vst [vmem:[%s3 + $0x98] sm:$0xff] %v143
  %176 = vst [vmem:[%s3 + $0xa0] sm:$0xff] %v144
  %177 = vst [vmem:[%s3 + $0xa8] sm:$0xff] %v145
  %178 = vst [vmem:[%s3 + $0xb0] sm:$0xff] %v146
  %179 = vst [vmem:[%s3 + $0xb8] sm:$0xff] %v147
  %180 = vst [vmem:[%s3 + $0xc0] sm:$0xff] %v148
  %181 = vst [vmem:[%s3 + $0xc8] sm:$0xff] %v149
  %182 = vst [vmem:[%s3 + $0xd0] sm:$0xff] %v150
  %183 = vst [vmem:[%s3 + $0xd8] sm:$0xff] %v151
  %184 = vst [vmem:[%s3 + $0xe0] sm:$0xff] %v152
  %185 = vst [vmem:[%s3 + $0xe8] sm:$0xff] %v153
  %186 = vst [vmem:[%s3 + $0xf0] sm:$0xff] %v154
  %187 = vst [vmem:[%s3 + $0xf8] sm:$0xff] %v155
  // Predicated region
  $region14: #{resnet_forward.33} parent=0 // pred_check
    _
  $region15: #{resnet_forward.33} parent=0 // pred_check_branch
    %189 = sbr.rel (0) target = $region17
  $region16: #{resnet_forward.33} parent=0 // pred_region
    _
  $region17: #{resnet_forward.33} parent=0 // pred_fallthru
    _
  // Predicated region
  $region18: #{resnet_forward.33} parent=0 // pred_check
    _
  $region19: #{resnet_forward.33} parent=0 // pred_check_branch
    %191 = sbr.rel (0) target = $region21
  $region20: #{resnet_forward.33} parent=0 // pred_region
    _
  $region21: #{resnet_forward.33} parent=0 // pred_fallthru
    _

// kernel: resnet_forward.34
$region0: #{resnet_forward.34}
  #allocation0 [shape = 'u32[]', space=smem, size = 0x4, offset = 0x4, fixed_abs, tag = 'smem constant byte address 0x4 - core index']
  #allocation1 [shape = 'u32[144,128]{1,0:T(1,128)}', space=vmem, size = 0x12000, scoped, tag = 'internal scratch']
  %s0 = inlined_call_operand.vmem [shape: bf16[2048,256], index: 0, kind: input, shape index: {}]
  %s1 = inlined_call_operand.vmem [shape: bf16[256,128], index: 1, kind: input, shape index: {}]
  %s2 = inlined_call_operand.vmem [shape: f32[2048,128], index: 2, kind: output, shape index: {}]
  %s3 = sld [smem:[#allocation0]]
  $region41: #{resnet_forward.34} parent=0
    _
  %s5 = ssub.s32 1, %s3
  %s6 = scalar_select 0, %s5, %s3
  loop: start=0, step=1, limit=10
  $region2: #{resnet_forward.34} parent=0 // loop_pre_header
    _
  $region3: #{resnet_forward.34} parent=0 // loop_header
    %s8 = sphi 0, %s12
    %p9 = scmp.ge.s32.totalorder %s8, 10
    %s18 = sphi 0, %s20
    %s21 = sphi 0, %s18
    %s22 = sphi 0, %s21
    %s38 = sphi 0, %s22
    %s42 = sphi 0, %s42
    %s44 = sphi 0, %s42
    %s45 = sphi 0, %s44
    %s59 = sphi 0, %s45
    %s65 = sphi 0, %s67
    %s68 = sphi 0, %s65
    %s69 = sphi 0, %s68
    %s85 = sphi 0, %s69
  $region4: #{resnet_forward.34} parent=0 // loop_header_branch
    %11 = sbr.rel (%p9) target = $region8
  $region5: #{resnet_forward.34} parent=0 // loop_body
    %s13 = ssub.s32 %s8, 1
    %s14 = ssub.s32 %s8, 2
    %s15 = sadd.s32 %s8, 1
    %s16 = ssub.s32 %s8, %s15
    %p17 = scmp.eq.s32.totalorder %s16, 0
    %s19 = sadd.s32 %s18, 1
    %s20 = scalar_select %p17, %s18, %s19
    %p23 = pneg %p17
    %p24 = scmp.eq.s32.totalorder %s8, 7
    %p25 = por %p23, %p24
    %p26 = scmp.ne.s32.totalorder %s18, %s21
    %p27 = scmp.eq.s32.totalorder %s8, 0
    %p28 = por %p26, %p27
    %p29 = scmp.ne.s32.totalorder %s18, %s21
    %p30 = scmp.eq.s32.totalorder %s13, 7
    %p31 = por %p29, %p30
    %p32 = scmp.ne.s32.totalorder %s21, %s22
    %p33 = scmp.eq.s32.totalorder %s13, 0
    %p34 = por %p32, %p33
    %p35 = scmp.ne.s32.totalorder %s21, %s22
    %p36 = scmp.eq.s32.totalorder %s14, 7
    %p37 = por %p35, %p36
    %p39 = scmp.ne.s32.totalorder %s22, %s38
    %p40 = scmp.eq.s32.totalorder %s14, 0
    %p41 = por %p39, %p40
    %s43 = sadd.s32 %s42, 1
    %p46 = scmp.eq.s32.totalorder %s8, 7
    %p47 = scmp.ne.s32.totalorder %s42, %s44
    %p48 = scmp.eq.s32.totalorder %s8, 0
    %p49 = por %p47, %p48
    %p50 = scmp.ne.s32.totalorder %s42, %s44
    %p51 = scmp.eq.s32.totalorder %s13, 7
    %p52 = por %p50, %p51
    %p53 = scmp.ne.s32.totalorder %s44, %s45
    %p54 = scmp.eq.s32.totalorder %s13, 0
    %p55 = por %p53, %p54
    %p56 = scmp.ne.s32.totalorder %s44, %s45
    %p57 = scmp.eq.s32.totalorder %s14, 7
    %p58 = por %p56, %p57
    %p60 = scmp.ne.s32.totalorder %s45, %s59
    %p61 = scmp.eq.s32.totalorder %s14, 0
    %p62 = por %p60, %p61
    %s63 = ssub.s32 %s8, %s15
    %p64 = scmp.eq.s32.totalorder %s63, 0
    %s66 = sadd.s32 %s65, 1
    %s67 = scalar_select %p64, %s65, %s66
    %p70 = pneg %p64
    %p71 = scmp.eq.s32.totalorder %s8, 7
    %p72 = por %p70, %p71
    %p73 = scmp.ne.s32.totalorder %s65, %s68
    %p74 = scmp.eq.s32.totalorder %s8, 0
    %p75 = por %p73, %p74
    %p76 = scmp.ne.s32.totalorder %s65, %s68
    %p77 = scmp.eq.s32.totalorder %s13, 7
    %p78 = por %p76, %p77
    %p79 = scmp.ne.s32.totalorder %s68, %s69
    %p80 = scmp.eq.s32.totalorder %s13, 0
    %p81 = por %p79, %p80
    %p82 = scmp.ne.s32.totalorder %s68, %s69
    %p83 = scmp.eq.s32.totalorder %s14, 7
    %p84 = por %p82, %p83
    %p86 = scmp.ne.s32.totalorder %s69, %s85
    %p87 = scmp.eq.s32.totalorder %s14, 0
    %p88 = por %p86, %p87
    %p89 = scmp.le.s32.totalorder 1, %s8
    %p90 = scmp.lt.s32.totalorder %s8, 9
    %p91 = pnand %p89, %p90
    %p92 = pneg %p91
    // Predicated region
    $region9: #{resnet_forward.34} parent=5 // pred_check
      _
    $region10: #{resnet_forward.34} parent=5 // pred_check_branch
      %94 = sbr.rel (%p91) target = $region12
    $region11: #{resnet_forward.34} parent=5 // pred_region
      %s95 = ssub.s32 %s8, 1
      // Predicated region
      $region13: #{resnet_forward.34} parent=11 // pred_check
        %p96 = pneg %p55
      $region14: #{resnet_forward.34} parent=11 // pred_check_branch
        %98 = sbr.rel (%p96) target = $region16
      $region15: #{resnet_forward.34} parent=11 // pred_region
        _
      $region16: #{resnet_forward.34} parent=11 // pred_fallthru
        _
    $region12: #{resnet_forward.34} parent=5 // pred_fallthru
      _
    %p99 = scmp.lt.s32.totalorder %s8, 8
    // Predicated region
    $region17: #{resnet_forward.34} parent=5 // pred_check
      %p100 = pneg %p99
    $region18: #{resnet_forward.34} parent=5 // pred_check_branch
      %102 = sbr.rel (%p100) target = $region20
    $region19: #{resnet_forward.34} parent=5 // pred_region
      // Predicated region
      $region21: #{resnet_forward.34} parent=19 // pred_check
        %p103 = pneg %p28
      $region22: #{resnet_forward.34} parent=19 // pred_check_branch
        %105 = sbr.rel (%p103) target = $region24
      $region23: #{resnet_forward.34} parent=19 // pred_region
        %s106 = smul.u32 32, %s8
        %p107 = scmp.lt.s32.totalorder %s106, 255
        %s108 = scalar_select %p107, %s106, 255
        %s109 = smul.addr %s108, 2
        %s110 = smul.addr %s109, 4
        %s111 = scalar_lea.vmem %s0, %s110
        %s112 = smul.u32 32, %s8
      $region24: #{resnet_forward.34} parent=19 // pred_fallthru
        _
    $region20: #{resnet_forward.34} parent=5 // pred_fallthru
      _
    %p113 = scmp.le.s32.totalorder 1, %s8
    %p114 = scmp.lt.s32.totalorder %s8, 9
    %p115 = pnand %p113, %p114
    %p116 = pneg %p115
    // Predicated region
    $region25: #{resnet_forward.34} parent=5 // pred_check
      _
    $region26: #{resnet_forward.34} parent=5 // pred_check_branch
      %118 = sbr.rel (%p115) target = $region28
    $region27: #{resnet_forward.34} parent=5 // pred_region
      %s119 = ssub.s32 %s8, 1
      %s120 = smul.u32 32, %s13
      %p121 = scmp.lt.s32.totalorder %s120, 255
      %s122 = scalar_select %p121, %s120, 255
      %s123 = smul.addr %s122, 2
      %s124 = smul.addr %s123, 4
      %s125 = scalar_lea.vmem %s0, %s124
      %p126 = pneg %p34
      %p127 = pneg %p31
      %p128 = pneg %p55
      %p129 = pneg %p52
      %p130 = pneg %p81
      %p131 = pneg %p78
      %s132 = smul.u32 32, %s13
      %p133 = scmp.lt.s32.totalorder %s132, 255
      %s134 = scalar_select %p133, %s132, 255
      %s135 = smul.addr %s134, 8
      %s136 = scalar_lea.vmem %s2, %s135
      %s137 = smul.u32 32, %s13
      %p138 = scmp.lt.s32.totalorder %s137, 255
      %s139 = scalar_select %p138, %s137, 255
      %s140 = smul.addr %s139, 2
      %s141 = smul.addr %s140, 4
      %s142 = scalar_lea.vmem %s0, %s141
      %s143 = smul.u32 32, %s13
      %s144 = smul.u32 32, %s13
      %p145 = scmp.lt.s32.totalorder %s144, 255
      %s146 = scalar_select %p145, %s144, 255
      %s147 = smul.addr %s146, 8
      %s148 = scalar_lea.vmem %s2, %s147
      %s149 = smul.u32 32, %s13
      %v151 = vld [vmem:[%s142] sm:$0xff]
      %v152 = vld [vmem:[%s142 + $0x8] sm:$0xff]
      %v153 = vld [vmem:[%s142 + $0x10] sm:$0xff]
      %v154 = vld [vmem:[%s142 + $0x18] sm:$0xff]
      %v155 = vld [vmem:[%s142 + $0x20] sm:$0xff]
      %v156 = vld [vmem:[%s142 + $0x28] sm:$0xff]
      %v157 = vld [vmem:[%s142 + $0x30] sm:$0xff]
      %v158 = vld [vmem:[%s142 + $0x38] sm:$0xff]
      %v159 = vld [vmem:[%s142 + $0x40] sm:$0xff]
      %v160 = vld [vmem:[%s142 + $0x48] sm:$0xff]
      %v161 = vld [vmem:[%s142 + $0x50] sm:$0xff]
      %v162 = vld [vmem:[%s142 + $0x58] sm:$0xff]
      %v163 = vld [vmem:[%s142 + $0x60] sm:$0xff]
      %v164 = vld [vmem:[%s142 + $0x68] sm:$0xff]
      %v165 = vld [vmem:[%s142 + $0x70] sm:$0xff]
      %v166 = vld [vmem:[%s142 + $0x78] sm:$0xff]
      %v167 = vld [vmem:[%s142 + $0x80] sm:$0xff]
      %v168 = vld [vmem:[%s142 + $0x88] sm:$0xff]
      %v169 = vld [vmem:[%s142 + $0x90] sm:$0xff]
      %v170 = vld [vmem:[%s142 + $0x98] sm:$0xff]
      %v171 = vld [vmem:[%s142 + $0xa0] sm:$0xff]
      %v172 = vld [vmem:[%s142 + $0xa8] sm:$0xff]
      %v173 = vld [vmem:[%s142 + $0xb0] sm:$0xff]
      %v174 = vld [vmem:[%s142 + $0xb8] sm:$0xff]
      %v175 = vld [vmem:[%s142 + $0xc0] sm:$0xff]
      %v176 = vld [vmem:[%s142 + $0xc8] sm:$0xff]
      %v177 = vld [vmem:[%s142 + $0xd0] sm:$0xff]
      %v178 = vld [vmem:[%s142 + $0xd8] sm:$0xff]
      %v179 = vld [vmem:[%s142 + $0xe0] sm:$0xff]
      %v180 = vld [vmem:[%s142 + $0xe8] sm:$0xff]
      %v181 = vld [vmem:[%s142 + $0xf0] sm:$0xff]
      %v182 = vld [vmem:[%s142 + $0xf8] sm:$0xff]
      %v183 = vld [vmem:[%s1] sm:$0xf]
      %v184 = vld [vmem:[%s1 + $0x4] sm:$0xf]
      %v185 = vld [vmem:[%s1 + $0x8] sm:$0xf]
      %v186 = vld [vmem:[%s1 + $0xc] sm:$0xf]
      %v187 = vld [vmem:[%s1 + $0x10] sm:$0xf]
      %v188 = vld [vmem:[%s1 + $0x14] sm:$0xf]
      %v189 = vld [vmem:[%s1 + $0x18] sm:$0xf]
      %v190 = vld [vmem:[%s1 + $0x1c] sm:$0xf]
      %v191 = vld [vmem:[%s1 + $0x20] sm:$0xf]
      %v192 = vld [vmem:[%s1 + $0x24] sm:$0xf]
      %v193 = vld [vmem:[%s1 + $0x28] sm:$0xf]
      %v194 = vld [vmem:[%s1 + $0x2c] sm:$0xf]
      %v195 = vld [vmem:[%s1 + $0x30] sm:$0xf]
      %v196 = vld [vmem:[%s1 + $0x34] sm:$0xf]
      %v197 = vld [vmem:[%s1 + $0x38] sm:$0xf]
      %v198 = vld [vmem:[%s1 + $0x3c] sm:$0xf]
      %v199 = vld [vmem:[%s1 + $0x40] sm:$0xf]
      %v200 = vld [vmem:[%s1 + $0x44] sm:$0xf]
      %v201 = vld [vmem:[%s1 + $0x48] sm:$0xf]
      %v202 = vld [vmem:[%s1 + $0x4c] sm:$0xf]
      %v203 = vld [vmem:[%s1 + $0x50] sm:$0xf]
      %v204 = vld [vmem:[%s1 + $0x54] sm:$0xf]
      %v205 = vld [vmem:[%s1 + $0x58] sm:$0xf]
      %v206 = vld [vmem:[%s1 + $0x5c] sm:$0xf]
      %v207 = vld [vmem:[%s1 + $0x60] sm:$0xf]
      %v208 = vld [vmem:[%s1 + $0x64] sm:$0xf]
      %v209 = vld [vmem:[%s1 + $0x68] sm:$0xf]
      %v210 = vld [vmem:[%s1 + $0x6c] sm:$0xf]
      %v211 = vld [vmem:[%s1 + $0x70] sm:$0xf]
      %v212 = vld [vmem:[%s1 + $0x74] sm:$0xf]
      %v213 = vld [vmem:[%s1 + $0x78] sm:$0xf]
      %v214 = vld [vmem:[%s1 + $0x7c] sm:$0xf]
      %v247 = vunpack.c.l.b16 %v151
      %v248 = vunpack.c.h.b16 %v151
      %v249 = vunpack.c.l.b16 %v152
      %v250 = vunpack.c.h.b16 %v152
      %v251 = vunpack.c.l.b16 %v153
      %v252 = vunpack.c.h.b16 %v153
      %v253 = vunpack.c.l.b16 %v154
      %v254 = vunpack.c.h.b16 %v154
      %v255 = vunpack.c.l.b16 %v155
      %v256 = vunpack.c.h.b16 %v155
      %v257 = vunpack.c.l.b16 %v156
      %v258 = vunpack.c.h.b16 %v156
      %v259 = vunpack.c.l.b16 %v157
      %v260 = vunpack.c.h.b16 %v157
      %v261 = vunpack.c.l.b16 %v158
      %v262 = vunpack.c.h.b16 %v158
      %v263 = vunpack.c.l.b16 %v159
      %v264 = vunpack.c.h.b16 %v159
      %v265 = vunpack.c.l.b16 %v160
      %v266 = vunpack.c.h.b16 %v160
      %v267 = vunpack.c.l.b16 %v161
      %v268 = vunpack.c.h.b16 %v161
      %v269 = vunpack.c.l.b16 %v162
      %v270 = vunpack.c.h.b16 %v162
      %v271 = vunpack.c.l.b16 %v163
      %v272 = vunpack.c.h.b16 %v163
      %v273 = vunpack.c.l.b16 %v164
      %v274 = vunpack.c.h.b16 %v164
      %v275 = vunpack.c.l.b16 %v165
      %v276 = vunpack.c.h.b16 %v165
      %v277 = vunpack.c.l.b16 %v166
      %v278 = vunpack.c.h.b16 %v166
      %v279 = vunpack.c.l.b16 %v167
      %v280 = vunpack.c.h.b16 %v167
      %v281 = vunpack.c.l.b16 %v168
      %v282 = vunpack.c.h.b16 %v168
      %v283 = vunpack.c.l.b16 %v169
      %v284 = vunpack.c.h.b16 %v169
      %v285 = vunpack.c.l.b16 %v170
      %v286 = vunpack.c.h.b16 %v170
      %v287 = vunpack.c.l.b16 %v171
      %v288 = vunpack.c.h.b16 %v171
      %v289 = vunpack.c.l.b16 %v172
      %v290 = vunpack.c.h.b16 %v172
      %v291 = vunpack.c.l.b16 %v173
      %v292 = vunpack.c.h.b16 %v173
      %v293 = vunpack.c.l.b16 %v174
      %v294 = vunpack.c.h.b16 %v174
      %v295 = vunpack.c.l.b16 %v175
      %v296 = vunpack.c.h.b16 %v175
      %v297 = vunpack.c.l.b16 %v176
      %v298 = vunpack.c.h.b16 %v176
      %v299 = vunpack.c.l.b16 %v177
      %v300 = vunpack.c.h.b16 %v177
      %v301 = vunpack.c.l.b16 %v178
      %v302 = vunpack.c.h.b16 %v178
      %v303 = vunpack.c.l.b16 %v179
      %v304 = vunpack.c.h.b16 %v179
      %v305 = vunpack.c.l.b16 %v180
      %v306 = vunpack.c.h.b16 %v180
      %v307 = vunpack.c.l.b16 %v181
      %v308 = vunpack.c.h.b16 %v181
      %v309 = vunpack.c.l.b16 %v182
      %v310 = vunpack.c.h.b16 %v182
      %v311 = vpack.c.b16 %v249, %v247
      %v312 = vpack.c.b16 %v250, %v248
      %v313 = vpack.c.b16 %v253, %v251
      %v314 = vpack.c.b16 %v254, %v252
      %v315 = vpack.c.b16 %v257, %v255
      %v316 = vpack.c.b16 %v258, %v256
      %v317 = vpack.c.b16 %v261, %v259
      %v318 = vpack.c.b16 %v262, %v260
      %v319 = vpack.c.b16 %v265, %v263
      %v320 = vpack.c.b16 %v266, %v264
      %v321 = vpack.c.b16 %v269, %v267
      %v322 = vpack.c.b16 %v270, %v268
      %v323 = vpack.c.b16 %v273, %v271
      %v324 = vpack.c.b16 %v274, %v272
      %v325 = vpack.c.b16 %v277, %v275
      %v326 = vpack.c.b16 %v278, %v276
      %v327 = vpack.c.b16 %v281, %v279
      %v328 = vpack.c.b16 %v282, %v280
      %v329 = vpack.c.b16 %v285, %v283
      %v330 = vpack.c.b16 %v286, %v284
      %v331 = vpack.c.b16 %v289, %v287
      %v332 = vpack.c.b16 %v290, %v288
      %v333 = vpack.c.b16 %v293, %v291
      %v334 = vpack.c.b16 %v294, %v292
      %v335 = vpack.c.b16 %v297, %v295
      %v336 = vpack.c.b16 %v298, %v296
      %v337 = vpack.c.b16 %v301, %v299
      %v338 = vpack.c.b16 %v302, %v300
      %v339 = vpack.c.b16 %v305, %v303
      %v340 = vpack.c.b16 %v306, %v304
      %v341 = vpack.c.b16 %v309, %v307
      %v342 = vpack.c.b16 %v310, %v308
      %v407 = vunpack.c.l.b16 %v183
      %v408 = vunpack.c.l.b16 %v184
      %v409 = vunpack.c.l.b16 %v185
      %v410 = vunpack.c.l.b16 %v186
      %v411 = vunpack.c.l.b16 %v187
      %v412 = vunpack.c.l.b16 %v188
      %v413 = vunpack.c.l.b16 %v189
      %v414 = vunpack.c.l.b16 %v190
      %v415 = vunpack.c.l.b16 %v191
      %v416 = vunpack.c.l.b16 %v192
      %v417 = vunpack.c.l.b16 %v193
      %v418 = vunpack.c.l.b16 %v194
      %v419 = vunpack.c.l.b16 %v195
      %v420 = vunpack.c.l.b16 %v196
      %v421 = vunpack.c.l.b16 %v197
      %v422 = vunpack.c.l.b16 %v198
      %v423 = vunpack.c.l.b16 %v199
      %v424 = vunpack.c.l.b16 %v200
      %v425 = vunpack.c.l.b16 %v201
      %v426 = vunpack.c.l.b16 %v202
      %v427 = vunpack.c.l.b16 %v203
      %v428 = vunpack.c.l.b16 %v204
      %v429 = vunpack.c.l.b16 %v205
      %v430 = vunpack.c.l.b16 %v206
      %v431 = vunpack.c.l.b16 %v207
      %v432 = vunpack.c.l.b16 %v208
      %v433 = vunpack.c.l.b16 %v209
      %v434 = vunpack.c.l.b16 %v210
      %v435 = vunpack.c.l.b16 %v211
      %v436 = vunpack.c.l.b16 %v212
      %v437 = vunpack.c.l.b16 %v213
      %v438 = vunpack.c.l.b16 %v214
      %v439 = vpack.c.b16 %v408, %v407
      %v440 = vpack.c.b16 %v410, %v409
      %v441 = vpack.c.b16 %v412, %v411
      %v442 = vpack.c.b16 %v414, %v413
      %v443 = vpack.c.b16 %v416, %v415
      %v444 = vpack.c.b16 %v418, %v417
      %v445 = vpack.c.b16 %v420, %v419
      %v446 = vpack.c.b16 %v422, %v421
      %v447 = vpack.c.b16 %v424, %v423
      %v448 = vpack.c.b16 %v426, %v425
      %v449 = vpack.c.b16 %v428, %v427
      %v450 = vpack.c.b16 %v430, %v429
      %v451 = vpack.c.b16 %v432, %v431
      %v452 = vpack.c.b16 %v434, %v433
      %v453 = vpack.c.b16 %v436, %v435
      %v454 = vpack.c.b16 %v438, %v437
      %471 = vmatprep.subr.bf16.mxu0 0
      %472 = vmatpush1.bf16.msra.mxu0 %v446
      %473 = vmatprep.subr.bf16.mxu0 0
      %474 = vmatpush1.bf16.msra.mxu0 %v445
      %475 = vmatprep.subr.bf16.mxu0 0
      %476 = vmatpush1.bf16.msra.mxu0 %v444
      %477 = vmatprep.subr.bf16.mxu0 0
      %478 = vmatpush1.bf16.msra.mxu0 %v443
      %479 = vmatprep.subr.bf16.mxu0 0
      %480 = vmatpush1.bf16.msra.mxu0 %v442
      %481 = vmatprep.subr.bf16.mxu0 0
      %482 = vmatpush1.bf16.msra.mxu0 %v441
      %483 = vmatprep.subr.bf16.mxu0 0
      %484 = vmatpush1.bf16.msra.mxu0 %v440
      %485 = vmatprep.subr.bf16.mxu0 0
      %486 = vmatpush1.bf16.msra.mxu0 %v439
      %487 = vmatprep.subr.bf16.mxu0 0
      %488 = vmatpush2.bf16.msra.mxu0 %v454
      %489 = vmatprep.subr.bf16.mxu0 0
      %490 = vmatpush2.bf16.msra.mxu0 %v453
      %491 = vmatprep.subr.bf16.mxu0 0
      %492 = vmatpush2.bf16.msra.mxu0 %v452
      %493 = vmatprep.subr.bf16.mxu0 0
      %494 = vmatpush2.bf16.msra.mxu0 %v451
      %495 = vmatprep.subr.bf16.mxu0 0
      %496 = vmatpush2.bf16.msra.mxu0 %v450
      %497 = vmatprep.subr.bf16.mxu0 0
      %498 = vmatpush2.bf16.msra.mxu0 %v449
      %499 = vmatprep.subr.bf16.mxu0 0
      %500 = vmatpush2.bf16.msra.mxu0 %v448
      %501 = vmatprep.subr.bf16.mxu0 0
      %502 = vmatpush2.bf16.msra.mxu0 %v447
      %503 = vmatprep.mubr.bf16.mxu0 %v312
      %504 = vmatmul.mubr.bf16.gmra.mxu0 %v311
      %v505 = vpop.f32.mrf.mxu0
      %v506 = vadd.f32 0.0, %v505
      %v507 = vpop.f32.mrf.mxu0
      %v508 = vpop.f32.mrf.mxu0
      %v509 = vadd.f32 0.0, %v508
      %v510 = vpop.f32.mrf.mxu0
      %511 = vmatprep.mubr.bf16.mxu0 %v314
      %512 = vmatmul.mubr.bf16.gmra.mxu0 %v313
      %v513 = vpop.f32.mrf.mxu0
      %v514 = vadd.f32 0.0, %v513
      %v515 = vpop.f32.mrf.mxu0
      %v516 = vpop.f32.mrf.mxu0
      %v517 = vadd.f32 0.0, %v516
      %v518 = vpop.f32.mrf.mxu0
      %519 = vmatprep.mubr.bf16.mxu0 %v316
      %520 = vmatmul.mubr.bf16.gmra.mxu0 %v315
      %v521 = vpop.f32.mrf.mxu0
      %v522 = vadd.f32 0.0, %v521
      %v523 = vpop.f32.mrf.mxu0
      %v524 = vpop.f32.mrf.mxu0
      %v525 = vadd.f32 0.0, %v524
      %v526 = vpop.f32.mrf.mxu0
      %527 = vmatprep.mubr.bf16.mxu0 %v318
      %528 = vmatmul.mubr.bf16.gmra.mxu0 %v317
      %v529 = vpop.f32.mrf.mxu0
      %v530 = vadd.f32 0.0, %v529
      %v531 = vpop.f32.mrf.mxu0
      %v532 = vpop.f32.mrf.mxu0
      %v533 = vadd.f32 0.0, %v532
      %v534 = vpop.f32.mrf.mxu0
      %535 = vmatprep.mubr.bf16.mxu0 %v320
      %536 = vmatmul.mubr.bf16.gmra.mxu0 %v319
      %v537 = vpop.f32.mrf.mxu0
      %v538 = vadd.f32 0.0, %v537
      %v539 = vpop.f32.mrf.mxu0
      %v540 = vpop.f32.mrf.mxu0
      %v541 = vadd.f32 0.0, %v540
      %v542 = vpop.f32.mrf.mxu0
      %543 = vmatprep.mubr.bf16.mxu0 %v322
      %544 = vmatmul.mubr.bf16.gmra.mxu0 %v321
      %v545 = vpop.f32.mrf.mxu0
      %v546 = vadd.f32 0.0, %v545
      %v547 = vpop.f32.mrf.mxu0
      %v548 = vpop.f32.mrf.mxu0
      %v549 = vadd.f32 0.0, %v548
      %v550 = vpop.f32.mrf.mxu0
      %551 = vmatprep.mubr.bf16.mxu0 %v324
      %552 = vmatmul.mubr.bf16.gmra.mxu0 %v323
      %v553 = vpop.f32.mrf.mxu0
      %v554 = vadd.f32 0.0, %v553
      %v555 = vpop.f32.mrf.mxu0
      %v556 = vpop.f32.mrf.mxu0
      %v557 = vadd.f32 0.0, %v556
      %v558 = vpop.f32.mrf.mxu0
      %559 = vmatprep.mubr.bf16.mxu0 %v326
      %560 = vmatmul.mubr.bf16.gmra.mxu0 %v325
      %v561 = vpop.f32.mrf.mxu0
      %v562 = vadd.f32 0.0, %v561
      %v563 = vpop.f32.mrf.mxu0
      %v564 = vpop.f32.mrf.mxu0
      %v565 = vadd.f32 0.0, %v564
      %v566 = vpop.f32.mrf.mxu0
      %567 = vmatprep.mubr.bf16.mxu0 %v328
      %568 = vmatmul.mubr.bf16.gmra.mxu0 %v327
      %v569 = vpop.f32.mrf.mxu0
      %v570 = vadd.f32 0.0, %v569
      %v571 = vpop.f32.mrf.mxu0
      %v572 = vpop.f32.mrf.mxu0
      %v573 = vadd.f32 0.0, %v572
      %v574 = vpop.f32.mrf.mxu0
      %575 = vmatprep.mubr.bf16.mxu0 %v330
      %576 = vmatmul.mubr.bf16.gmra.mxu0 %v329
      %v577 = vpop.f32.mrf.mxu0
      %v578 = vadd.f32 0.0, %v577
      %v579 = vpop.f32.mrf.mxu0
      %v580 = vpop.f32.mrf.mxu0
      %v581 = vadd.f32 0.0, %v580
      %v582 = vpop.f32.mrf.mxu0
      %583 = vmatprep.mubr.bf16.mxu0 %v332
      %584 = vmatmul.mubr.bf16.gmra.mxu0 %v331
      %v585 = vpop.f32.mrf.mxu0
      %v586 = vadd.f32 0.0, %v585
      %v587 = vpop.f32.mrf.mxu0
      %v588 = vpop.f32.mrf.mxu0
      %v589 = vadd.f32 0.0, %v588
      %v590 = vpop.f32.mrf.mxu0
      %591 = vmatprep.mubr.bf16.mxu0 %v334
      %592 = vmatmul.mubr.bf16.gmra.mxu0 %v333
      %v593 = vpop.f32.mrf.mxu0
      %v594 = vadd.f32 0.0, %v593
      %v595 = vpop.f32.mrf.mxu0
      %v596 = vpop.f32.mrf.mxu0
      %v597 = vadd.f32 0.0, %v596
      %v598 = vpop.f32.mrf.mxu0
      %599 = vmatprep.mubr.bf16.mxu0 %v336
      %600 = vmatmul.mubr.bf16.gmra.mxu0 %v335
      %v601 = vpop.f32.mrf.mxu0
      %v602 = vadd.f32 0.0, %v601
      %v603 = vpop.f32.mrf.mxu0
      %v604 = vpop.f32.mrf.mxu0
      %v605 = vadd.f32 0.0, %v604
      %v606 = vpop.f32.mrf.mxu0
      %607 = vmatprep.mubr.bf16.mxu0 %v338
      %608 = vmatmul.mubr.bf16.gmra.mxu0 %v337
      %v609 = vpop.f32.mrf.mxu0
      %v610 = vadd.f32 0.0, %v609
      %v611 = vpop.f32.mrf.mxu0
      %v612 = vpop.f32.mrf.mxu0
      %v613 = vadd.f32 0.0, %v612
      %v614 = vpop.f32.mrf.mxu0
      %615 = vmatprep.mubr.bf16.mxu0 %v340
      %616 = vmatmul.mubr.bf16.gmra.mxu0 %v339
      %v617 = vpop.f32.mrf.mxu0
      %v618 = vadd.f32 0.0, %v617
      %v619 = vpop.f32.mrf.mxu0
      %v620 = vpop.f32.mrf.mxu0
      %v621 = vadd.f32 0.0, %v620
      %v622 = vpop.f32.mrf.mxu0
      %623 = vmatprep.mubr.bf16.mxu0 %v342
      %624 = vmatmul.mubr.bf16.gmra.mxu0 %v341
      %v625 = vpop.f32.mrf.mxu0
      %v626 = vadd.f32 0.0, %v625
      %v627 = vpop.f32.mrf.mxu0
      %v628 = vpop.f32.mrf.mxu0
      %v629 = vadd.f32 0.0, %v628
      %v630 = vpop.f32.mrf.mxu0
      %631 = vdwg.mxu0
      %632 = vst [vmem:[%s148] sm:$0xff] %v506
      %633 = vst [vmem:[%s148 + $0x8] sm:$0xff] %v509
      %634 = vst [vmem:[%s148 + $0x10] sm:$0xff] %v514
      %635 = vst [vmem:[%s148 + $0x18] sm:$0xff] %v517
      %636 = vst [vmem:[%s148 + $0x20] sm:$0xff] %v522
      %637 = vst [vmem:[%s148 + $0x28] sm:$0xff] %v525
      %638 = vst [vmem:[%s148 + $0x30] sm:$0xff] %v530
      %639 = vst [vmem:[%s148 + $0x38] sm:$0xff] %v533
      %640 = vst [vmem:[%s148 + $0x40] sm:$0xff] %v538
      %641 = vst [vmem:[%s148 + $0x48] sm:$0xff] %v541
      %642 = vst [vmem:[%s148 + $0x50] sm:$0xff] %v546
      %643 = vst [vmem:[%s148 + $0x58] sm:$0xff] %v549
      %644 = vst [vmem:[%s148 + $0x60] sm:$0xff] %v554
      %645 = vst [vmem:[%s148 + $0x68] sm:$0xff] %v557
      %646 = vst [vmem:[%s148 + $0x70] sm:$0xff] %v562
      %647 = vst [vmem:[%s148 + $0x78] sm:$0xff] %v565
      %648 = vst [vmem:[%s148 + $0x80] sm:$0xff] %v570
      %649 = vst [vmem:[%s148 + $0x88] sm:$0xff] %v573
      %650 = vst [vmem:[%s148 + $0x90] sm:$0xff] %v578
      %651 = vst [vmem:[%s148 + $0x98] sm:$0xff] %v581
      %652 = vst [vmem:[%s148 + $0xa0] sm:$0xff] %v586
      %653 = vst [vmem:[%s148 + $0xa8] sm:$0xff] %v589
      %654 = vst [vmem:[%s148 + $0xb0] sm:$0xff] %v594
      %655 = vst [vmem:[%s148 + $0xb8] sm:$0xff] %v597
      %656 = vst [vmem:[%s148 + $0xc0] sm:$0xff] %v602
      %657 = vst [vmem:[%s148 + $0xc8] sm:$0xff] %v605
      %658 = vst [vmem:[%s148 + $0xd0] sm:$0xff] %v610
      %659 = vst [vmem:[%s148 + $0xd8] sm:$0xff] %v613
      %660 = vst [vmem:[%s148 + $0xe0] sm:$0xff] %v618
      %661 = vst [vmem:[%s148 + $0xe8] sm:$0xff] %v621
      %662 = vst [vmem:[%s148 + $0xf0] sm:$0xff] %v626
      %663 = vst [vmem:[%s148 + $0xf8] sm:$0xff] %v629
      %s664 = smul.u32 32, %s13
      %p665 = scmp.lt.s32.totalorder %s664, 255
      %s666 = scalar_select %p665, %s664, 255
      %s667 = smul.addr %s666, 8
      %s668 = scalar_lea.vmem %s2, %s667
      // Predicated region
      $region29: #{resnet_forward.34} parent=27 // pred_check
        %p669 = pneg %p78
      $region30: #{resnet_forward.34} parent=27 // pred_check_branch
        %671 = sbr.rel (%p669) target = $region32
      $region31: #{resnet_forward.34} parent=27 // pred_region
        %s672 = smul.u32 32, %s13
      $region32: #{resnet_forward.34} parent=27 // pred_fallthru
        _
    $region28: #{resnet_forward.34} parent=5 // pred_fallthru
      _
    %p673 = scmp.le.s32.totalorder 2, %s8
    // Predicated region
    $region33: #{resnet_forward.34} parent=5 // pred_check
      %p674 = pneg %p673
    $region34: #{resnet_forward.34} parent=5 // pred_check_branch
      %676 = sbr.rel (%p674) target = $region36
    $region35: #{resnet_forward.34} parent=5 // pred_region
      %s677 = ssub.s32 %s8, 2
      // Predicated region
      $region37: #{resnet_forward.34} parent=35 // pred_check
        %p678 = pneg %p84
      $region38: #{resnet_forward.34} parent=35 // pred_check_branch
        %680 = sbr.rel (%p678) target = $region40
      $region39: #{resnet_forward.34} parent=35 // pred_region
        %s681 = smul.u32 32, %s14
        %p682 = scmp.lt.s32.totalorder %s681, 255
        %s683 = scalar_select %p682, %s681, 255
        %s684 = smul.addr %s683, 8
        %s685 = scalar_lea.vmem %s2, %s684
      $region40: #{resnet_forward.34} parent=35 // pred_fallthru
        _
    $region36: #{resnet_forward.34} parent=5 // pred_fallthru
      _
  $region6: #{resnet_forward.34} parent=0 // loop_footer
    %s12 = sadd.s32 1, %s8
  $region7: #{resnet_forward.34} parent=0 // loop_footer_branch
    %7 = sbr.rel target = $region3
  $region8: #{resnet_forward.34} parent=0 // loop_exit
    _

// kernel: resnet_forward.37
$region0: #{resnet_forward.37}
  #allocation0 [shape = 'u32[]', space=smem, size = 0x4, offset = 0x4, fixed_abs, tag = 'smem constant byte address 0x4 - core index']
  #allocation1 [shape = 'u32[144,128]{1,0:T(1,128)}', space=vmem, size = 0x12000, scoped, tag = 'internal scratch']
  %s0 = inlined_call_operand.vmem [shape: f32[256,128], index: 0, kind: input, shape index: {}]
  %s1 = inlined_call_operand.vmem [shape: f32[1,128], index: 1, kind: input, shape index: {}]
  %s2 = inlined_call_operand.vmem [shape: f32[1,128], index: 2, kind: input, shape index: {}]
  %s3 = inlined_call_operand.vmem [shape: f32[256,128], index: 3, kind: input, shape index: {}]
  %s4 = inlined_call_operand.vmem [shape: f32[256,128], index: 4, kind: output, shape index: {}]
  %s5 = sld [smem:[#allocation0]]
  $region26: #{resnet_forward.37} parent=0
    _
  %s7 = ssub.s32 1, %s5
  %s8 = scalar_select 0, %s7, %s5
  // Predicated region
  $region2: #{resnet_forward.37} parent=0 // pred_check
    _
  $region3: #{resnet_forward.37} parent=0 // pred_check_branch
    %10 = sbr.rel (0) target = $region5
  $region4: #{resnet_forward.37} parent=0 // pred_region
    _
  $region5: #{resnet_forward.37} parent=0 // pred_fallthru
    _
  // Predicated region
  $region6: #{resnet_forward.37} parent=0 // pred_check
    _
  $region7: #{resnet_forward.37} parent=0 // pred_check_branch
    %12 = sbr.rel (0) target = $region9
  $region8: #{resnet_forward.37} parent=0 // pred_region
    _
  $region9: #{resnet_forward.37} parent=0 // pred_fallthru
    _
  // Predicated region
  $region10: #{resnet_forward.37} parent=0 // pred_check
    _
  $region11: #{resnet_forward.37} parent=0 // pred_check_branch
    %14 = sbr.rel (0) target = $region13
  $region12: #{resnet_forward.37} parent=0 // pred_region
    _
  $region13: #{resnet_forward.37} parent=0 // pred_fallthru
    _
  // Predicated region
  $region14: #{resnet_forward.37} parent=0 // pred_check
    _
  $region15: #{resnet_forward.37} parent=0 // pred_check_branch
    %16 = sbr.rel (0) target = $region17
  $region16: #{resnet_forward.37} parent=0 // pred_region
    _
  $region17: #{resnet_forward.37} parent=0 // pred_fallthru
    _
  %v17 = vld [vmem:[%s0] sm:$0xff]
  %v18 = vld [vmem:[%s0 + $0x8] sm:$0xff]
  %v19 = vld [vmem:[%s0 + $0x10] sm:$0xff]
  %v20 = vld [vmem:[%s0 + $0x18] sm:$0xff]
  %v21 = vld [vmem:[%s0 + $0x20] sm:$0xff]
  %v22 = vld [vmem:[%s0 + $0x28] sm:$0xff]
  %v23 = vld [vmem:[%s0 + $0x30] sm:$0xff]
  %v24 = vld [vmem:[%s0 + $0x38] sm:$0xff]
  %v25 = vld [vmem:[%s0 + $0x40] sm:$0xff]
  %v26 = vld [vmem:[%s0 + $0x48] sm:$0xff]
  %v27 = vld [vmem:[%s0 + $0x50] sm:$0xff]
  %v28 = vld [vmem:[%s0 + $0x58] sm:$0xff]
  %v29 = vld [vmem:[%s0 + $0x60] sm:$0xff]
  %v30 = vld [vmem:[%s0 + $0x68] sm:$0xff]
  %v31 = vld [vmem:[%s0 + $0x70] sm:$0xff]
  %v32 = vld [vmem:[%s0 + $0x78] sm:$0xff]
  %v33 = vld [vmem:[%s0 + $0x80] sm:$0xff]
  %v34 = vld [vmem:[%s0 + $0x88] sm:$0xff]
  %v35 = vld [vmem:[%s0 + $0x90] sm:$0xff]
  %v36 = vld [vmem:[%s0 + $0x98] sm:$0xff]
  %v37 = vld [vmem:[%s0 + $0xa0] sm:$0xff]
  %v38 = vld [vmem:[%s0 + $0xa8] sm:$0xff]
  %v39 = vld [vmem:[%s0 + $0xb0] sm:$0xff]
  %v40 = vld [vmem:[%s0 + $0xb8] sm:$0xff]
  %v41 = vld [vmem:[%s0 + $0xc0] sm:$0xff]
  %v42 = vld [vmem:[%s0 + $0xc8] sm:$0xff]
  %v43 = vld [vmem:[%s0 + $0xd0] sm:$0xff]
  %v44 = vld [vmem:[%s0 + $0xd8] sm:$0xff]
  %v45 = vld [vmem:[%s0 + $0xe0] sm:$0xff]
  %v46 = vld [vmem:[%s0 + $0xe8] sm:$0xff]
  %v47 = vld [vmem:[%s0 + $0xf0] sm:$0xff]
  %v48 = vld [vmem:[%s0 + $0xf8] sm:$0xff]
  %v49 = vld [vmem:[%s1] sm:$0x1]
  %v51 = vlaneseq
  %v52 = vshrl.u32 %v51, 7
  %v53 = vsub.s32 0, %v52
  %v54 = vrot.slane %v49, %v53
  %v56 = vmul.f32 %v17, %v54
  %v57 = vmul.f32 %v18, %v54
  %v58 = vmul.f32 %v19, %v54
  %v59 = vmul.f32 %v20, %v54
  %v60 = vmul.f32 %v21, %v54
  %v61 = vmul.f32 %v22, %v54
  %v62 = vmul.f32 %v23, %v54
  %v63 = vmul.f32 %v24, %v54
  %v64 = vmul.f32 %v25, %v54
  %v65 = vmul.f32 %v26, %v54
  %v66 = vmul.f32 %v27, %v54
  %v67 = vmul.f32 %v28, %v54
  %v68 = vmul.f32 %v29, %v54
  %v69 = vmul.f32 %v30, %v54
  %v70 = vmul.f32 %v31, %v54
  %v71 = vmul.f32 %v32, %v54
  %v72 = vmul.f32 %v33, %v54
  %v73 = vmul.f32 %v34, %v54
  %v74 = vmul.f32 %v35, %v54
  %v75 = vmul.f32 %v36, %v54
  %v76 = vmul.f32 %v37, %v54
  %v77 = vmul.f32 %v38, %v54
  %v78 = vmul.f32 %v39, %v54
  %v79 = vmul.f32 %v40, %v54
  %v80 = vmul.f32 %v41, %v54
  %v81 = vmul.f32 %v42, %v54
  %v82 = vmul.f32 %v43, %v54
  %v83 = vmul.f32 %v44, %v54
  %v84 = vmul.f32 %v45, %v54
  %v85 = vmul.f32 %v46, %v54
  %v86 = vmul.f32 %v47, %v54
  %v87 = vmul.f32 %v48, %v54
  %v88 = vld [vmem:[%s2] sm:$0x1]
  %v90 = vlaneseq
  %v91 = vshrl.u32 %v90, 7
  %v92 = vsub.s32 0, %v91
  %v93 = vrot.slane %v88, %v92
  %v95 = vadd.f32 %v56, %v93
  %v96 = vadd.f32 %v57, %v93
  %v97 = vadd.f32 %v58, %v93
  %v98 = vadd.f32 %v59, %v93
  %v99 = vadd.f32 %v60, %v93
  %v100 = vadd.f32 %v61, %v93
  %v101 = vadd.f32 %v62, %v93
  %v102 = vadd.f32 %v63, %v93
  %v103 = vadd.f32 %v64, %v93
  %v104 = vadd.f32 %v65, %v93
  %v105 = vadd.f32 %v66, %v93
  %v106 = vadd.f32 %v67, %v93
  %v107 = vadd.f32 %v68, %v93
  %v108 = vadd.f32 %v69, %v93
  %v109 = vadd.f32 %v70, %v93
  %v110 = vadd.f32 %v71, %v93
  %v111 = vadd.f32 %v72, %v93
  %v112 = vadd.f32 %v73, %v93
  %v113 = vadd.f32 %v74, %v93
  %v114 = vadd.f32 %v75, %v93
  %v115 = vadd.f32 %v76, %v93
  %v116 = vadd.f32 %v77, %v93
  %v117 = vadd.f32 %v78, %v93
  %v118 = vadd.f32 %v79, %v93
  %v119 = vadd.f32 %v80, %v93
  %v120 = vadd.f32 %v81, %v93
  %v121 = vadd.f32 %v82, %v93
  %v122 = vadd.f32 %v83, %v93
  %v123 = vadd.f32 %v84, %v93
  %v124 = vadd.f32 %v85, %v93
  %v125 = vadd.f32 %v86, %v93
  %v126 = vadd.f32 %v87, %v93
  %v127 = vld [vmem:[%s3] sm:$0xff]
  %v128 = vld [vmem:[%s3 + $0x8] sm:$0xff]
  %v129 = vld [vmem:[%s3 + $0x10] sm:$0xff]
  %v130 = vld [vmem:[%s3 + $0x18] sm:$0xff]
  %v131 = vld [vmem:[%s3 + $0x20] sm:$0xff]
  %v132 = vld [vmem:[%s3 + $0x28] sm:$0xff]
  %v133 = vld [vmem:[%s3 + $0x30] sm:$0xff]
  %v134 = vld [vmem:[%s3 + $0x38] sm:$0xff]
  %v135 = vld [vmem:[%s3 + $0x40] sm:$0xff]
  %v136 = vld [vmem:[%s3 + $0x48] sm:$0xff]
  %v137 = vld [vmem:[%s3 + $0x50] sm:$0xff]
  %v138 = vld [vmem:[%s3 + $0x58] sm:$0xff]
  %v139 = vld [vmem:[%s3 + $0x60] sm:$0xff]
  %v140 = vld [vmem:[%s3 + $0x68] sm:$0xff]
  %v141 = vld [vmem:[%s3 + $0x70] sm:$0xff]
  %v142 = vld [vmem:[%s3 + $0x78] sm:$0xff]
  %v143 = vld [vmem:[%s3 + $0x80] sm:$0xff]
  %v144 = vld [vmem:[%s3 + $0x88] sm:$0xff]
  %v145 = vld [vmem:[%s3 + $0x90] sm:$0xff]
  %v146 = vld [vmem:[%s3 + $0x98] sm:$0xff]
  %v147 = vld [vmem:[%s3 + $0xa0] sm:$0xff]
  %v148 = vld [vmem:[%s3 + $0xa8] sm:$0xff]
  %v149 = vld [vmem:[%s3 + $0xb0] sm:$0xff]
  %v150 = vld [vmem:[%s3 + $0xb8] sm:$0xff]
  %v151 = vld [vmem:[%s3 + $0xc0] sm:$0xff]
  %v152 = vld [vmem:[%s3 + $0xc8] sm:$0xff]
  %v153 = vld [vmem:[%s3 + $0xd0] sm:$0xff]
  %v154 = vld [vmem:[%s3 + $0xd8] sm:$0xff]
  %v155 = vld [vmem:[%s3 + $0xe0] sm:$0xff]
  %v156 = vld [vmem:[%s3 + $0xe8] sm:$0xff]
  %v157 = vld [vmem:[%s3 + $0xf0] sm:$0xff]
  %v158 = vld [vmem:[%s3 + $0xf8] sm:$0xff]
  %v159 = vadd.f32 %v95, %v127
  %v160 = vadd.f32 %v96, %v128
  %v161 = vadd.f32 %v97, %v129
  %v162 = vadd.f32 %v98, %v130
  %v163 = vadd.f32 %v99, %v131
  %v164 = vadd.f32 %v100, %v132
  %v165 = vadd.f32 %v101, %v133
  %v166 = vadd.f32 %v102, %v134
  %v167 = vadd.f32 %v103, %v135
  %v168 = vadd.f32 %v104, %v136
  %v169 = vadd.f32 %v105, %v137
  %v170 = vadd.f32 %v106, %v138
  %v171 = vadd.f32 %v107, %v139
  %v172 = vadd.f32 %v108, %v140
  %v173 = vadd.f32 %v109, %v141
  %v174 = vadd.f32 %v110, %v142
  %v175 = vadd.f32 %v111, %v143
  %v176 = vadd.f32 %v112, %v144
  %v177 = vadd.f32 %v113, %v145
  %v178 = vadd.f32 %v114, %v146
  %v179 = vadd.f32 %v115, %v147
  %v180 = vadd.f32 %v116, %v148
  %v181 = vadd.f32 %v117, %v149
  %v182 = vadd.f32 %v118, %v150
  %v183 = vadd.f32 %v119, %v151
  %v184 = vadd.f32 %v120, %v152
  %v185 = vadd.f32 %v121, %v153
  %v186 = vadd.f32 %v122, %v154
  %v187 = vadd.f32 %v123, %v155
  %v188 = vadd.f32 %v124, %v156
  %v189 = vadd.f32 %v125, %v157
  %v190 = vadd.f32 %v126, %v158
  %v191 = vmax.f32 %v159, 0.0
  %v192 = vmax.f32 %v160, 0.0
  %v193 = vmax.f32 %v161, 0.0
  %v194 = vmax.f32 %v162, 0.0
  %v195 = vmax.f32 %v163, 0.0
  %v196 = vmax.f32 %v164, 0.0
  %v197 = vmax.f32 %v165, 0.0
  %v198 = vmax.f32 %v166, 0.0
  %v199 = vmax.f32 %v167, 0.0
  %v200 = vmax.f32 %v168, 0.0
  %v201 = vmax.f32 %v169, 0.0
  %v202 = vmax.f32 %v170, 0.0
  %v203 = vmax.f32 %v171, 0.0
  %v204 = vmax.f32 %v172, 0.0
  %v205 = vmax.f32 %v173, 0.0
  %v206 = vmax.f32 %v174, 0.0
  %v207 = vmax.f32 %v175, 0.0
  %v208 = vmax.f32 %v176, 0.0
  %v209 = vmax.f32 %v177, 0.0
  %v210 = vmax.f32 %v178, 0.0
  %v211 = vmax.f32 %v179, 0.0
  %v212 = vmax.f32 %v180, 0.0
  %v213 = vmax.f32 %v181, 0.0
  %v214 = vmax.f32 %v182, 0.0
  %v215 = vmax.f32 %v183, 0.0
  %v216 = vmax.f32 %v184, 0.0
  %v217 = vmax.f32 %v185, 0.0
  %v218 = vmax.f32 %v186, 0.0
  %v219 = vmax.f32 %v187, 0.0
  %v220 = vmax.f32 %v188, 0.0
  %v221 = vmax.f32 %v189, 0.0
  %v222 = vmax.f32 %v190, 0.0
  %223 = vst [vmem:[%s4] sm:$0xff] %v191
  %224 = vst [vmem:[%s4 + $0x8] sm:$0xff] %v192
  %225 = vst [vmem:[%s4 + $0x10] sm:$0xff] %v193
  %226 = vst [vmem:[%s4 + $0x18] sm:$0xff] %v194
  %227 = vst [vmem:[%s4 + $0x20] sm:$0xff] %v195
  %228 = vst [vmem:[%s4 + $0x28] sm:$0xff] %v196
  %229 = vst [vmem:[%s4 + $0x30] sm:$0xff] %v197
  %230 = vst [vmem:[%s4 + $0x38] sm:$0xff] %v198
  %231 = vst [vmem:[%s4 + $0x40] sm:$0xff] %v199
  %232 = vst [vmem:[%s4 + $0x48] sm:$0xff] %v200
  %233 = vst [vmem:[%s4 + $0x50] sm:$0xff] %v201
  %234 = vst [vmem:[%s4 + $0x58] sm:$0xff] %v202
  %235 = vst [vmem:[%s4 + $0x60] sm:$0xff] %v203
  %236 = vst [vmem:[%s4 + $0x68] sm:$0xff] %v204
  %237 = vst [vmem:[%s4 + $0x70] sm:$0xff] %v205
  %238 = vst [vmem:[%s4 + $0x78] sm:$0xff] %v206
  %239 = vst [vmem:[%s4 + $0x80] sm:$0xff] %v207
  %240 = vst [vmem:[%s4 + $0x88] sm:$0xff] %v208
  %241 = vst [vmem:[%s4 + $0x90] sm:$0xff] %v209
  %242 = vst [vmem:[%s4 + $0x98] sm:$0xff] %v210
  %243 = vst [vmem:[%s4 + $0xa0] sm:$0xff] %v211
  %244 = vst [vmem:[%s4 + $0xa8] sm:$0xff] %v212
  %245 = vst [vmem:[%s4 + $0xb0] sm:$0xff] %v213
  %246 = vst [vmem:[%s4 + $0xb8] sm:$0xff] %v214
  %247 = vst [vmem:[%s4 + $0xc0] sm:$0xff] %v215
  %248 = vst [vmem:[%s4 + $0xc8] sm:$0xff] %v216
  %249 = vst [vmem:[%s4 + $0xd0] sm:$0xff] %v217
  %250 = vst [vmem:[%s4 + $0xd8] sm:$0xff] %v218
  %251 = vst [vmem:[%s4 + $0xe0] sm:$0xff] %v219
  %252 = vst [vmem:[%s4 + $0xe8] sm:$0xff] %v220
  %253 = vst [vmem:[%s4 + $0xf0] sm:$0xff] %v221
  %254 = vst [vmem:[%s4 + $0xf8] sm:$0xff] %v222
  // Predicated region
  $region18: #{resnet_forward.37} parent=0 // pred_check
    _
  $region19: #{resnet_forward.37} parent=0 // pred_check_branch
    %256 = sbr.rel (0) target = $region21
  $region20: #{resnet_forward.37} parent=0 // pred_region
    _
  $region21: #{resnet_forward.37} parent=0 // pred_fallthru
    _
  // Predicated region
  $region22: #{resnet_forward.37} parent=0 // pred_check
    _
  $region23: #{resnet_forward.37} parent=0 // pred_check_branch
    %258 = sbr.rel (0) target = $region25
  $region24: #{resnet_forward.37} parent=0 // pred_region
    _
  $region25: #{resnet_forward.37} parent=0 // pred_fallthru
    _

// kernel: resnet_forward.45
$region0: #{resnet_forward.45}
  #allocation0 [shape = 'u32[]', space=smem, size = 0x4, offset = 0x4, fixed_abs, tag = 'smem constant byte address 0x4 - core index']
  #allocation1 [shape = 'u32[144,128]{1,0:T(1,128)}', space=vmem, size = 0x12000, scoped, tag = 'internal scratch']
  %s0 = inlined_call_operand.vmem [shape: bf16[512,256], index: 0, kind: input, shape index: {}]
  %s1 = inlined_call_operand.vmem [shape: bf16[256,128], index: 1, kind: input, shape index: {}]
  %s2 = inlined_call_operand.vmem [shape: f32[512,128], index: 2, kind: output, shape index: {}]
  %s3 = sld [smem:[#allocation0]]
  $region41: #{resnet_forward.45} parent=0
    _
  %s5 = ssub.s32 1, %s3
  %s6 = scalar_select 0, %s5, %s3
  loop: start=0, step=1, limit=4
  $region2: #{resnet_forward.45} parent=0 // loop_pre_header
    _
  $region3: #{resnet_forward.45} parent=0 // loop_header
    %s8 = sphi 0, %s12
    %p9 = scmp.ge.s32.totalorder %s8, 4
    %s18 = sphi 0, %s20
    %s21 = sphi 0, %s18
    %s22 = sphi 0, %s21
    %s38 = sphi 0, %s22
    %s42 = sphi 0, %s42
    %s44 = sphi 0, %s42
    %s45 = sphi 0, %s44
    %s59 = sphi 0, %s45
    %s65 = sphi 0, %s67
    %s68 = sphi 0, %s65
    %s69 = sphi 0, %s68
    %s85 = sphi 0, %s69
  $region4: #{resnet_forward.45} parent=0 // loop_header_branch
    %11 = sbr.rel (%p9) target = $region8
  $region5: #{resnet_forward.45} parent=0 // loop_body
    %s13 = ssub.s32 %s8, 1
    %s14 = ssub.s32 %s8, 2
    %s15 = sadd.s32 %s8, 1
    %s16 = ssub.s32 %s8, %s15
    %p17 = scmp.eq.s32.totalorder %s16, 0
    %s19 = sadd.s32 %s18, 1
    %s20 = scalar_select %p17, %s18, %s19
    %p23 = pneg %p17
    %p24 = scmp.eq.s32.totalorder %s8, 1
    %p25 = por %p23, %p24
    %p26 = scmp.ne.s32.totalorder %s18, %s21
    %p27 = scmp.eq.s32.totalorder %s8, 0
    %p28 = por %p26, %p27
    %p29 = scmp.ne.s32.totalorder %s18, %s21
    %p30 = scmp.eq.s32.totalorder %s13, 1
    %p31 = por %p29, %p30
    %p32 = scmp.ne.s32.totalorder %s21, %s22
    %p33 = scmp.eq.s32.totalorder %s13, 0
    %p34 = por %p32, %p33
    %p35 = scmp.ne.s32.totalorder %s21, %s22
    %p36 = scmp.eq.s32.totalorder %s14, 1
    %p37 = por %p35, %p36
    %p39 = scmp.ne.s32.totalorder %s22, %s38
    %p40 = scmp.eq.s32.totalorder %s14, 0
    %p41 = por %p39, %p40
    %s43 = sadd.s32 %s42, 1
    %p46 = scmp.eq.s32.totalorder %s8, 1
    %p47 = scmp.ne.s32.totalorder %s42, %s44
    %p48 = scmp.eq.s32.totalorder %s8, 0
    %p49 = por %p47, %p48
    %p50 = scmp.ne.s32.totalorder %s42, %s44
    %p51 = scmp.eq.s32.totalorder %s13, 1
    %p52 = por %p50, %p51
    %p53 = scmp.ne.s32.totalorder %s44, %s45
    %p54 = scmp.eq.s32.totalorder %s13, 0
    %p55 = por %p53, %p54
    %p56 = scmp.ne.s32.totalorder %s44, %s45
    %p57 = scmp.eq.s32.totalorder %s14, 1
    %p58 = por %p56, %p57
    %p60 = scmp.ne.s32.totalorder %s45, %s59
    %p61 = scmp.eq.s32.totalorder %s14, 0
    %p62 = por %p60, %p61
    %s63 = ssub.s32 %s8, %s15
    %p64 = scmp.eq.s32.totalorder %s63, 0
    %s66 = sadd.s32 %s65, 1
    %s67 = scalar_select %p64, %s65, %s66
    %p70 = pneg %p64
    %p71 = scmp.eq.s32.totalorder %s8, 1
    %p72 = por %p70, %p71
    %p73 = scmp.ne.s32.totalorder %s65, %s68
    %p74 = scmp.eq.s32.totalorder %s8, 0
    %p75 = por %p73, %p74
    %p76 = scmp.ne.s32.totalorder %s65, %s68
    %p77 = scmp.eq.s32.totalorder %s13, 1
    %p78 = por %p76, %p77
    %p79 = scmp.ne.s32.totalorder %s68, %s69
    %p80 = scmp.eq.s32.totalorder %s13, 0
    %p81 = por %p79, %p80
    %p82 = scmp.ne.s32.totalorder %s68, %s69
    %p83 = scmp.eq.s32.totalorder %s14, 1
    %p84 = por %p82, %p83
    %p86 = scmp.ne.s32.totalorder %s69, %s85
    %p87 = scmp.eq.s32.totalorder %s14, 0
    %p88 = por %p86, %p87
    %p89 = scmp.le.s32.totalorder 1, %s8
    %p90 = scmp.lt.s32.totalorder %s8, 3
    %p91 = pnand %p89, %p90
    %p92 = pneg %p91
    // Predicated region
    $region9: #{resnet_forward.45} parent=5 // pred_check
      _
    $region10: #{resnet_forward.45} parent=5 // pred_check_branch
      %94 = sbr.rel (%p91) target = $region12
    $region11: #{resnet_forward.45} parent=5 // pred_region
      %s95 = ssub.s32 %s8, 1
      // Predicated region
      $region13: #{resnet_forward.45} parent=11 // pred_check
        %p96 = pneg %p55
      $region14: #{resnet_forward.45} parent=11 // pred_check_branch
        %98 = sbr.rel (%p96) target = $region16
      $region15: #{resnet_forward.45} parent=11 // pred_region
        _
      $region16: #{resnet_forward.45} parent=11 // pred_fallthru
        _
    $region12: #{resnet_forward.45} parent=5 // pred_fallthru
      _
    %p99 = scmp.lt.s32.totalorder %s8, 2
    // Predicated region
    $region17: #{resnet_forward.45} parent=5 // pred_check
      %p100 = pneg %p99
    $region18: #{resnet_forward.45} parent=5 // pred_check_branch
      %102 = sbr.rel (%p100) target = $region20
    $region19: #{resnet_forward.45} parent=5 // pred_region
      // Predicated region
      $region21: #{resnet_forward.45} parent=19 // pred_check
        %p103 = pneg %p28
      $region22: #{resnet_forward.45} parent=19 // pred_check_branch
        %105 = sbr.rel (%p103) target = $region24
      $region23: #{resnet_forward.45} parent=19 // pred_region
        %s106 = smul.u32 32, %s8
        %p107 = scmp.lt.s32.totalorder %s106, 63
        %s108 = scalar_select %p107, %s106, 63
        %s109 = smul.addr %s108, 2
        %s110 = smul.addr %s109, 4
        %s111 = scalar_lea.vmem %s0, %s110
        %s112 = smul.u32 32, %s8
      $region24: #{resnet_forward.45} parent=19 // pred_fallthru
        _
    $region20: #{resnet_forward.45} parent=5 // pred_fallthru
      _
    %p113 = scmp.le.s32.totalorder 1, %s8
    %p114 = scmp.lt.s32.totalorder %s8, 3
    %p115 = pnand %p113, %p114
    %p116 = pneg %p115
    // Predicated region
    $region25: #{resnet_forward.45} parent=5 // pred_check
      _
    $region26: #{resnet_forward.45} parent=5 // pred_check_branch
      %118 = sbr.rel (%p115) target = $region28
    $region27: #{resnet_forward.45} parent=5 // pred_region
      %s119 = ssub.s32 %s8, 1
      %s120 = smul.u32 32, %s13
      %p121 = scmp.lt.s32.totalorder %s120, 63
      %s122 = scalar_select %p121, %s120, 63
      %s123 = smul.addr %s122, 2
      %s124 = smul.addr %s123, 4
      %s125 = scalar_lea.vmem %s0, %s124
      %p126 = pneg %p34
      %p127 = pneg %p31
      %p128 = pneg %p55
      %p129 = pneg %p52
      %p130 = pneg %p81
      %p131 = pneg %p78
      %s132 = smul.u32 32, %s13
      %p133 = scmp.lt.s32.totalorder %s132, 63
      %s134 = scalar_select %p133, %s132, 63
      %s135 = smul.addr %s134, 8
      %s136 = scalar_lea.vmem %s2, %s135
      %s137 = smul.u32 32, %s13
      %p138 = scmp.lt.s32.totalorder %s137, 63
      %s139 = scalar_select %p138, %s137, 63
      %s140 = smul.addr %s139, 2
      %s141 = smul.addr %s140, 4
      %s142 = scalar_lea.vmem %s0, %s141
      %s143 = smul.u32 32, %s13
      %s144 = smul.u32 32, %s13
      %p145 = scmp.lt.s32.totalorder %s144, 63
      %s146 = scalar_select %p145, %s144, 63
      %s147 = smul.addr %s146, 8
      %s148 = scalar_lea.vmem %s2, %s147
      %s149 = smul.u32 32, %s13
      %v151 = vld [vmem:[%s142] sm:$0xff]
      %v152 = vld [vmem:[%s142 + $0x8] sm:$0xff]
      %v153 = vld [vmem:[%s142 + $0x10] sm:$0xff]
      %v154 = vld [vmem:[%s142 + $0x18] sm:$0xff]
      %v155 = vld [vmem:[%s142 + $0x20] sm:$0xff]
      %v156 = vld [vmem:[%s142 + $0x28] sm:$0xff]
      %v157 = vld [vmem:[%s142 + $0x30] sm:$0xff]
      %v158 = vld [vmem:[%s142 + $0x38] sm:$0xff]
      %v159 = vld [vmem:[%s142 + $0x40] sm:$0xff]
      %v160 = vld [vmem:[%s142 + $0x48] sm:$0xff]
      %v161 = vld [vmem:[%s142 + $0x50] sm:$0xff]
      %v162 = vld [vmem:[%s142 + $0x58] sm:$0xff]
      %v163 = vld [vmem:[%s142 + $0x60] sm:$0xff]
      %v164 = vld [vmem:[%s142 + $0x68] sm:$0xff]
      %v165 = vld [vmem:[%s142 + $0x70] sm:$0xff]
      %v166 = vld [vmem:[%s142 + $0x78] sm:$0xff]
      %v167 = vld [vmem:[%s142 + $0x80] sm:$0xff]
      %v168 = vld [vmem:[%s142 + $0x88] sm:$0xff]
      %v169 = vld [vmem:[%s142 + $0x90] sm:$0xff]
      %v170 = vld [vmem:[%s142 + $0x98] sm:$0xff]
      %v171 = vld [vmem:[%s142 + $0xa0] sm:$0xff]
      %v172 = vld [vmem:[%s142 + $0xa8] sm:$0xff]
      %v173 = vld [vmem:[%s142 + $0xb0] sm:$0xff]
      %v174 = vld [vmem:[%s142 + $0xb8] sm:$0xff]
      %v175 = vld [vmem:[%s142 + $0xc0] sm:$0xff]
      %v176 = vld [vmem:[%s142 + $0xc8] sm:$0xff]
      %v177 = vld [vmem:[%s142 + $0xd0] sm:$0xff]
      %v178 = vld [vmem:[%s142 + $0xd8] sm:$0xff]
      %v179 = vld [vmem:[%s142 + $0xe0] sm:$0xff]
      %v180 = vld [vmem:[%s142 + $0xe8] sm:$0xff]
      %v181 = vld [vmem:[%s142 + $0xf0] sm:$0xff]
      %v182 = vld [vmem:[%s142 + $0xf8] sm:$0xff]
      %v183 = vld [vmem:[%s1] sm:$0xf]
      %v184 = vld [vmem:[%s1 + $0x4] sm:$0xf]
      %v185 = vld [vmem:[%s1 + $0x8] sm:$0xf]
      %v186 = vld [vmem:[%s1 + $0xc] sm:$0xf]
      %v187 = vld [vmem:[%s1 + $0x10] sm:$0xf]
      %v188 = vld [vmem:[%s1 + $0x14] sm:$0xf]
      %v189 = vld [vmem:[%s1 + $0x18] sm:$0xf]
      %v190 = vld [vmem:[%s1 + $0x1c] sm:$0xf]
      %v191 = vld [vmem:[%s1 + $0x20] sm:$0xf]
      %v192 = vld [vmem:[%s1 + $0x24] sm:$0xf]
      %v193 = vld [vmem:[%s1 + $0x28] sm:$0xf]
      %v194 = vld [vmem:[%s1 + $0x2c] sm:$0xf]
      %v195 = vld [vmem:[%s1 + $0x30] sm:$0xf]
      %v196 = vld [vmem:[%s1 + $0x34] sm:$0xf]
      %v197 = vld [vmem:[%s1 + $0x38] sm:$0xf]
      %v198 = vld [vmem:[%s1 + $0x3c] sm:$0xf]
      %v199 = vld [vmem:[%s1 + $0x40] sm:$0xf]
      %v200 = vld [vmem:[%s1 + $0x44] sm:$0xf]
      %v201 = vld [vmem:[%s1 + $0x48] sm:$0xf]
      %v202 = vld [vmem:[%s1 + $0x4c] sm:$0xf]
      %v203 = vld [vmem:[%s1 + $0x50] sm:$0xf]
      %v204 = vld [vmem:[%s1 + $0x54] sm:$0xf]
      %v205 = vld [vmem:[%s1 + $0x58] sm:$0xf]
      %v206 = vld [vmem:[%s1 + $0x5c] sm:$0xf]
      %v207 = vld [vmem:[%s1 + $0x60] sm:$0xf]
      %v208 = vld [vmem:[%s1 + $0x64] sm:$0xf]
      %v209 = vld [vmem:[%s1 + $0x68] sm:$0xf]
      %v210 = vld [vmem:[%s1 + $0x6c] sm:$0xf]
      %v211 = vld [vmem:[%s1 + $0x70] sm:$0xf]
      %v212 = vld [vmem:[%s1 + $0x74] sm:$0xf]
      %v213 = vld [vmem:[%s1 + $0x78] sm:$0xf]
      %v214 = vld [vmem:[%s1 + $0x7c] sm:$0xf]
      %v247 = vunpack.c.l.b16 %v151
      %v248 = vunpack.c.h.b16 %v151
      %v249 = vunpack.c.l.b16 %v152
      %v250 = vunpack.c.h.b16 %v152
      %v251 = vunpack.c.l.b16 %v153
      %v252 = vunpack.c.h.b16 %v153
      %v253 = vunpack.c.l.b16 %v154
      %v254 = vunpack.c.h.b16 %v154
      %v255 = vunpack.c.l.b16 %v155
      %v256 = vunpack.c.h.b16 %v155
      %v257 = vunpack.c.l.b16 %v156
      %v258 = vunpack.c.h.b16 %v156
      %v259 = vunpack.c.l.b16 %v157
      %v260 = vunpack.c.h.b16 %v157
      %v261 = vunpack.c.l.b16 %v158
      %v262 = vunpack.c.h.b16 %v158
      %v263 = vunpack.c.l.b16 %v159
      %v264 = vunpack.c.h.b16 %v159
      %v265 = vunpack.c.l.b16 %v160
      %v266 = vunpack.c.h.b16 %v160
      %v267 = vunpack.c.l.b16 %v161
      %v268 = vunpack.c.h.b16 %v161
      %v269 = vunpack.c.l.b16 %v162
      %v270 = vunpack.c.h.b16 %v162
      %v271 = vunpack.c.l.b16 %v163
      %v272 = vunpack.c.h.b16 %v163
      %v273 = vunpack.c.l.b16 %v164
      %v274 = vunpack.c.h.b16 %v164
      %v275 = vunpack.c.l.b16 %v165
      %v276 = vunpack.c.h.b16 %v165
      %v277 = vunpack.c.l.b16 %v166
      %v278 = vunpack.c.h.b16 %v166
      %v279 = vunpack.c.l.b16 %v167
      %v280 = vunpack.c.h.b16 %v167
      %v281 = vunpack.c.l.b16 %v168
      %v282 = vunpack.c.h.b16 %v168
      %v283 = vunpack.c.l.b16 %v169
      %v284 = vunpack.c.h.b16 %v169
      %v285 = vunpack.c.l.b16 %v170
      %v286 = vunpack.c.h.b16 %v170
      %v287 = vunpack.c.l.b16 %v171
      %v288 = vunpack.c.h.b16 %v171
      %v289 = vunpack.c.l.b16 %v172
      %v290 = vunpack.c.h.b16 %v172
      %v291 = vunpack.c.l.b16 %v173
      %v292 = vunpack.c.h.b16 %v173
      %v293 = vunpack.c.l.b16 %v174
      %v294 = vunpack.c.h.b16 %v174
      %v295 = vunpack.c.l.b16 %v175
      %v296 = vunpack.c.h.b16 %v175
      %v297 = vunpack.c.l.b16 %v176
      %v298 = vunpack.c.h.b16 %v176
      %v299 = vunpack.c.l.b16 %v177
      %v300 = vunpack.c.h.b16 %v177
      %v301 = vunpack.c.l.b16 %v178
      %v302 = vunpack.c.h.b16 %v178
      %v303 = vunpack.c.l.b16 %v179
      %v304 = vunpack.c.h.b16 %v179
      %v305 = vunpack.c.l.b16 %v180
      %v306 = vunpack.c.h.b16 %v180
      %v307 = vunpack.c.l.b16 %v181
      %v308 = vunpack.c.h.b16 %v181
      %v309 = vunpack.c.l.b16 %v182
      %v310 = vunpack.c.h.b16 %v182
      %v311 = vpack.c.b16 %v249, %v247
      %v312 = vpack.c.b16 %v250, %v248
      %v313 = vpack.c.b16 %v253, %v251
      %v314 = vpack.c.b16 %v254, %v252
      %v315 = vpack.c.b16 %v257, %v255
      %v316 = vpack.c.b16 %v258, %v256
      %v317 = vpack.c.b16 %v261, %v259
      %v318 = vpack.c.b16 %v262, %v260
      %v319 = vpack.c.b16 %v265, %v263
      %v320 = vpack.c.b16 %v266, %v264
      %v321 = vpack.c.b16 %v269, %v267
      %v322 = vpack.c.b16 %v270, %v268
      %v323 = vpack.c.b16 %v273, %v271
      %v324 = vpack.c.b16 %v274, %v272
      %v325 = vpack.c.b16 %v277, %v275
      %v326 = vpack.c.b16 %v278, %v276
      %v327 = vpack.c.b16 %v281, %v279
      %v328 = vpack.c.b16 %v282, %v280
      %v329 = vpack.c.b16 %v285, %v283
      %v330 = vpack.c.b16 %v286, %v284
      %v331 = vpack.c.b16 %v289, %v287
      %v332 = vpack.c.b16 %v290, %v288
      %v333 = vpack.c.b16 %v293, %v291
      %v334 = vpack.c.b16 %v294, %v292
      %v335 = vpack.c.b16 %v297, %v295
      %v336 = vpack.c.b16 %v298, %v296
      %v337 = vpack.c.b16 %v301, %v299
      %v338 = vpack.c.b16 %v302, %v300
      %v339 = vpack.c.b16 %v305, %v303
      %v340 = vpack.c.b16 %v306, %v304
      %v341 = vpack.c.b16 %v309, %v307
      %v342 = vpack.c.b16 %v310, %v308
      %v407 = vunpack.c.l.b16 %v183
      %v408 = vunpack.c.l.b16 %v184
      %v409 = vunpack.c.l.b16 %v185
      %v410 = vunpack.c.l.b16 %v186
      %v411 = vunpack.c.l.b16 %v187
      %v412 = vunpack.c.l.b16 %v188
      %v413 = vunpack.c.l.b16 %v189
      %v414 = vunpack.c.l.b16 %v190
      %v415 = vunpack.c.l.b16 %v191
      %v416 = vunpack.c.l.b16 %v192
      %v417 = vunpack.c.l.b16 %v193
      %v418 = vunpack.c.l.b16 %v194
      %v419 = vunpack.c.l.b16 %v195
      %v420 = vunpack.c.l.b16 %v196
      %v421 = vunpack.c.l.b16 %v197
      %v422 = vunpack.c.l.b16 %v198
      %v423 = vunpack.c.l.b16 %v199
      %v424 = vunpack.c.l.b16 %v200
      %v425 = vunpack.c.l.b16 %v201
      %v426 = vunpack.c.l.b16 %v202
      %v427 = vunpack.c.l.b16 %v203
      %v428 = vunpack.c.l.b16 %v204
      %v429 = vunpack.c.l.b16 %v205
      %v430 = vunpack.c.l.b16 %v206
      %v431 = vunpack.c.l.b16 %v207
      %v432 = vunpack.c.l.b16 %v208
      %v433 = vunpack.c.l.b16 %v209
      %v434 = vunpack.c.l.b16 %v210
      %v435 = vunpack.c.l.b16 %v211
      %v436 = vunpack.c.l.b16 %v212
      %v437 = vunpack.c.l.b16 %v213
      %v438 = vunpack.c.l.b16 %v214
      %v439 = vpack.c.b16 %v408, %v407
      %v440 = vpack.c.b16 %v410, %v409
      %v441 = vpack.c.b16 %v412, %v411
      %v442 = vpack.c.b16 %v414, %v413
      %v443 = vpack.c.b16 %v416, %v415
      %v444 = vpack.c.b16 %v418, %v417
      %v445 = vpack.c.b16 %v420, %v419
      %v446 = vpack.c.b16 %v422, %v421
      %v447 = vpack.c.b16 %v424, %v423
      %v448 = vpack.c.b16 %v426, %v425
      %v449 = vpack.c.b16 %v428, %v427
      %v450 = vpack.c.b16 %v430, %v429
      %v451 = vpack.c.b16 %v432, %v431
      %v452 = vpack.c.b16 %v434, %v433
      %v453 = vpack.c.b16 %v436, %v435
      %v454 = vpack.c.b16 %v438, %v437
      %471 = vmatprep.subr.bf16.mxu0 0
      %472 = vmatpush1.bf16.msra.mxu0 %v446
      %473 = vmatprep.subr.bf16.mxu0 0
      %474 = vmatpush1.bf16.msra.mxu0 %v445
      %475 = vmatprep.subr.bf16.mxu0 0
      %476 = vmatpush1.bf16.msra.mxu0 %v444
      %477 = vmatprep.subr.bf16.mxu0 0
      %478 = vmatpush1.bf16.msra.mxu0 %v443
      %479 = vmatprep.subr.bf16.mxu0 0
      %480 = vmatpush1.bf16.msra.mxu0 %v442
      %481 = vmatprep.subr.bf16.mxu0 0
      %482 = vmatpush1.bf16.msra.mxu0 %v441
      %483 = vmatprep.subr.bf16.mxu0 0
      %484 = vmatpush1.bf16.msra.mxu0 %v440
      %485 = vmatprep.subr.bf16.mxu0 0
      %486 = vmatpush1.bf16.msra.mxu0 %v439
      %487 = vmatprep.subr.bf16.mxu0 0
      %488 = vmatpush2.bf16.msra.mxu0 %v454
      %489 = vmatprep.subr.bf16.mxu0 0
      %490 = vmatpush2.bf16.msra.mxu0 %v453
      %491 = vmatprep.subr.bf16.mxu0 0
      %492 = vmatpush2.bf16.msra.mxu0 %v452
      %493 = vmatprep.subr.bf16.mxu0 0
      %494 = vmatpush2.bf16.msra.mxu0 %v451
      %495 = vmatprep.subr.bf16.mxu0 0
      %496 = vmatpush2.bf16.msra.mxu0 %v450
      %497 = vmatprep.subr.bf16.mxu0 0
      %498 = vmatpush2.bf16.msra.mxu0 %v449
      %499 = vmatprep.subr.bf16.mxu0 0
      %500 = vmatpush2.bf16.msra.mxu0 %v448
      %501 = vmatprep.subr.bf16.mxu0 0
      %502 = vmatpush2.bf16.msra.mxu0 %v447
      %503 = vmatprep.mubr.bf16.mxu0 %v312
      %504 = vmatmul.mubr.bf16.gmra.mxu0 %v311
      %v505 = vpop.f32.mrf.mxu0
      %v506 = vadd.f32 0.0, %v505
      %v507 = vpop.f32.mrf.mxu0
      %v508 = vpop.f32.mrf.mxu0
      %v509 = vadd.f32 0.0, %v508
      %v510 = vpop.f32.mrf.mxu0
      %511 = vmatprep.mubr.bf16.mxu0 %v314
      %512 = vmatmul.mubr.bf16.gmra.mxu0 %v313
      %v513 = vpop.f32.mrf.mxu0
      %v514 = vadd.f32 0.0, %v513
      %v515 = vpop.f32.mrf.mxu0
      %v516 = vpop.f32.mrf.mxu0
      %v517 = vadd.f32 0.0, %v516
      %v518 = vpop.f32.mrf.mxu0
      %519 = vmatprep.mubr.bf16.mxu0 %v316
      %520 = vmatmul.mubr.bf16.gmra.mxu0 %v315
      %v521 = vpop.f32.mrf.mxu0
      %v522 = vadd.f32 0.0, %v521
      %v523 = vpop.f32.mrf.mxu0
      %v524 = vpop.f32.mrf.mxu0
      %v525 = vadd.f32 0.0, %v524
      %v526 = vpop.f32.mrf.mxu0
      %527 = vmatprep.mubr.bf16.mxu0 %v318
      %528 = vmatmul.mubr.bf16.gmra.mxu0 %v317
      %v529 = vpop.f32.mrf.mxu0
      %v530 = vadd.f32 0.0, %v529
      %v531 = vpop.f32.mrf.mxu0
      %v532 = vpop.f32.mrf.mxu0
      %v533 = vadd.f32 0.0, %v532
      %v534 = vpop.f32.mrf.mxu0
      %535 = vmatprep.mubr.bf16.mxu0 %v320
      %536 = vmatmul.mubr.bf16.gmra.mxu0 %v319
      %v537 = vpop.f32.mrf.mxu0
      %v538 = vadd.f32 0.0, %v537
      %v539 = vpop.f32.mrf.mxu0
      %v540 = vpop.f32.mrf.mxu0
      %v541 = vadd.f32 0.0, %v540
      %v542 = vpop.f32.mrf.mxu0
      %543 = vmatprep.mubr.bf16.mxu0 %v322
      %544 = vmatmul.mubr.bf16.gmra.mxu0 %v321
      %v545 = vpop.f32.mrf.mxu0
      %v546 = vadd.f32 0.0, %v545
      %v547 = vpop.f32.mrf.mxu0
      %v548 = vpop.f32.mrf.mxu0
      %v549 = vadd.f32 0.0, %v548
      %v550 = vpop.f32.mrf.mxu0
      %551 = vmatprep.mubr.bf16.mxu0 %v324
      %552 = vmatmul.mubr.bf16.gmra.mxu0 %v323
      %v553 = vpop.f32.mrf.mxu0
      %v554 = vadd.f32 0.0, %v553
      %v555 = vpop.f32.mrf.mxu0
      %v556 = vpop.f32.mrf.mxu0
      %v557 = vadd.f32 0.0, %v556
      %v558 = vpop.f32.mrf.mxu0
      %559 = vmatprep.mubr.bf16.mxu0 %v326
      %560 = vmatmul.mubr.bf16.gmra.mxu0 %v325
      %v561 = vpop.f32.mrf.mxu0
      %v562 = vadd.f32 0.0, %v561
      %v563 = vpop.f32.mrf.mxu0
      %v564 = vpop.f32.mrf.mxu0
      %v565 = vadd.f32 0.0, %v564
      %v566 = vpop.f32.mrf.mxu0
      %567 = vmatprep.mubr.bf16.mxu0 %v328
      %568 = vmatmul.mubr.bf16.gmra.mxu0 %v327
      %v569 = vpop.f32.mrf.mxu0
      %v570 = vadd.f32 0.0, %v569
      %v571 = vpop.f32.mrf.mxu0
      %v572 = vpop.f32.mrf.mxu0
      %v573 = vadd.f32 0.0, %v572
      %v574 = vpop.f32.mrf.mxu0
      %575 = vmatprep.mubr.bf16.mxu0 %v330
      %576 = vmatmul.mubr.bf16.gmra.mxu0 %v329
      %v577 = vpop.f32.mrf.mxu0
      %v578 = vadd.f32 0.0, %v577
      %v579 = vpop.f32.mrf.mxu0
      %v580 = vpop.f32.mrf.mxu0
      %v581 = vadd.f32 0.0, %v580
      %v582 = vpop.f32.mrf.mxu0
      %583 = vmatprep.mubr.bf16.mxu0 %v332
      %584 = vmatmul.mubr.bf16.gmra.mxu0 %v331
      %v585 = vpop.f32.mrf.mxu0
      %v586 = vadd.f32 0.0, %v585
      %v587 = vpop.f32.mrf.mxu0
      %v588 = vpop.f32.mrf.mxu0
      %v589 = vadd.f32 0.0, %v588
      %v590 = vpop.f32.mrf.mxu0
      %591 = vmatprep.mubr.bf16.mxu0 %v334
      %592 = vmatmul.mubr.bf16.gmra.mxu0 %v333
      %v593 = vpop.f32.mrf.mxu0
      %v594 = vadd.f32 0.0, %v593
      %v595 = vpop.f32.mrf.mxu0
      %v596 = vpop.f32.mrf.mxu0
      %v597 = vadd.f32 0.0, %v596
      %v598 = vpop.f32.mrf.mxu0
      %599 = vmatprep.mubr.bf16.mxu0 %v336
      %600 = vmatmul.mubr.bf16.gmra.mxu0 %v335
      %v601 = vpop.f32.mrf.mxu0
      %v602 = vadd.f32 0.0, %v601
      %v603 = vpop.f32.mrf.mxu0
      %v604 = vpop.f32.mrf.mxu0
      %v605 = vadd.f32 0.0, %v604
      %v606 = vpop.f32.mrf.mxu0
      %607 = vmatprep.mubr.bf16.mxu0 %v338
      %608 = vmatmul.mubr.bf16.gmra.mxu0 %v337
      %v609 = vpop.f32.mrf.mxu0
      %v610 = vadd.f32 0.0, %v609
      %v611 = vpop.f32.mrf.mxu0
      %v612 = vpop.f32.mrf.mxu0
      %v613 = vadd.f32 0.0, %v612
      %v614 = vpop.f32.mrf.mxu0
      %615 = vmatprep.mubr.bf16.mxu0 %v340
      %616 = vmatmul.mubr.bf16.gmra.mxu0 %v339
      %v617 = vpop.f32.mrf.mxu0
      %v618 = vadd.f32 0.0, %v617
      %v619 = vpop.f32.mrf.mxu0
      %v620 = vpop.f32.mrf.mxu0
      %v621 = vadd.f32 0.0, %v620
      %v622 = vpop.f32.mrf.mxu0
      %623 = vmatprep.mubr.bf16.mxu0 %v342
      %624 = vmatmul.mubr.bf16.gmra.mxu0 %v341
      %v625 = vpop.f32.mrf.mxu0
      %v626 = vadd.f32 0.0, %v625
      %v627 = vpop.f32.mrf.mxu0
      %v628 = vpop.f32.mrf.mxu0
      %v629 = vadd.f32 0.0, %v628
      %v630 = vpop.f32.mrf.mxu0
      %631 = vdwg.mxu0
      %632 = vst [vmem:[%s148] sm:$0xff] %v506
      %633 = vst [vmem:[%s148 + $0x8] sm:$0xff] %v509
      %634 = vst [vmem:[%s148 + $0x10] sm:$0xff] %v514
      %635 = vst [vmem:[%s148 + $0x18] sm:$0xff] %v517
      %636 = vst [vmem:[%s148 + $0x20] sm:$0xff] %v522
      %637 = vst [vmem:[%s148 + $0x28] sm:$0xff] %v525
      %638 = vst [vmem:[%s148 + $0x30] sm:$0xff] %v530
      %639 = vst [vmem:[%s148 + $0x38] sm:$0xff] %v533
      %640 = vst [vmem:[%s148 + $0x40] sm:$0xff] %v538
      %641 = vst [vmem:[%s148 + $0x48] sm:$0xff] %v541
      %642 = vst [vmem:[%s148 + $0x50] sm:$0xff] %v546
      %643 = vst [vmem:[%s148 + $0x58] sm:$0xff] %v549
      %644 = vst [vmem:[%s148 + $0x60] sm:$0xff] %v554
      %645 = vst [vmem:[%s148 + $0x68] sm:$0xff] %v557
      %646 = vst [vmem:[%s148 + $0x70] sm:$0xff] %v562
      %647 = vst [vmem:[%s148 + $0x78] sm:$0xff] %v565
      %648 = vst [vmem:[%s148 + $0x80] sm:$0xff] %v570
      %649 = vst [vmem:[%s148 + $0x88] sm:$0xff] %v573
      %650 = vst [vmem:[%s148 + $0x90] sm:$0xff] %v578
      %651 = vst [vmem:[%s148 + $0x98] sm:$0xff] %v581
      %652 = vst [vmem:[%s148 + $0xa0] sm:$0xff] %v586
      %653 = vst [vmem:[%s148 + $0xa8] sm:$0xff] %v589
      %654 = vst [vmem:[%s148 + $0xb0] sm:$0xff] %v594
      %655 = vst [vmem:[%s148 + $0xb8] sm:$0xff] %v597
      %656 = vst [vmem:[%s148 + $0xc0] sm:$0xff] %v602
      %657 = vst [vmem:[%s148 + $0xc8] sm:$0xff] %v605
      %658 = vst [vmem:[%s148 + $0xd0] sm:$0xff] %v610
      %659 = vst [vmem:[%s148 + $0xd8] sm:$0xff] %v613
      %660 = vst [vmem:[%s148 + $0xe0] sm:$0xff] %v618
      %661 = vst [vmem:[%s148 + $0xe8] sm:$0xff] %v621
      %662 = vst [vmem:[%s148 + $0xf0] sm:$0xff] %v626
      %663 = vst [vmem:[%s148 + $0xf8] sm:$0xff] %v629
      %s664 = smul.u32 32, %s13
      %p665 = scmp.lt.s32.totalorder %s664, 63
      %s666 = scalar_select %p665, %s664, 63
      %s667 = smul.addr %s666, 8
      %s668 = scalar_lea.vmem %s2, %s667
      // Predicated region
      $region29: #{resnet_forward.45} parent=27 // pred_check
        %p669 = pneg %p78
      $region30: #{resnet_forward.45} parent=27 // pred_check_branch
        %671 = sbr.rel (%p669) target = $region32
      $region31: #{resnet_forward.45} parent=27 // pred_region
        %s672 = smul.u32 32, %s13
      $region32: #{resnet_forward.45} parent=27 // pred_fallthru
        _
    $region28: #{resnet_forward.45} parent=5 // pred_fallthru
      _
    %p673 = scmp.le.s32.totalorder 2, %s8
    // Predicated region
    $region33: #{resnet_forward.45} parent=5 // pred_check
      %p674 = pneg %p673
    $region34: #{resnet_forward.45} parent=5 // pred_check_branch
      %676 = sbr.rel (%p674) target = $region36
    $region35: #{resnet_forward.45} parent=5 // pred_region
      %s677 = ssub.s32 %s8, 2
      // Predicated region
      $region37: #{resnet_forward.45} parent=35 // pred_check
        %p678 = pneg %p84
      $region38: #{resnet_forward.45} parent=35 // pred_check_branch
        %680 = sbr.rel (%p678) target = $region40
      $region39: #{resnet_forward.45} parent=35 // pred_region
        %s681 = smul.u32 32, %s14
        %p682 = scmp.lt.s32.totalorder %s681, 63
        %s683 = scalar_select %p682, %s681, 63
        %s684 = smul.addr %s683, 8
        %s685 = scalar_lea.vmem %s2, %s684
      $region40: #{resnet_forward.45} parent=35 // pred_fallthru
        _
    $region36: #{resnet_forward.45} parent=5 // pred_fallthru
      _
  $region6: #{resnet_forward.45} parent=0 // loop_footer
    %s12 = sadd.s32 1, %s8
  $region7: #{resnet_forward.45} parent=0 // loop_footer_branch
    %7 = sbr.rel target = $region3
  $region8: #{resnet_forward.45} parent=0 // loop_exit
    _

// kernel: tile.213
$region0: #{tile.213}
  #allocation0 [shape = 's32[1]{0}', space=sflag, size = 0x4, scoped, tag = 'scoped memory for tile.213']
  %s0 = inlined_call_operand.vmem [shape: f32[32], index: 0, kind: input, shape index: {}]
  %s1 = inlined_call_operand.vmem [shape: f32[4,32], index: 1, kind: output, shape index: {}]
  // Predicated region
  $region2: #{tile.213} parent=0 // pred_check
    _
  $region3: #{tile.213} parent=0 // pred_check_branch
    %3 = sbr.rel (0) target = $region5
  $region4: #{tile.213} parent=0 // pred_region
    _
  $region5: #{tile.213} parent=0 // pred_fallthru
    _
  %v4 = vld [vmem:[%s0] ss:$0 sm:$0xff]
  %5 = vst [vmem:[%s1] sm:$0xf] %v4

// kernel: tile.214
$region0: #{tile.214}
  %s0 = inlined_call_operand.vmem [shape: f32[4,32], index: 0, kind: input, shape index: {}]
  %s1 = inlined_call_operand.vmem [shape: f32[1,128], index: 1, kind: output, shape index: {}]
  $region1: #{tile.214} parent=0
    #allocation0 [shape = 'u8[4096]{0}', space=vmem, size = 0x1000, scoped, tag = 'scoped mem for output reshape']
    #allocation1 [shape = 'u8[4096]{0}', space=vmem, size = 0x1000, scoped, tag = 'scoped mem for input reshape']
    %s3 = sshll.u32 1, 4
    %s4 = ssub.s32 %s3, 1
    %v5 = vld [vmem:[%s0] sm:%s4]
    %6 = vst [vmem:[#allocation1] sm:%s4] %v5
    %v7 = vld [vmem:[#allocation1] sm:$0x1]
    %vm8 = vcmask 261120
    %9 = vst.msk [vmem:[#allocation0] sm:$0x1] %vm8, %v7
    %s10 = scalar_lea.vmem [#allocation1], 3
    %v11 = vld [vmem:[%s10] sm:$0x1]
    %12 = vrot.lane.b32.xlu0 %v11, 96
    %v13 = vpop.permute.xlu0 %12
    %vm14 = vcmask 1048320
    %15 = vst.msk [vmem:[#allocation0] sm:$0x1] %vm14, %v13
    %s16 = scalar_lea.vmem [#allocation1], 2
    %v17 = vld [vmem:[%s16] sm:$0x1]
    %18 = vrot.lane.b32.xlu0 %v17, 64
    %v19 = vpop.permute.xlu0 %18
    %vm20 = vcmask 785920
    %21 = vst.msk [vmem:[#allocation0] sm:$0x1] %vm20, %v19
    %s22 = scalar_lea.vmem [#allocation1], 1
    %v23 = vld [vmem:[%s22] sm:$0x1]
    %24 = vrot.lane.b32.xlu0 %v23, 32
    %v25 = vpop.permute.xlu0 %24
    %vm26 = vcmask 523520
    %27 = vst.msk [vmem:[#allocation0] sm:$0x1] %vm26, %v25
    %s29 = sshll.u32 1, 1
    %s30 = ssub.s32 %s29, 1
    %v32 = vld [vmem:[#allocation0] sm:%s30]
    %s33 = sshll.u32 1, 1
    %s34 = ssub.s32 %s33, 1
    %35 = vst [vmem:[%s1] sm:%s34] %v32

// kernel: resnet_forward.46
$region0: #{resnet_forward.46}
  #allocation0 [shape = 'u32[]', space=smem, size = 0x4, offset = 0x4, fixed_abs, tag = 'smem constant byte address 0x4 - core index']
  #allocation1 [shape = 'u32[144,128]{1,0:T(1,128)}', space=vmem, size = 0x12000, scoped, tag = 'internal scratch']
  %s0 = inlined_call_operand.vmem [shape: f32[128,128], index: 0, kind: input, shape index: {}]
  %s1 = inlined_call_operand.vmem [shape: f32[1,128], index: 1, kind: input, shape index: {}]
  %s2 = inlined_call_operand.vmem [shape: f32[1,128], index: 2, kind: input, shape index: {}]
  %s3 = inlined_call_operand.vmem [shape: f32[128,128], index: 3, kind: output, shape index: {}]
  %s4 = sld [smem:[#allocation0]]
  $region22: #{resnet_forward.46} parent=0
    _
  %s6 = ssub.s32 1, %s4
  %s7 = scalar_select 0, %s6, %s4
  // Predicated region
  $region2: #{resnet_forward.46} parent=0 // pred_check
    _
  $region3: #{resnet_forward.46} parent=0 // pred_check_branch
    %9 = sbr.rel (0) target = $region5
  $region4: #{resnet_forward.46} parent=0 // pred_region
    _
  $region5: #{resnet_forward.46} parent=0 // pred_fallthru
    _
  // Predicated region
  $region6: #{resnet_forward.46} parent=0 // pred_check
    _
  $region7: #{resnet_forward.46} parent=0 // pred_check_branch
    %11 = sbr.rel (0) target = $region9
  $region8: #{resnet_forward.46} parent=0 // pred_region
    _
  $region9: #{resnet_forward.46} parent=0 // pred_fallthru
    _
  // Predicated region
  $region10: #{resnet_forward.46} parent=0 // pred_check
    _
  $region11: #{resnet_forward.46} parent=0 // pred_check_branch
    %13 = sbr.rel (0) target = $region13
  $region12: #{resnet_forward.46} parent=0 // pred_region
    _
  $region13: #{resnet_forward.46} parent=0 // pred_fallthru
    _
  %v14 = vld [vmem:[%s0] sm:$0xff]
  %v15 = vld [vmem:[%s0 + $0x8] sm:$0xff]
  %v16 = vld [vmem:[%s0 + $0x10] sm:$0xff]
  %v17 = vld [vmem:[%s0 + $0x18] sm:$0xff]
  %v18 = vld [vmem:[%s0 + $0x20] sm:$0xff]
  %v19 = vld [vmem:[%s0 + $0x28] sm:$0xff]
  %v20 = vld [vmem:[%s0 + $0x30] sm:$0xff]
  %v21 = vld [vmem:[%s0 + $0x38] sm:$0xff]
  %v22 = vld [vmem:[%s0 + $0x40] sm:$0xff]
  %v23 = vld [vmem:[%s0 + $0x48] sm:$0xff]
  %v24 = vld [vmem:[%s0 + $0x50] sm:$0xff]
  %v25 = vld [vmem:[%s0 + $0x58] sm:$0xff]
  %v26 = vld [vmem:[%s0 + $0x60] sm:$0xff]
  %v27 = vld [vmem:[%s0 + $0x68] sm:$0xff]
  %v28 = vld [vmem:[%s0 + $0x70] sm:$0xff]
  %v29 = vld [vmem:[%s0 + $0x78] sm:$0xff]
  %v30 = vld [vmem:[%s1] sm:$0x1]
  %v32 = vlaneseq
  %v33 = vshrl.u32 %v32, 7
  %v34 = vsub.s32 0, %v33
  %v35 = vrot.slane %v30, %v34
  %v37 = vmul.f32 %v14, %v35
  %v38 = vmul.f32 %v15, %v35
  %v39 = vmul.f32 %v16, %v35
  %v40 = vmul.f32 %v17, %v35
  %v41 = vmul.f32 %v18, %v35
  %v42 = vmul.f32 %v19, %v35
  %v43 = vmul.f32 %v20, %v35
  %v44 = vmul.f32 %v21, %v35
  %v45 = vmul.f32 %v22, %v35
  %v46 = vmul.f32 %v23, %v35
  %v47 = vmul.f32 %v24, %v35
  %v48 = vmul.f32 %v25, %v35
  %v49 = vmul.f32 %v26, %v35
  %v50 = vmul.f32 %v27, %v35
  %v51 = vmul.f32 %v28, %v35
  %v52 = vmul.f32 %v29, %v35
  %v53 = vld [vmem:[%s2] sm:$0x1]
  %v55 = vlaneseq
  %v56 = vshrl.u32 %v55, 7
  %v57 = vsub.s32 0, %v56
  %v58 = vrot.slane %v53, %v57
  %v60 = vadd.f32 %v37, %v58
  %v61 = vadd.f32 %v38, %v58
  %v62 = vadd.f32 %v39, %v58
  %v63 = vadd.f32 %v40, %v58
  %v64 = vadd.f32 %v41, %v58
  %v65 = vadd.f32 %v42, %v58
  %v66 = vadd.f32 %v43, %v58
  %v67 = vadd.f32 %v44, %v58
  %v68 = vadd.f32 %v45, %v58
  %v69 = vadd.f32 %v46, %v58
  %v70 = vadd.f32 %v47, %v58
  %v71 = vadd.f32 %v48, %v58
  %v72 = vadd.f32 %v49, %v58
  %v73 = vadd.f32 %v50, %v58
  %v74 = vadd.f32 %v51, %v58
  %v75 = vadd.f32 %v52, %v58
  %76 = vst [vmem:[%s3] sm:$0xff] %v60
  %77 = vst [vmem:[%s3 + $0x8] sm:$0xff] %v61
  %78 = vst [vmem:[%s3 + $0x10] sm:$0xff] %v62
  %79 = vst [vmem:[%s3 + $0x18] sm:$0xff] %v63
  %80 = vst [vmem:[%s3 + $0x20] sm:$0xff] %v64
  %81 = vst [vmem:[%s3 + $0x28] sm:$0xff] %v65
  %82 = vst [vmem:[%s3 + $0x30] sm:$0xff] %v66
  %83 = vst [vmem:[%s3 + $0x38] sm:$0xff] %v67
  %84 = vst [vmem:[%s3 + $0x40] sm:$0xff] %v68
  %85 = vst [vmem:[%s3 + $0x48] sm:$0xff] %v69
  %86 = vst [vmem:[%s3 + $0x50] sm:$0xff] %v70
  %87 = vst [vmem:[%s3 + $0x58] sm:$0xff] %v71
  %88 = vst [vmem:[%s3 + $0x60] sm:$0xff] %v72
  %89 = vst [vmem:[%s3 + $0x68] sm:$0xff] %v73
  %90 = vst [vmem:[%s3 + $0x70] sm:$0xff] %v74
  %91 = vst [vmem:[%s3 + $0x78] sm:$0xff] %v75
  // Predicated region
  $region14: #{resnet_forward.46} parent=0 // pred_check
    _
  $region15: #{resnet_forward.46} parent=0 // pred_check_branch
    %93 = sbr.rel (0) target = $region17
  $region16: #{resnet_forward.46} parent=0 // pred_region
    _
  $region17: #{resnet_forward.46} parent=0 // pred_fallthru
    _
  // Predicated region
  $region18: #{resnet_forward.46} parent=0 // pred_check
    _
  $region19: #{resnet_forward.46} parent=0 // pred_check_branch
    %95 = sbr.rel (0) target = $region21
  $region20: #{resnet_forward.46} parent=0 // pred_region
    _
  $region21: #{resnet_forward.46} parent=0 // pred_fallthru
    _

// kernel: resnet_forward.43
$region0: #{resnet_forward.43}
  #allocation0 [shape = 'u32[]', space=smem, size = 0x4, offset = 0x4, fixed_abs, tag = 'smem constant byte address 0x4 - core index']
  #allocation1 [shape = 'u32[144,128]{1,0:T(1,128)}', space=vmem, size = 0x12000, scoped, tag = 'internal scratch']
  %s0 = inlined_call_operand.vmem [shape: f32[128,128], index: 0, kind: input, shape index: {}]
  %s1 = inlined_call_operand.vmem [shape: f32[1,128], index: 1, kind: input, shape index: {}]
  %s2 = inlined_call_operand.vmem [shape: f32[1,128], index: 2, kind: input, shape index: {}]
  %s3 = inlined_call_operand.vmem [shape: f32[128,128], index: 3, kind: output, shape index: {}]
  %s4 = sld [smem:[#allocation0]]
  $region22: #{resnet_forward.43} parent=0
    _
  %s6 = ssub.s32 1, %s4
  %s7 = scalar_select 0, %s6, %s4
  // Predicated region
  $region2: #{resnet_forward.43} parent=0 // pred_check
    _
  $region3: #{resnet_forward.43} parent=0 // pred_check_branch
    %9 = sbr.rel (0) target = $region5
  $region4: #{resnet_forward.43} parent=0 // pred_region
    _
  $region5: #{resnet_forward.43} parent=0 // pred_fallthru
    _
  // Predicated region
  $region6: #{resnet_forward.43} parent=0 // pred_check
    _
  $region7: #{resnet_forward.43} parent=0 // pred_check_branch
    %11 = sbr.rel (0) target = $region9
  $region8: #{resnet_forward.43} parent=0 // pred_region
    _
  $region9: #{resnet_forward.43} parent=0 // pred_fallthru
    _
  // Predicated region
  $region10: #{resnet_forward.43} parent=0 // pred_check
    _
  $region11: #{resnet_forward.43} parent=0 // pred_check_branch
    %13 = sbr.rel (0) target = $region13
  $region12: #{resnet_forward.43} parent=0 // pred_region
    _
  $region13: #{resnet_forward.43} parent=0 // pred_fallthru
    _
  %v14 = vld [vmem:[%s0] sm:$0xff]
  %v15 = vld [vmem:[%s0 + $0x8] sm:$0xff]
  %v16 = vld [vmem:[%s0 + $0x10] sm:$0xff]
  %v17 = vld [vmem:[%s0 + $0x18] sm:$0xff]
  %v18 = vld [vmem:[%s0 + $0x20] sm:$0xff]
  %v19 = vld [vmem:[%s0 + $0x28] sm:$0xff]
  %v20 = vld [vmem:[%s0 + $0x30] sm:$0xff]
  %v21 = vld [vmem:[%s0 + $0x38] sm:$0xff]
  %v22 = vld [vmem:[%s0 + $0x40] sm:$0xff]
  %v23 = vld [vmem:[%s0 + $0x48] sm:$0xff]
  %v24 = vld [vmem:[%s0 + $0x50] sm:$0xff]
  %v25 = vld [vmem:[%s0 + $0x58] sm:$0xff]
  %v26 = vld [vmem:[%s0 + $0x60] sm:$0xff]
  %v27 = vld [vmem:[%s0 + $0x68] sm:$0xff]
  %v28 = vld [vmem:[%s0 + $0x70] sm:$0xff]
  %v29 = vld [vmem:[%s0 + $0x78] sm:$0xff]
  %v30 = vld [vmem:[%s1] sm:$0x1]
  %v32 = vlaneseq
  %v33 = vshrl.u32 %v32, 7
  %v34 = vsub.s32 0, %v33
  %v35 = vrot.slane %v30, %v34
  %v37 = vmul.f32 %v14, %v35
  %v38 = vmul.f32 %v15, %v35
  %v39 = vmul.f32 %v16, %v35
  %v40 = vmul.f32 %v17, %v35
  %v41 = vmul.f32 %v18, %v35
  %v42 = vmul.f32 %v19, %v35
  %v43 = vmul.f32 %v20, %v35
  %v44 = vmul.f32 %v21, %v35
  %v45 = vmul.f32 %v22, %v35
  %v46 = vmul.f32 %v23, %v35
  %v47 = vmul.f32 %v24, %v35
  %v48 = vmul.f32 %v25, %v35
  %v49 = vmul.f32 %v26, %v35
  %v50 = vmul.f32 %v27, %v35
  %v51 = vmul.f32 %v28, %v35
  %v52 = vmul.f32 %v29, %v35
  %v53 = vld [vmem:[%s2] sm:$0x1]
  %v55 = vlaneseq
  %v56 = vshrl.u32 %v55, 7
  %v57 = vsub.s32 0, %v56
  %v58 = vrot.slane %v53, %v57
  %v60 = vadd.f32 %v37, %v58
  %v61 = vadd.f32 %v38, %v58
  %v62 = vadd.f32 %v39, %v58
  %v63 = vadd.f32 %v40, %v58
  %v64 = vadd.f32 %v41, %v58
  %v65 = vadd.f32 %v42, %v58
  %v66 = vadd.f32 %v43, %v58
  %v67 = vadd.f32 %v44, %v58
  %v68 = vadd.f32 %v45, %v58
  %v69 = vadd.f32 %v46, %v58
  %v70 = vadd.f32 %v47, %v58
  %v71 = vadd.f32 %v48, %v58
  %v72 = vadd.f32 %v49, %v58
  %v73 = vadd.f32 %v50, %v58
  %v74 = vadd.f32 %v51, %v58
  %v75 = vadd.f32 %v52, %v58
  %v76 = vmax.f32 %v60, 0.0
  %v77 = vmax.f32 %v61, 0.0
  %v78 = vmax.f32 %v62, 0.0
  %v79 = vmax.f32 %v63, 0.0
  %v80 = vmax.f32 %v64, 0.0
  %v81 = vmax.f32 %v65, 0.0
  %v82 = vmax.f32 %v66, 0.0
  %v83 = vmax.f32 %v67, 0.0
  %v84 = vmax.f32 %v68, 0.0
  %v85 = vmax.f32 %v69, 0.0
  %v86 = vmax.f32 %v70, 0.0
  %v87 = vmax.f32 %v71, 0.0
  %v88 = vmax.f32 %v72, 0.0
  %v89 = vmax.f32 %v73, 0.0
  %v90 = vmax.f32 %v74, 0.0
  %v91 = vmax.f32 %v75, 0.0
  %92 = vst [vmem:[%s3] sm:$0xff] %v76
  %93 = vst [vmem:[%s3 + $0x8] sm:$0xff] %v77
  %94 = vst [vmem:[%s3 + $0x10] sm:$0xff] %v78
  %95 = vst [vmem:[%s3 + $0x18] sm:$0xff] %v79
  %96 = vst [vmem:[%s3 + $0x20] sm:$0xff] %v80
  %97 = vst [vmem:[%s3 + $0x28] sm:$0xff] %v81
  %98 = vst [vmem:[%s3 + $0x30] sm:$0xff] %v82
  %99 = vst [vmem:[%s3 + $0x38] sm:$0xff] %v83
  %100 = vst [vmem:[%s3 + $0x40] sm:$0xff] %v84
  %101 = vst [vmem:[%s3 + $0x48] sm:$0xff] %v85
  %102 = vst [vmem:[%s3 + $0x50] sm:$0xff] %v86
  %103 = vst [vmem:[%s3 + $0x58] sm:$0xff] %v87
  %104 = vst [vmem:[%s3 + $0x60] sm:$0xff] %v88
  %105 = vst [vmem:[%s3 + $0x68] sm:$0xff] %v89
  %106 = vst [vmem:[%s3 + $0x70] sm:$0xff] %v90
  %107 = vst [vmem:[%s3 + $0x78] sm:$0xff] %v91
  // Predicated region
  $region14: #{resnet_forward.43} parent=0 // pred_check
    _
  $region15: #{resnet_forward.43} parent=0 // pred_check_branch
    %109 = sbr.rel (0) target = $region17
  $region16: #{resnet_forward.43} parent=0 // pred_region
    _
  $region17: #{resnet_forward.43} parent=0 // pred_fallthru
    _
  // Predicated region
  $region18: #{resnet_forward.43} parent=0 // pred_check
    _
  $region19: #{resnet_forward.43} parent=0 // pred_check_branch
    %111 = sbr.rel (0) target = $region21
  $region20: #{resnet_forward.43} parent=0 // pred_region
    _
  $region21: #{resnet_forward.43} parent=0 // pred_fallthru
    _

// kernel: resnet_forward.44
$region0: #{resnet_forward.44}
  #allocation0 [shape = 'u32[]', space=smem, size = 0x4, offset = 0x4, fixed_abs, tag = 'smem constant byte address 0x4 - core index']
  #allocation1 [shape = 'u32[144,128]{1,0:T(1,128)}', space=vmem, size = 0x12000, scoped, tag = 'internal scratch']
  %s0 = inlined_call_operand.vmem [shape: bf16[512,384], index: 0, kind: input, shape index: {}]
  %s1 = inlined_call_operand.vmem [shape: bf16[384,128], index: 1, kind: input, shape index: {}]
  %s2 = inlined_call_operand.vmem [shape: f32[512,128], index: 2, kind: output, shape index: {}]
  %s3 = sld [smem:[#allocation0]]
  $region41: #{resnet_forward.44} parent=0
    _
  %s5 = ssub.s32 1, %s3
  %s6 = scalar_select 0, %s5, %s3
  loop: start=0, step=1, limit=4
  $region2: #{resnet_forward.44} parent=0 // loop_pre_header
    _
  $region3: #{resnet_forward.44} parent=0 // loop_header
    %s8 = sphi 0, %s12
    %p9 = scmp.ge.s32.totalorder %s8, 4
    %s18 = sphi 0, %s20
    %s21 = sphi 0, %s18
    %s22 = sphi 0, %s21
    %s38 = sphi 0, %s22
    %s42 = sphi 0, %s42
    %s44 = sphi 0, %s42
    %s45 = sphi 0, %s44
    %s59 = sphi 0, %s45
    %s65 = sphi 0, %s67
    %s68 = sphi 0, %s65
    %s69 = sphi 0, %s68
    %s85 = sphi 0, %s69
  $region4: #{resnet_forward.44} parent=0 // loop_header_branch
    %11 = sbr.rel (%p9) target = $region8
  $region5: #{resnet_forward.44} parent=0 // loop_body
    %s13 = ssub.s32 %s8, 1
    %s14 = ssub.s32 %s8, 2
    %s15 = sadd.s32 %s8, 1
    %s16 = ssub.s32 %s8, %s15
    %p17 = scmp.eq.s32.totalorder %s16, 0
    %s19 = sadd.s32 %s18, 1
    %s20 = scalar_select %p17, %s18, %s19
    %p23 = pneg %p17
    %p24 = scmp.eq.s32.totalorder %s8, 1
    %p25 = por %p23, %p24
    %p26 = scmp.ne.s32.totalorder %s18, %s21
    %p27 = scmp.eq.s32.totalorder %s8, 0
    %p28 = por %p26, %p27
    %p29 = scmp.ne.s32.totalorder %s18, %s21
    %p30 = scmp.eq.s32.totalorder %s13, 1
    %p31 = por %p29, %p30
    %p32 = scmp.ne.s32.totalorder %s21, %s22
    %p33 = scmp.eq.s32.totalorder %s13, 0
    %p34 = por %p32, %p33
    %p35 = scmp.ne.s32.totalorder %s21, %s22
    %p36 = scmp.eq.s32.totalorder %s14, 1
    %p37 = por %p35, %p36
    %p39 = scmp.ne.s32.totalorder %s22, %s38
    %p40 = scmp.eq.s32.totalorder %s14, 0
    %p41 = por %p39, %p40
    %s43 = sadd.s32 %s42, 1
    %p46 = scmp.eq.s32.totalorder %s8, 1
    %p47 = scmp.ne.s32.totalorder %s42, %s44
    %p48 = scmp.eq.s32.totalorder %s8, 0
    %p49 = por %p47, %p48
    %p50 = scmp.ne.s32.totalorder %s42, %s44
    %p51 = scmp.eq.s32.totalorder %s13, 1
    %p52 = por %p50, %p51
    %p53 = scmp.ne.s32.totalorder %s44, %s45
    %p54 = scmp.eq.s32.totalorder %s13, 0
    %p55 = por %p53, %p54
    %p56 = scmp.ne.s32.totalorder %s44, %s45
    %p57 = scmp.eq.s32.totalorder %s14, 1
    %p58 = por %p56, %p57
    %p60 = scmp.ne.s32.totalorder %s45, %s59
    %p61 = scmp.eq.s32.totalorder %s14, 0
    %p62 = por %p60, %p61
    %s63 = ssub.s32 %s8, %s15
    %p64 = scmp.eq.s32.totalorder %s63, 0
    %s66 = sadd.s32 %s65, 1
    %s67 = scalar_select %p64, %s65, %s66
    %p70 = pneg %p64
    %p71 = scmp.eq.s32.totalorder %s8, 1
    %p72 = por %p70, %p71
    %p73 = scmp.ne.s32.totalorder %s65, %s68
    %p74 = scmp.eq.s32.totalorder %s8, 0
    %p75 = por %p73, %p74
    %p76 = scmp.ne.s32.totalorder %s65, %s68
    %p77 = scmp.eq.s32.totalorder %s13, 1
    %p78 = por %p76, %p77
    %p79 = scmp.ne.s32.totalorder %s68, %s69
    %p80 = scmp.eq.s32.totalorder %s13, 0
    %p81 = por %p79, %p80
    %p82 = scmp.ne.s32.totalorder %s68, %s69
    %p83 = scmp.eq.s32.totalorder %s14, 1
    %p84 = por %p82, %p83
    %p86 = scmp.ne.s32.totalorder %s69, %s85
    %p87 = scmp.eq.s32.totalorder %s14, 0
    %p88 = por %p86, %p87
    %p89 = scmp.le.s32.totalorder 1, %s8
    %p90 = scmp.lt.s32.totalorder %s8, 3
    %p91 = pnand %p89, %p90
    %p92 = pneg %p91
    // Predicated region
    $region9: #{resnet_forward.44} parent=5 // pred_check
      _
    $region10: #{resnet_forward.44} parent=5 // pred_check_branch
      %94 = sbr.rel (%p91) target = $region12
    $region11: #{resnet_forward.44} parent=5 // pred_region
      %s95 = ssub.s32 %s8, 1
      // Predicated region
      $region13: #{resnet_forward.44} parent=11 // pred_check
        %p96 = pneg %p55
      $region14: #{resnet_forward.44} parent=11 // pred_check_branch
        %98 = sbr.rel (%p96) target = $region16
      $region15: #{resnet_forward.44} parent=11 // pred_region
        _
      $region16: #{resnet_forward.44} parent=11 // pred_fallthru
        _
    $region12: #{resnet_forward.44} parent=5 // pred_fallthru
      _
    %p99 = scmp.lt.s32.totalorder %s8, 2
    // Predicated region
    $region17: #{resnet_forward.44} parent=5 // pred_check
      %p100 = pneg %p99
    $region18: #{resnet_forward.44} parent=5 // pred_check_branch
      %102 = sbr.rel (%p100) target = $region20
    $region19: #{resnet_forward.44} parent=5 // pred_region
      // Predicated region
      $region21: #{resnet_forward.44} parent=19 // pred_check
        %p103 = pneg %p28
      $region22: #{resnet_forward.44} parent=19 // pred_check_branch
        %105 = sbr.rel (%p103) target = $region24
      $region23: #{resnet_forward.44} parent=19 // pred_region
        %s106 = smul.u32 32, %s8
        %p107 = scmp.lt.s32.totalorder %s106, 63
        %s108 = scalar_select %p107, %s106, 63
        %s109 = smul.addr %s108, 3
        %s110 = smul.addr %s109, 4
        %s111 = scalar_lea.vmem %s0, %s110
        %s112 = smul.u32 32, %s8
      $region24: #{resnet_forward.44} parent=19 // pred_fallthru
        _
    $region20: #{resnet_forward.44} parent=5 // pred_fallthru
      _
    %p113 = scmp.le.s32.totalorder 1, %s8
    %p114 = scmp.lt.s32.totalorder %s8, 3
    %p115 = pnand %p113, %p114
    %p116 = pneg %p115
    // Predicated region
    $region25: #{resnet_forward.44} parent=5 // pred_check
      _
    $region26: #{resnet_forward.44} parent=5 // pred_check_branch
      %118 = sbr.rel (%p115) target = $region28
    $region27: #{resnet_forward.44} parent=5 // pred_region
      %s119 = ssub.s32 %s8, 1
      %s120 = smul.u32 32, %s13
      %p121 = scmp.lt.s32.totalorder %s120, 63
      %s122 = scalar_select %p121, %s120, 63
      %s123 = smul.addr %s122, 3
      %s124 = smul.addr %s123, 4
      %s125 = scalar_lea.vmem %s0, %s124
      %p126 = pneg %p34
      %p127 = pneg %p31
      %p128 = pneg %p55
      %p129 = pneg %p52
      %p130 = pneg %p81
      %p131 = pneg %p78
      %s132 = smul.u32 32, %s13
      %p133 = scmp.lt.s32.totalorder %s132, 63
      %s134 = scalar_select %p133, %s132, 63
      %s135 = smul.addr %s134, 8
      %s136 = scalar_lea.vmem %s2, %s135
      %s137 = smul.u32 32, %s13
      %p138 = scmp.lt.s32.totalorder %s137, 63
      %s139 = scalar_select %p138, %s137, 63
      %s140 = smul.addr %s139, 3
      %s141 = smul.addr %s140, 4
      %s142 = scalar_lea.vmem %s0, %s141
      %s143 = smul.u32 32, %s13
      %s144 = smul.u32 32, %s13
      %p145 = scmp.lt.s32.totalorder %s144, 63
      %s146 = scalar_select %p145, %s144, 63
      %s147 = smul.addr %s146, 8
      %s148 = scalar_lea.vmem %s2, %s147
      %s149 = smul.u32 32, %s13
      %v151 = vld [vmem:[%s142] sm:$0xff]
      %v152 = vld [vmem:[%s142 + $0x8] sm:$0xf]
      %v153 = vld [vmem:[%s142 + $0xc] sm:$0xff]
      %v154 = vld [vmem:[%s142 + $0x14] sm:$0xf]
      %v155 = vld [vmem:[%s142 + $0x18] sm:$0xff]
      %v156 = vld [vmem:[%s142 + $0x20] sm:$0xf]
      %v157 = vld [vmem:[%s142 + $0x24] sm:$0xff]
      %v158 = vld [vmem:[%s142 + $0x2c] sm:$0xf]
      %v159 = vld [vmem:[%s142 + $0x30] sm:$0xff]
      %v160 = vld [vmem:[%s142 + $0x38] sm:$0xf]
      %v161 = vld [vmem:[%s142 + $0x3c] sm:$0xff]
      %v162 = vld [vmem:[%s142 + $0x44] sm:$0xf]
      %v163 = vld [vmem:[%s142 + $0x48] sm:$0xff]
      %v164 = vld [vmem:[%s142 + $0x50] sm:$0xf]
      %v165 = vld [vmem:[%s142 + $0x54] sm:$0xff]
      %v166 = vld [vmem:[%s142 + $0x5c] sm:$0xf]
      %v167 = vld [vmem:[%s142 + $0x60] sm:$0xff]
      %v168 = vld [vmem:[%s142 + $0x68] sm:$0xf]
      %v169 = vld [vmem:[%s142 + $0x6c] sm:$0xff]
      %v170 = vld [vmem:[%s142 + $0x74] sm:$0xf]
      %v171 = vld [vmem:[%s142 + $0x78] sm:$0xff]
      %v172 = vld [vmem:[%s142 + $0x80] sm:$0xf]
      %v173 = vld [vmem:[%s142 + $0x84] sm:$0xff]
      %v174 = vld [vmem:[%s142 + $0x8c] sm:$0xf]
      %v175 = vld [vmem:[%s142 + $0x90] sm:$0xff]
      %v176 = vld [vmem:[%s142 + $0x98] sm:$0xf]
      %v177 = vld [vmem:[%s142 + $0x9c] sm:$0xff]
      %v178 = vld [vmem:[%s142 + $0xa4] sm:$0xf]
      %v179 = vld [vmem:[%s142 + $0xa8] sm:$0xff]
      %v180 = vld [vmem:[%s142 + $0xb0] sm:$0xf]
      %v181 = vld [vmem:[%s142 + $0xb4] sm:$0xff]
      %v182 = vld [vmem:[%s142 + $0xbc] sm:$0xf]
      %v183 = vld [vmem:[%s142 + $0xc0] sm:$0xff]
      %v184 = vld [vmem:[%s142 + $0xc8] sm:$0xf]
      %v185 = vld [vmem:[%s142 + $0xcc] sm:$0xff]
      %v186 = vld [vmem:[%s142 + $0xd4] sm:$0xf]
      %v187 = vld [vmem:[%s142 + $0xd8] sm:$0xff]
      %v188 = vld [vmem:[%s142 + $0xe0] sm:$0xf]
      %v189 = vld [vmem:[%s142 + $0xe4] sm:$0xff]
      %v190 = vld [vmem:[%s142 + $0xec] sm:$0xf]
      %v191 = vld [vmem:[%s142 + $0xf0] sm:$0xff]
      %v192 = vld [vmem:[%s142 + $0xf8] sm:$0xf]
      %v193 = vld [vmem:[%s142 + $0xfc] sm:$0xff]
      %v194 = vld [vmem:[%s142 + $0x104] sm:$0xf]
      %v195 = vld [vmem:[%s142 + $0x108] sm:$0xff]
      %v196 = vld [vmem:[%s142 + $0x110] sm:$0xf]
      %v197 = vld [vmem:[%s142 + $0x114] sm:$0xff]
      %v198 = vld [vmem:[%s142 + $0x11c] sm:$0xf]
      %v199 = vld [vmem:[%s142 + $0x120] sm:$0xff]
      %v200 = vld [vmem:[%s142 + $0x128] sm:$0xf]
      %v201 = vld [vmem:[%s142 + $0x12c] sm:$0xff]
      %v202 = vld [vmem:[%s142 + $0x134] sm:$0xf]
      %v203 = vld [vmem:[%s142 + $0x138] sm:$0xff]
      %v204 = vld [vmem:[%s142 + $0x140] sm:$0xf]
      %v205 = vld [vmem:[%s142 + $0x144] sm:$0xff]
      %v206 = vld [vmem:[%s142 + $0x14c] sm:$0xf]
      %v207 = vld [vmem:[%s142 + $0x150] sm:$0xff]
      %v208 = vld [vmem:[%s142 + $0x158] sm:$0xf]
      %v209 = vld [vmem:[%s142 + $0x15c] sm:$0xff]
      %v210 = vld [vmem:[%s142 + $0x164] sm:$0xf]
      %v211 = vld [vmem:[%s142 + $0x168] sm:$0xff]
      %v212 = vld [vmem:[%s142 + $0x170] sm:$0xf]
      %v213 = vld [vmem:[%s142 + $0x174] sm:$0xff]
      %v214 = vld [vmem:[%s142 + $0x17c] sm:$0xf]
      %v215 = vld [vmem:[%s1] sm:$0xf]
      %v216 = vld [vmem:[%s1 + $0x4] sm:$0xf]
      %v217 = vld [vmem:[%s1 + $0x8] sm:$0xf]
      %v218 = vld [vmem:[%s1 + $0xc] sm:$0xf]
      %v219 = vld [vmem:[%s1 + $0x10] sm:$0xf]
      %v220 = vld [vmem:[%s1 + $0x14] sm:$0xf]
      %v221 = vld [vmem:[%s1 + $0x18] sm:$0xf]
      %v222 = vld [vmem:[%s1 + $0x1c] sm:$0xf]
      %v223 = vld [vmem:[%s1 + $0x20] sm:$0xf]
      %v224 = vld [vmem:[%s1 + $0x24] sm:$0xf]
      %v225 = vld [vmem:[%s1 + $0x28] sm:$0xf]
      %v226 = vld [vmem:[%s1 + $0x2c] sm:$0xf]
      %v227 = vld [vmem:[%s1 + $0x30] sm:$0xf]
      %v228 = vld [vmem:[%s1 + $0x34] sm:$0xf]
      %v229 = vld [vmem:[%s1 + $0x38] sm:$0xf]
      %v230 = vld [vmem:[%s1 + $0x3c] sm:$0xf]
      %v231 = vld [vmem:[%s1 + $0x40] sm:$0xf]
      %v232 = vld [vmem:[%s1 + $0x44] sm:$0xf]
      %v233 = vld [vmem:[%s1 + $0x48] sm:$0xf]
      %v234 = vld [vmem:[%s1 + $0x4c] sm:$0xf]
      %v235 = vld [vmem:[%s1 + $0x50] sm:$0xf]
      %v236 = vld [vmem:[%s1 + $0x54] sm:$0xf]
      %v237 = vld [vmem:[%s1 + $0x58] sm:$0xf]
      %v238 = vld [vmem:[%s1 + $0x5c] sm:$0xf]
      %v239 = vld [vmem:[%s1 + $0x60] sm:$0xf]
      %v240 = vld [vmem:[%s1 + $0x64] sm:$0xf]
      %v241 = vld [vmem:[%s1 + $0x68] sm:$0xf]
      %v242 = vld [vmem:[%s1 + $0x6c] sm:$0xf]
      %v243 = vld [vmem:[%s1 + $0x70] sm:$0xf]
      %v244 = vld [vmem:[%s1 + $0x74] sm:$0xf]
      %v245 = vld [vmem:[%s1 + $0x78] sm:$0xf]
      %v246 = vld [vmem:[%s1 + $0x7c] sm:$0xf]
      %v247 = vld [vmem:[%s1 + $0x80] sm:$0xf]
      %v248 = vld [vmem:[%s1 + $0x84] sm:$0xf]
      %v249 = vld [vmem:[%s1 + $0x88] sm:$0xf]
      %v250 = vld [vmem:[%s1 + $0x8c] sm:$0xf]
      %v251 = vld [vmem:[%s1 + $0x90] sm:$0xf]
      %v252 = vld [vmem:[%s1 + $0x94] sm:$0xf]
      %v253 = vld [vmem:[%s1 + $0x98] sm:$0xf]
      %v254 = vld [vmem:[%s1 + $0x9c] sm:$0xf]
      %v255 = vld [vmem:[%s1 + $0xa0] sm:$0xf]
      %v256 = vld [vmem:[%s1 + $0xa4] sm:$0xf]
      %v257 = vld [vmem:[%s1 + $0xa8] sm:$0xf]
      %v258 = vld [vmem:[%s1 + $0xac] sm:$0xf]
      %v259 = vld [vmem:[%s1 + $0xb0] sm:$0xf]
      %v260 = vld [vmem:[%s1 + $0xb4] sm:$0xf]
      %v261 = vld [vmem:[%s1 + $0xb8] sm:$0xf]
      %v262 = vld [vmem:[%s1 + $0xbc] sm:$0xf]
      %v327 = vunpack.c.l.b16 %v151
      %v328 = vunpack.c.h.b16 %v151
      %v329 = vunpack.c.l.b16 %v152
      %v330 = vunpack.c.l.b16 %v153
      %v331 = vunpack.c.h.b16 %v153
      %v332 = vunpack.c.l.b16 %v154
      %v333 = vunpack.c.l.b16 %v155
      %v334 = vunpack.c.h.b16 %v155
      %v335 = vunpack.c.l.b16 %v156
      %v336 = vunpack.c.l.b16 %v157
      %v337 = vunpack.c.h.b16 %v157
      %v338 = vunpack.c.l.b16 %v158
      %v339 = vunpack.c.l.b16 %v159
      %v340 = vunpack.c.h.b16 %v159
      %v341 = vunpack.c.l.b16 %v160
      %v342 = vunpack.c.l.b16 %v161
      %v343 = vunpack.c.h.b16 %v161
      %v344 = vunpack.c.l.b16 %v162
      %v345 = vunpack.c.l.b16 %v163
      %v346 = vunpack.c.h.b16 %v163
      %v347 = vunpack.c.l.b16 %v164
      %v348 = vunpack.c.l.b16 %v165
      %v349 = vunpack.c.h.b16 %v165
      %v350 = vunpack.c.l.b16 %v166
      %v351 = vunpack.c.l.b16 %v167
      %v352 = vunpack.c.h.b16 %v167
      %v353 = vunpack.c.l.b16 %v168
      %v354 = vunpack.c.l.b16 %v169
      %v355 = vunpack.c.h.b16 %v169
      %v356 = vunpack.c.l.b16 %v170
      %v357 = vunpack.c.l.b16 %v171
      %v358 = vunpack.c.h.b16 %v171
      %v359 = vunpack.c.l.b16 %v172
      %v360 = vunpack.c.l.b16 %v173
      %v361 = vunpack.c.h.b16 %v173
      %v362 = vunpack.c.l.b16 %v174
      %v363 = vunpack.c.l.b16 %v175
      %v364 = vunpack.c.h.b16 %v175
      %v365 = vunpack.c.l.b16 %v176
      %v366 = vunpack.c.l.b16 %v177
      %v367 = vunpack.c.h.b16 %v177
      %v368 = vunpack.c.l.b16 %v178
      %v369 = vunpack.c.l.b16 %v179
      %v370 = vunpack.c.h.b16 %v179
      %v371 = vunpack.c.l.b16 %v180
      %v372 = vunpack.c.l.b16 %v181
      %v373 = vunpack.c.h.b16 %v181
      %v374 = vunpack.c.l.b16 %v182
      %v375 = vunpack.c.l.b16 %v183
      %v376 = vunpack.c.h.b16 %v183
      %v377 = vunpack.c.l.b16 %v184
      %v378 = vunpack.c.l.b16 %v185
      %v379 = vunpack.c.h.b16 %v185
      %v380 = vunpack.c.l.b16 %v186
      %v381 = vunpack.c.l.b16 %v187
      %v382 = vunpack.c.h.b16 %v187
      %v383 = vunpack.c.l.b16 %v188
      %v384 = vunpack.c.l.b16 %v189
      %v385 = vunpack.c.h.b16 %v189
      %v386 = vunpack.c.l.b16 %v190
      %v387 = vunpack.c.l.b16 %v191
      %v388 = vunpack.c.h.b16 %v191
      %v389 = vunpack.c.l.b16 %v192
      %v390 = vunpack.c.l.b16 %v193
      %v391 = vunpack.c.h.b16 %v193
      %v392 = vunpack.c.l.b16 %v194
      %v393 = vunpack.c.l.b16 %v195
      %v394 = vunpack.c.h.b16 %v195
      %v395 = vunpack.c.l.b16 %v196
      %v396 = vunpack.c.l.b16 %v197
      %v397 = vunpack.c.h.b16 %v197
      %v398 = vunpack.c.l.b16 %v198
      %v399 = vunpack.c.l.b16 %v199
      %v400 = vunpack.c.h.b16 %v199
      %v401 = vunpack.c.l.b16 %v200
      %v402 = vunpack.c.l.b16 %v201
      %v403 = vunpack.c.h.b16 %v201
      %v404 = vunpack.c.l.b16 %v202
      %v405 = vunpack.c.l.b16 %v203
      %v406 = vunpack.c.h.b16 %v203
      %v407 = vunpack.c.l.b16 %v204
      %v408 = vunpack.c.l.b16 %v205
      %v409 = vunpack.c.h.b16 %v205
      %v410 = vunpack.c.l.b16 %v206
      %v411 = vunpack.c.l.b16 %v207
      %v412 = vunpack.c.h.b16 %v207
      %v413 = vunpack.c.l.b16 %v208
      %v414 = vunpack.c.l.b16 %v209
      %v415 = vunpack.c.h.b16 %v209
      %v416 = vunpack.c.l.b16 %v210
      %v417 = vunpack.c.l.b16 %v211
      %v418 = vunpack.c.h.b16 %v211
      %v419 = vunpack.c.l.b16 %v212
      %v420 = vunpack.c.l.b16 %v213
      %v421 = vunpack.c.h.b16 %v213
      %v422 = vunpack.c.l.b16 %v214
      %v423 = vpack.c.b16 %v330, %v327
      %v424 = vpack.c.b16 %v331, %v328
      %v425 = vpack.c.b16 %v332, %v329
      %v426 = vpack.c.b16 %v336, %v333
      %v427 = vpack.c.b16 %v337, %v334
      %v428 = vpack.c.b16 %v338, %v335
      %v429 = vpack.c.b16 %v342, %v339
      %v430 = vpack.c.b16 %v343, %v340
      %v431 = vpack.c.b16 %v344, %v341
      %v432 = vpack.c.b16 %v348, %v345
      %v433 = vpack.c.b16 %v349, %v346
      %v434 = vpack.c.b16 %v350, %v347
      %v435 = vpack.c.b16 %v354, %v351
      %v436 = vpack.c.b16 %v355, %v352
      %v437 = vpack.c.b16 %v356, %v353
      %v438 = vpack.c.b16 %v360, %v357
      %v439 = vpack.c.b16 %v361, %v358
      %v440 = vpack.c.b16 %v362, %v359
      %v441 = vpack.c.b16 %v366, %v363
      %v442 = vpack.c.b16 %v367, %v364
      %v443 = vpack.c.b16 %v368, %v365
      %v444 = vpack.c.b16 %v372, %v369
      %v445 = vpack.c.b16 %v373, %v370
      %v446 = vpack.c.b16 %v374, %v371
      %v447 = vpack.c.b16 %v378, %v375
      %v448 = vpack.c.b16 %v379, %v376
      %v449 = vpack.c.b16 %v380, %v377
      %v450 = vpack.c.b16 %v384, %v381
      %v451 = vpack.c.b16 %v385, %v382
      %v452 = vpack.c.b16 %v386, %v383
      %v453 = vpack.c.b16 %v390, %v387
      %v454 = vpack.c.b16 %v391, %v388
      %v455 = vpack.c.b16 %v392, %v389
      %v456 = vpack.c.b16 %v396, %v393
      %v457 = vpack.c.b16 %v397, %v394
      %v458 = vpack.c.b16 %v398, %v395
      %v459 = vpack.c.b16 %v402, %v399
      %v460 = vpack.c.b16 %v403, %v400
      %v461 = vpack.c.b16 %v404, %v401
      %v462 = vpack.c.b16 %v408, %v405
      %v463 = vpack.c.b16 %v409, %v406
      %v464 = vpack.c.b16 %v410, %v407
      %v465 = vpack.c.b16 %v414, %v411
      %v466 = vpack.c.b16 %v415, %v412
      %v467 = vpack.c.b16 %v416, %v413
      %v468 = vpack.c.b16 %v420, %v417
      %v469 = vpack.c.b16 %v421, %v418
      %v470 = vpack.c.b16 %v422, %v419
      %v567 = vunpack.c.l.b16 %v215
      %v568 = vunpack.c.l.b16 %v216
      %v569 = vunpack.c.l.b16 %v217
      %v570 = vunpack.c.l.b16 %v218
      %v571 = vunpack.c.l.b16 %v219
      %v572 = vunpack.c.l.b16 %v220
      %v573 = vunpack.c.l.b16 %v221
      %v574 = vunpack.c.l.b16 %v222
      %v575 = vunpack.c.l.b16 %v223
      %v576 = vunpack.c.l.b16 %v224
      %v577 = vunpack.c.l.b16 %v225
      %v578 = vunpack.c.l.b16 %v226
      %v579 = vunpack.c.l.b16 %v227
      %v580 = vunpack.c.l.b16 %v228
      %v581 = vunpack.c.l.b16 %v229
      %v582 = vunpack.c.l.b16 %v230
      %v583 = vunpack.c.l.b16 %v231
      %v584 = vunpack.c.l.b16 %v232
      %v585 = vunpack.c.l.b16 %v233
      %v586 = vunpack.c.l.b16 %v234
      %v587 = vunpack.c.l.b16 %v235
      %v588 = vunpack.c.l.b16 %v236
      %v589 = vunpack.c.l.b16 %v237
      %v590 = vunpack.c.l.b16 %v238
      %v591 = vunpack.c.l.b16 %v239
      %v592 = vunpack.c.l.b16 %v240
      %v593 = vunpack.c.l.b16 %v241
      %v594 = vunpack.c.l.b16 %v242
      %v595 = vunpack.c.l.b16 %v243
      %v596 = vunpack.c.l.b16 %v244
      %v597 = vunpack.c.l.b16 %v245
      %v598 = vunpack.c.l.b16 %v246
      %v599 = vunpack.c.l.b16 %v247
      %v600 = vunpack.c.l.b16 %v248
      %v601 = vunpack.c.l.b16 %v249
      %v602 = vunpack.c.l.b16 %v250
      %v603 = vunpack.c.l.b16 %v251
      %v604 = vunpack.c.l.b16 %v252
      %v605 = vunpack.c.l.b16 %v253
      %v606 = vunpack.c.l.b16 %v254
      %v607 = vunpack.c.l.b16 %v255
      %v608 = vunpack.c.l.b16 %v256
      %v609 = vunpack.c.l.b16 %v257
      %v610 = vunpack.c.l.b16 %v258
      %v611 = vunpack.c.l.b16 %v259
      %v612 = vunpack.c.l.b16 %v260
      %v613 = vunpack.c.l.b16 %v261
      %v614 = vunpack.c.l.b16 %v262
      %v615 = vpack.c.b16 %v568, %v567
      %v616 = vpack.c.b16 %v570, %v569
      %v617 = vpack.c.b16 %v572, %v571
      %v618 = vpack.c.b16 %v574, %v573
      %v619 = vpack.c.b16 %v576, %v575
      %v620 = vpack.c.b16 %v578, %v577
      %v621 = vpack.c.b16 %v580, %v579
      %v622 = vpack.c.b16 %v582, %v581
      %v623 = vpack.c.b16 %v584, %v583
      %v624 = vpack.c.b16 %v586, %v585
      %v625 = vpack.c.b16 %v588, %v587
      %v626 = vpack.c.b16 %v590, %v589
      %v627 = vpack.c.b16 %v592, %v591
      %v628 = vpack.c.b16 %v594, %v593
      %v629 = vpack.c.b16 %v596, %v595
      %v630 = vpack.c.b16 %v598, %v597
      %v631 = vpack.c.b16 %v600, %v599
      %v632 = vpack.c.b16 %v602, %v601
      %v633 = vpack.c.b16 %v604, %v603
      %v634 = vpack.c.b16 %v606, %v605
      %v635 = vpack.c.b16 %v608, %v607
      %v636 = vpack.c.b16 %v610, %v609
      %v637 = vpack.c.b16 %v612, %v611
      %v638 = vpack.c.b16 %v614, %v613
      %663 = vmatprep.subr.bf16.mxu0 0
      %664 = vmatpush1.bf16.msra.mxu0 %v622
      %665 = vmatprep.subr.bf16.mxu0 0
      %666 = vmatpush1.bf16.msra.mxu0 %v621
      %667 = vmatprep.subr.bf16.mxu0 0
      %668 = vmatpush1.bf16.msra.mxu0 %v620
      %669 = vmatprep.subr.bf16.mxu0 0
      %670 = vmatpush1.bf16.msra.mxu0 %v619
      %671 = vmatprep.subr.bf16.mxu0 0
      %672 = vmatpush1.bf16.msra.mxu0 %v618
      %673 = vmatprep.subr.bf16.mxu0 0
      %674 = vmatpush1.bf16.msra.mxu0 %v617
      %675 = vmatprep.subr.bf16.mxu0 0
      %676 = vmatpush1.bf16.msra.mxu0 %v616
      %677 = vmatprep.subr.bf16.mxu0 0
      %678 = vmatpush1.bf16.msra.mxu0 %v615
      %679 = vmatprep.subr.bf16.mxu0 0
      %680 = vmatpush2.bf16.msra.mxu0 %v630
      %681 = vmatprep.subr.bf16.mxu0 0
      %682 = vmatpush2.bf16.msra.mxu0 %v629
      %683 = vmatprep.subr.bf16.mxu0 0
      %684 = vmatpush2.bf16.msra.mxu0 %v628
      %685 = vmatprep.subr.bf16.mxu0 0
      %686 = vmatpush2.bf16.msra.mxu0 %v627
      %687 = vmatprep.subr.bf16.mxu0 0
      %688 = vmatpush2.bf16.msra.mxu0 %v626
      %689 = vmatprep.subr.bf16.mxu0 0
      %690 = vmatpush2.bf16.msra.mxu0 %v625
      %691 = vmatprep.subr.bf16.mxu0 0
      %692 = vmatpush2.bf16.msra.mxu0 %v624
      %693 = vmatprep.subr.bf16.mxu0 0
      %694 = vmatpush2.bf16.msra.mxu0 %v623
      %695 = vmatprep.mubr.bf16.mxu0 %v424
      %696 = vmatmul.mubr.bf16.gmra.mxu0 %v423
      %v697 = vpop.f32.mrf.mxu0
      %v698 = vadd.f32 0.0, %v697
      %v699 = vpop.f32.mrf.mxu0
      %v700 = vpop.f32.mrf.mxu0
      %v701 = vadd.f32 0.0, %v700
      %v702 = vpop.f32.mrf.mxu0
      %703 = vmatprep.mubr.bf16.mxu0 %v427
      %704 = vmatmul.mubr.bf16.gmra.mxu0 %v426
      %v705 = vpop.f32.mrf.mxu0
      %v706 = vadd.f32 0.0, %v705
      %v707 = vpop.f32.mrf.mxu0
      %v708 = vpop.f32.mrf.mxu0
      %v709 = vadd.f32 0.0, %v708
      %v710 = vpop.f32.mrf.mxu0
      %711 = vmatprep.mubr.bf16.mxu0 %v430
      %712 = vmatmul.mubr.bf16.gmra.mxu0 %v429
      %v713 = vpop.f32.mrf.mxu0
      %v714 = vadd.f32 0.0, %v713
      %v715 = vpop.f32.mrf.mxu0
      %v716 = vpop.f32.mrf.mxu0
      %v717 = vadd.f32 0.0, %v716
      %v718 = vpop.f32.mrf.mxu0
      %719 = vmatprep.mubr.bf16.mxu0 %v433
      %720 = vmatmul.mubr.bf16.gmra.mxu0 %v432
      %v721 = vpop.f32.mrf.mxu0
      %v722 = vadd.f32 0.0, %v721
      %v723 = vpop.f32.mrf.mxu0
      %v724 = vpop.f32.mrf.mxu0
      %v725 = vadd.f32 0.0, %v724
      %v726 = vpop.f32.mrf.mxu0
      %727 = vmatprep.mubr.bf16.mxu0 %v436
      %728 = vmatmul.mubr.bf16.gmra.mxu0 %v435
      %v729 = vpop.f32.mrf.mxu0
      %v730 = vadd.f32 0.0, %v729
      %v731 = vpop.f32.mrf.mxu0
      %v732 = vpop.f32.mrf.mxu0
      %v733 = vadd.f32 0.0, %v732
      %v734 = vpop.f32.mrf.mxu0
      %735 = vmatprep.mubr.bf16.mxu0 %v439
      %736 = vmatmul.mubr.bf16.gmra.mxu0 %v438
      %v737 = vpop.f32.mrf.mxu0
      %v738 = vadd.f32 0.0, %v737
      %v739 = vpop.f32.mrf.mxu0
      %v740 = vpop.f32.mrf.mxu0
      %v741 = vadd.f32 0.0, %v740
      %v742 = vpop.f32.mrf.mxu0
      %743 = vmatprep.mubr.bf16.mxu0 %v442
      %744 = vmatmul.mubr.bf16.gmra.mxu0 %v441
      %v745 = vpop.f32.mrf.mxu0
      %v746 = vadd.f32 0.0, %v745
      %v747 = vpop.f32.mrf.mxu0
      %v748 = vpop.f32.mrf.mxu0
      %v749 = vadd.f32 0.0, %v748
      %v750 = vpop.f32.mrf.mxu0
      %751 = vmatprep.mubr.bf16.mxu0 %v445
      %752 = vmatmul.mubr.bf16.gmra.mxu0 %v444
      %v753 = vpop.f32.mrf.mxu0
      %v754 = vadd.f32 0.0, %v753
      %v755 = vpop.f32.mrf.mxu0
      %v756 = vpop.f32.mrf.mxu0
      %v757 = vadd.f32 0.0, %v756
      %v758 = vpop.f32.mrf.mxu0
      %759 = vmatprep.mubr.bf16.mxu0 %v448
      %760 = vmatmul.mubr.bf16.gmra.mxu0 %v447
      %v761 = vpop.f32.mrf.mxu0
      %v762 = vadd.f32 0.0, %v761
      %v763 = vpop.f32.mrf.mxu0
      %v764 = vpop.f32.mrf.mxu0
      %v765 = vadd.f32 0.0, %v764
      %v766 = vpop.f32.mrf.mxu0
      %767 = vmatprep.mubr.bf16.mxu0 %v451
      %768 = vmatmul.mubr.bf16.gmra.mxu0 %v450
      %v769 = vpop.f32.mrf.mxu0
      %v770 = vadd.f32 0.0, %v769
      %v771 = vpop.f32.mrf.mxu0
      %v772 = vpop.f32.mrf.mxu0
      %v773 = vadd.f32 0.0, %v772
      %v774 = vpop.f32.mrf.mxu0
      %775 = vmatprep.mubr.bf16.mxu0 %v454
      %776 = vmatmul.mubr.bf16.gmra.mxu0 %v453
      %v777 = vpop.f32.mrf.mxu0
      %v778 = vadd.f32 0.0, %v777
      %v779 = vpop.f32.mrf.mxu0
      %v780 = vpop.f32.mrf.mxu0
      %v781 = vadd.f32 0.0, %v780
      %v782 = vpop.f32.mrf.mxu0
      %783 = vmatprep.mubr.bf16.mxu0 %v457
      %784 = vmatmul.mubr.bf16.gmra.mxu0 %v456
      %v785 = vpop.f32.mrf.mxu0
      %v786 = vadd.f32 0.0, %v785
      %v787 = vpop.f32.mrf.mxu0
      %v788 = vpop.f32.mrf.mxu0
      %v789 = vadd.f32 0.0, %v788
      %v790 = vpop.f32.mrf.mxu0
      %791 = vmatprep.mubr.bf16.mxu0 %v460
      %792 = vmatmul.mubr.bf16.gmra.mxu0 %v459
      %v793 = vpop.f32.mrf.mxu0
      %v794 = vadd.f32 0.0, %v793
      %v795 = vpop.f32.mrf.mxu0
      %v796 = vpop.f32.mrf.mxu0
      %v797 = vadd.f32 0.0, %v796
      %v798 = vpop.f32.mrf.mxu0
      %799 = vmatprep.mubr.bf16.mxu0 %v463
      %800 = vmatmul.mubr.bf16.gmra.mxu0 %v462
      %v801 = vpop.f32.mrf.mxu0
      %v802 = vadd.f32 0.0, %v801
      %v803 = vpop.f32.mrf.mxu0
      %v804 = vpop.f32.mrf.mxu0
      %v805 = vadd.f32 0.0, %v804
      %v806 = vpop.f32.mrf.mxu0
      %807 = vmatprep.mubr.bf16.mxu0 %v466
      %808 = vmatmul.mubr.bf16.gmra.mxu0 %v465
      %v809 = vpop.f32.mrf.mxu0
      %v810 = vadd.f32 0.0, %v809
      %v811 = vpop.f32.mrf.mxu0
      %v812 = vpop.f32.mrf.mxu0
      %v813 = vadd.f32 0.0, %v812
      %v814 = vpop.f32.mrf.mxu0
      %815 = vmatprep.mubr.bf16.mxu0 %v469
      %816 = vmatmul.mubr.bf16.gmra.mxu0 %v468
      %v817 = vpop.f32.mrf.mxu0
      %v818 = vadd.f32 0.0, %v817
      %v819 = vpop.f32.mrf.mxu0
      %v820 = vpop.f32.mrf.mxu0
      %v821 = vadd.f32 0.0, %v820
      %v822 = vpop.f32.mrf.mxu0
      %823 = vdwg.mxu0
      %824 = vmatprep.subr.bf16.mxu0 0
      %825 = vmatpush1.bf16.msra.mxu0 %v638
      %826 = vmatprep.subr.bf16.mxu0 0
      %827 = vmatpush1.bf16.msra.mxu0 %v637
      %828 = vmatprep.subr.bf16.mxu0 0
      %829 = vmatpush1.bf16.msra.mxu0 %v636
      %830 = vmatprep.subr.bf16.mxu0 0
      %831 = vmatpush1.bf16.msra.mxu0 %v635
      %832 = vmatprep.subr.bf16.mxu0 0
      %833 = vmatpush1.bf16.msra.mxu0 %v634
      %834 = vmatprep.subr.bf16.mxu0 0
      %835 = vmatpush1.bf16.msra.mxu0 %v633
      %836 = vmatprep.subr.bf16.mxu0 0
      %837 = vmatpush1.bf16.msra.mxu0 %v632
      %838 = vmatprep.subr.bf16.mxu0 0
      %839 = vmatpush1.bf16.msra.mxu0 %v631
      %840 = vmatprep.subr.bf16.mxu0 0
      %841 = vmatpush2.bf16.msra.mxu0 0
      %842 = vmatprep.subr.bf16.mxu0 0
      %843 = vmatpush2.bf16.msra.mxu0 0
      %844 = vmatprep.subr.bf16.mxu0 0
      %845 = vmatpush2.bf16.msra.mxu0 0
      %846 = vmatprep.subr.bf16.mxu0 0
      %847 = vmatpush2.bf16.msra.mxu0 0
      %848 = vmatprep.subr.bf16.mxu0 0
      %849 = vmatpush2.bf16.msra.mxu0 0
      %850 = vmatprep.subr.bf16.mxu0 0
      %851 = vmatpush2.bf16.msra.mxu0 0
      %852 = vmatprep.subr.bf16.mxu0 0
      %853 = vmatpush2.bf16.msra.mxu0 0
      %854 = vmatprep.subr.bf16.mxu0 0
      %855 = vmatpush2.bf16.msra.mxu0 0
      %856 = vmatprep.mubr.bf16.mxu0 0
      %857 = vmatmul.mubr.bf16.gmra.mxu0 %v425
      %v858 = vpop.f32.mrf.mxu0
      %v859 = vadd.f32 %v698, %v858
      %v860 = vpop.f32.mrf.mxu0
      %v861 = vpop.f32.mrf.mxu0
      %v862 = vadd.f32 %v701, %v861
      %v863 = vpop.f32.mrf.mxu0
      %864 = vmatprep.mubr.bf16.mxu0 0
      %865 = vmatmul.mubr.bf16.gmra.mxu0 %v428
      %v866 = vpop.f32.mrf.mxu0
      %v867 = vadd.f32 %v706, %v866
      %v868 = vpop.f32.mrf.mxu0
      %v869 = vpop.f32.mrf.mxu0
      %v870 = vadd.f32 %v709, %v869
      %v871 = vpop.f32.mrf.mxu0
      %872 = vmatprep.mubr.bf16.mxu0 0
      %873 = vmatmul.mubr.bf16.gmra.mxu0 %v431
      %v874 = vpop.f32.mrf.mxu0
      %v875 = vadd.f32 %v714, %v874
      %v876 = vpop.f32.mrf.mxu0
      %v877 = vpop.f32.mrf.mxu0
      %v878 = vadd.f32 %v717, %v877
      %v879 = vpop.f32.mrf.mxu0
      %880 = vmatprep.mubr.bf16.mxu0 0
      %881 = vmatmul.mubr.bf16.gmra.mxu0 %v434
      %v882 = vpop.f32.mrf.mxu0
      %v883 = vadd.f32 %v722, %v882
      %v884 = vpop.f32.mrf.mxu0
      %v885 = vpop.f32.mrf.mxu0
      %v886 = vadd.f32 %v725, %v885
      %v887 = vpop.f32.mrf.mxu0
      %888 = vmatprep.mubr.bf16.mxu0 0
      %889 = vmatmul.mubr.bf16.gmra.mxu0 %v437
      %v890 = vpop.f32.mrf.mxu0
      %v891 = vadd.f32 %v730, %v890
      %v892 = vpop.f32.mrf.mxu0
      %v893 = vpop.f32.mrf.mxu0
      %v894 = vadd.f32 %v733, %v893
      %v895 = vpop.f32.mrf.mxu0
      %896 = vmatprep.mubr.bf16.mxu0 0
      %897 = vmatmul.mubr.bf16.gmra.mxu0 %v440
      %v898 = vpop.f32.mrf.mxu0
      %v899 = vadd.f32 %v738, %v898
      %v900 = vpop.f32.mrf.mxu0
      %v901 = vpop.f32.mrf.mxu0
      %v902 = vadd.f32 %v741, %v901
      %v903 = vpop.f32.mrf.mxu0
      %904 = vmatprep.mubr.bf16.mxu0 0
      %905 = vmatmul.mubr.bf16.gmra.mxu0 %v443
      %v906 = vpop.f32.mrf.mxu0
      %v907 = vadd.f32 %v746, %v906
      %v908 = vpop.f32.mrf.mxu0
      %v909 = vpop.f32.mrf.mxu0
      %v910 = vadd.f32 %v749, %v909
      %v911 = vpop.f32.mrf.mxu0
      %912 = vmatprep.mubr.bf16.mxu0 0
      %913 = vmatmul.mubr.bf16.gmra.mxu0 %v446
      %v914 = vpop.f32.mrf.mxu0
      %v915 = vadd.f32 %v754, %v914
      %v916 = vpop.f32.mrf.mxu0
      %v917 = vpop.f32.mrf.mxu0
      %v918 = vadd.f32 %v757, %v917
      %v919 = vpop.f32.mrf.mxu0
      %920 = vmatprep.mubr.bf16.mxu0 0
      %921 = vmatmul.mubr.bf16.gmra.mxu0 %v449
      %v922 = vpop.f32.mrf.mxu0
      %v923 = vadd.f32 %v762, %v922
      %v924 = vpop.f32.mrf.mxu0
      %v925 = vpop.f32.mrf.mxu0
      %v926 = vadd.f32 %v765, %v925
      %v927 = vpop.f32.mrf.mxu0
      %928 = vmatprep.mubr.bf16.mxu0 0
      %929 = vmatmul.mubr.bf16.gmra.mxu0 %v452
      %v930 = vpop.f32.mrf.mxu0
      %v931 = vadd.f32 %v770, %v930
      %v932 = vpop.f32.mrf.mxu0
      %v933 = vpop.f32.mrf.mxu0
      %v934 = vadd.f32 %v773, %v933
      %v935 = vpop.f32.mrf.mxu0
      %936 = vmatprep.mubr.bf16.mxu0 0
      %937 = vmatmul.mubr.bf16.gmra.mxu0 %v455
      %v938 = vpop.f32.mrf.mxu0
      %v939 = vadd.f32 %v778, %v938
      %v940 = vpop.f32.mrf.mxu0
      %v941 = vpop.f32.mrf.mxu0
      %v942 = vadd.f32 %v781, %v941
      %v943 = vpop.f32.mrf.mxu0
      %944 = vmatprep.mubr.bf16.mxu0 0
      %945 = vmatmul.mubr.bf16.gmra.mxu0 %v458
      %v946 = vpop.f32.mrf.mxu0
      %v947 = vadd.f32 %v786, %v946
      %v948 = vpop.f32.mrf.mxu0
      %v949 = vpop.f32.mrf.mxu0
      %v950 = vadd.f32 %v789, %v949
      %v951 = vpop.f32.mrf.mxu0
      %952 = vmatprep.mubr.bf16.mxu0 0
      %953 = vmatmul.mubr.bf16.gmra.mxu0 %v461
      %v954 = vpop.f32.mrf.mxu0
      %v955 = vadd.f32 %v794, %v954
      %v956 = vpop.f32.mrf.mxu0
      %v957 = vpop.f32.mrf.mxu0
      %v958 = vadd.f32 %v797, %v957
      %v959 = vpop.f32.mrf.mxu0
      %960 = vmatprep.mubr.bf16.mxu0 0
      %961 = vmatmul.mubr.bf16.gmra.mxu0 %v464
      %v962 = vpop.f32.mrf.mxu0
      %v963 = vadd.f32 %v802, %v962
      %v964 = vpop.f32.mrf.mxu0
      %v965 = vpop.f32.mrf.mxu0
      %v966 = vadd.f32 %v805, %v965
      %v967 = vpop.f32.mrf.mxu0
      %968 = vmatprep.mubr.bf16.mxu0 0
      %969 = vmatmul.mubr.bf16.gmra.mxu0 %v467
      %v970 = vpop.f32.mrf.mxu0
      %v971 = vadd.f32 %v810, %v970
      %v972 = vpop.f32.mrf.mxu0
      %v973 = vpop.f32.mrf.mxu0
      %v974 = vadd.f32 %v813, %v973
      %v975 = vpop.f32.mrf.mxu0
      %976 = vmatprep.mubr.bf16.mxu0 0
      %977 = vmatmul.mubr.bf16.gmra.mxu0 %v470
      %v978 = vpop.f32.mrf.mxu0
      %v979 = vadd.f32 %v818, %v978
      %v980 = vpop.f32.mrf.mxu0
      %v981 = vpop.f32.mrf.mxu0
      %v982 = vadd.f32 %v821, %v981
      %v983 = vpop.f32.mrf.mxu0
      %984 = vdwg.mxu0
      %985 = vst [vmem:[%s148] sm:$0xff] %v859
      %986 = vst [vmem:[%s148 + $0x8] sm:$0xff] %v862
      %987 = vst [vmem:[%s148 + $0x10] sm:$0xff] %v867
      %988 = vst [vmem:[%s148 + $0x18] sm:$0xff] %v870
      %989 = vst [vmem:[%s148 + $0x20] sm:$0xff] %v875
      %990 = vst [vmem:[%s148 + $0x28] sm:$0xff] %v878
      %991 = vst [vmem:[%s148 + $0x30] sm:$0xff] %v883
      %992 = vst [vmem:[%s148 + $0x38] sm:$0xff] %v886
      %993 = vst [vmem:[%s148 + $0x40] sm:$0xff] %v891
      %994 = vst [vmem:[%s148 + $0x48] sm:$0xff] %v894
      %995 = vst [vmem:[%s148 + $0x50] sm:$0xff] %v899
      %996 = vst [vmem:[%s148 + $0x58] sm:$0xff] %v902
      %997 = vst [vmem:[%s148 + $0x60] sm:$0xff] %v907
      %998 = vst [vmem:[%s148 + $0x68] sm:$0xff] %v910
      %999 = vst [vmem:[%s148 + $0x70] sm:$0xff] %v915
      %1000 = vst [vmem:[%s148 + $0x78] sm:$0xff] %v918
      %1001 = vst [vmem:[%s148 + $0x80] sm:$0xff] %v923
      %1002 = vst [vmem:[%s148 + $0x88] sm:$0xff] %v926
      %1003 = vst [vmem:[%s148 + $0x90] sm:$0xff] %v931
      %1004 = vst [vmem:[%s148 + $0x98] sm:$0xff] %v934
      %1005 = vst [vmem:[%s148 + $0xa0] sm:$0xff] %v939
      %1006 = vst [vmem:[%s148 + $0xa8] sm:$0xff] %v942
      %1007 = vst [vmem:[%s148 + $0xb0] sm:$0xff] %v947
      %1008 = vst [vmem:[%s148 + $0xb8] sm:$0xff] %v950
      %1009 = vst [vmem:[%s148 + $0xc0] sm:$0xff] %v955
      %1010 = vst [vmem:[%s148 + $0xc8] sm:$0xff] %v958
      %1011 = vst [vmem:[%s148 + $0xd0] sm:$0xff] %v963
      %1012 = vst [vmem:[%s148 + $0xd8] sm:$0xff] %v966
      %1013 = vst [vmem:[%s148 + $0xe0] sm:$0xff] %v971
      %1014 = vst [vmem:[%s148 + $0xe8] sm:$0xff] %v974
      %1015 = vst [vmem:[%s148 + $0xf0] sm:$0xff] %v979
      %1016 = vst [vmem:[%s148 + $0xf8] sm:$0xff] %v982
      %s1017 = smul.u32 32, %s13
      %p1018 = scmp.lt.s32.totalorder %s1017, 63
      %s1019 = scalar_select %p1018, %s1017, 63
      %s1020 = smul.addr %s1019, 8
      %s1021 = scalar_lea.vmem %s2, %s1020
      // Predicated region
      $region29: #{resnet_forward.44} parent=27 // pred_check
        %p1022 = pneg %p78
      $region30: #{resnet_forward.44} parent=27 // pred_check_branch
        %1024 = sbr.rel (%p1022) target = $region32
      $region31: #{resnet_forward.44} parent=27 // pred_region
        %s1025 = smul.u32 32, %s13
      $region32: #{resnet_forward.44} parent=27 // pred_fallthru
        _
    $region28: #{resnet_forward.44} parent=5 // pred_fallthru
      _
    %p1026 = scmp.le.s32.totalorder 2, %s8
    // Predicated region
    $region33: #{resnet_forward.44} parent=5 // pred_check
      %p1027 = pneg %p1026
    $region34: #{resnet_forward.44} parent=5 // pred_check_branch
      %1029 = sbr.rel (%p1027) target = $region36
    $region35: #{resnet_forward.44} parent=5 // pred_region
      %s1030 = ssub.s32 %s8, 2
      // Predicated region
      $region37: #{resnet_forward.44} parent=35 // pred_check
        %p1031 = pneg %p84
      $region38: #{resnet_forward.44} parent=35 // pred_check_branch
        %1033 = sbr.rel (%p1031) target = $region40
      $region39: #{resnet_forward.44} parent=35 // pred_region
        %s1034 = smul.u32 32, %s14
        %p1035 = scmp.lt.s32.totalorder %s1034, 63
        %s1036 = scalar_select %p1035, %s1034, 63
        %s1037 = smul.addr %s1036, 8
        %s1038 = scalar_lea.vmem %s2, %s1037
      $region40: #{resnet_forward.44} parent=35 // pred_fallthru
        _
    $region36: #{resnet_forward.44} parent=5 // pred_fallthru
      _
  $region6: #{resnet_forward.44} parent=0 // loop_footer
    %s12 = sadd.s32 1, %s8
  $region7: #{resnet_forward.44} parent=0 // loop_footer_branch
    %7 = sbr.rel target = $region3
  $region8: #{resnet_forward.44} parent=0 // loop_exit
    _

// kernel: resnet_forward.47
$region0: #{resnet_forward.47}
  #allocation0 [shape = 'u32[]', space=smem, size = 0x4, offset = 0x4, fixed_abs, tag = 'smem constant byte address 0x4 - core index']
  #allocation1 [shape = 'u32[144,128]{1,0:T(1,128)}', space=vmem, size = 0x12000, scoped, tag = 'internal scratch']
  %s0 = inlined_call_operand.vmem [shape: f32[128,128], index: 0, kind: input, shape index: {}]
  %s1 = inlined_call_operand.vmem [shape: f32[1,128], index: 1, kind: input, shape index: {}]
  %s2 = inlined_call_operand.vmem [shape: f32[1,128], index: 2, kind: input, shape index: {}]
  %s3 = inlined_call_operand.vmem [shape: f32[128,128], index: 3, kind: input, shape index: {}]
  %s4 = inlined_call_operand.vmem [shape: f32[128,128], index: 4, kind: output, shape index: {}]
  %s5 = sld [smem:[#allocation0]]
  $region26: #{resnet_forward.47} parent=0
    _
  %s7 = ssub.s32 1, %s5
  %s8 = scalar_select 0, %s7, %s5
  // Predicated region
  $region2: #{resnet_forward.47} parent=0 // pred_check
    _
  $region3: #{resnet_forward.47} parent=0 // pred_check_branch
    %10 = sbr.rel (0) target = $region5
  $region4: #{resnet_forward.47} parent=0 // pred_region
    _
  $region5: #{resnet_forward.47} parent=0 // pred_fallthru
    _
  // Predicated region
  $region6: #{resnet_forward.47} parent=0 // pred_check
    _
  $region7: #{resnet_forward.47} parent=0 // pred_check_branch
    %12 = sbr.rel (0) target = $region9
  $region8: #{resnet_forward.47} parent=0 // pred_region
    _
  $region9: #{resnet_forward.47} parent=0 // pred_fallthru
    _
  // Predicated region
  $region10: #{resnet_forward.47} parent=0 // pred_check
    _
  $region11: #{resnet_forward.47} parent=0 // pred_check_branch
    %14 = sbr.rel (0) target = $region13
  $region12: #{resnet_forward.47} parent=0 // pred_region
    _
  $region13: #{resnet_forward.47} parent=0 // pred_fallthru
    _
  // Predicated region
  $region14: #{resnet_forward.47} parent=0 // pred_check
    _
  $region15: #{resnet_forward.47} parent=0 // pred_check_branch
    %16 = sbr.rel (0) target = $region17
  $region16: #{resnet_forward.47} parent=0 // pred_region
    _
  $region17: #{resnet_forward.47} parent=0 // pred_fallthru
    _
  %v17 = vld [vmem:[%s0] sm:$0xff]
  %v18 = vld [vmem:[%s0 + $0x8] sm:$0xff]
  %v19 = vld [vmem:[%s0 + $0x10] sm:$0xff]
  %v20 = vld [vmem:[%s0 + $0x18] sm:$0xff]
  %v21 = vld [vmem:[%s0 + $0x20] sm:$0xff]
  %v22 = vld [vmem:[%s0 + $0x28] sm:$0xff]
  %v23 = vld [vmem:[%s0 + $0x30] sm:$0xff]
  %v24 = vld [vmem:[%s0 + $0x38] sm:$0xff]
  %v25 = vld [vmem:[%s0 + $0x40] sm:$0xff]
  %v26 = vld [vmem:[%s0 + $0x48] sm:$0xff]
  %v27 = vld [vmem:[%s0 + $0x50] sm:$0xff]
  %v28 = vld [vmem:[%s0 + $0x58] sm:$0xff]
  %v29 = vld [vmem:[%s0 + $0x60] sm:$0xff]
  %v30 = vld [vmem:[%s0 + $0x68] sm:$0xff]
  %v31 = vld [vmem:[%s0 + $0x70] sm:$0xff]
  %v32 = vld [vmem:[%s0 + $0x78] sm:$0xff]
  %v33 = vld [vmem:[%s1] sm:$0x1]
  %v35 = vlaneseq
  %v36 = vshrl.u32 %v35, 7
  %v37 = vsub.s32 0, %v36
  %v38 = vrot.slane %v33, %v37
  %v40 = vmul.f32 %v17, %v38
  %v41 = vmul.f32 %v18, %v38
  %v42 = vmul.f32 %v19, %v38
  %v43 = vmul.f32 %v20, %v38
  %v44 = vmul.f32 %v21, %v38
  %v45 = vmul.f32 %v22, %v38
  %v46 = vmul.f32 %v23, %v38
  %v47 = vmul.f32 %v24, %v38
  %v48 = vmul.f32 %v25, %v38
  %v49 = vmul.f32 %v26, %v38
  %v50 = vmul.f32 %v27, %v38
  %v51 = vmul.f32 %v28, %v38
  %v52 = vmul.f32 %v29, %v38
  %v53 = vmul.f32 %v30, %v38
  %v54 = vmul.f32 %v31, %v38
  %v55 = vmul.f32 %v32, %v38
  %v56 = vld [vmem:[%s2] sm:$0x1]
  %v58 = vlaneseq
  %v59 = vshrl.u32 %v58, 7
  %v60 = vsub.s32 0, %v59
  %v61 = vrot.slane %v56, %v60
  %v63 = vadd.f32 %v40, %v61
  %v64 = vadd.f32 %v41, %v61
  %v65 = vadd.f32 %v42, %v61
  %v66 = vadd.f32 %v43, %v61
  %v67 = vadd.f32 %v44, %v61
  %v68 = vadd.f32 %v45, %v61
  %v69 = vadd.f32 %v46, %v61
  %v70 = vadd.f32 %v47, %v61
  %v71 = vadd.f32 %v48, %v61
  %v72 = vadd.f32 %v49, %v61
  %v73 = vadd.f32 %v50, %v61
  %v74 = vadd.f32 %v51, %v61
  %v75 = vadd.f32 %v52, %v61
  %v76 = vadd.f32 %v53, %v61
  %v77 = vadd.f32 %v54, %v61
  %v78 = vadd.f32 %v55, %v61
  %v79 = vld [vmem:[%s3] sm:$0xff]
  %v80 = vld [vmem:[%s3 + $0x8] sm:$0xff]
  %v81 = vld [vmem:[%s3 + $0x10] sm:$0xff]
  %v82 = vld [vmem:[%s3 + $0x18] sm:$0xff]
  %v83 = vld [vmem:[%s3 + $0x20] sm:$0xff]
  %v84 = vld [vmem:[%s3 + $0x28] sm:$0xff]
  %v85 = vld [vmem:[%s3 + $0x30] sm:$0xff]
  %v86 = vld [vmem:[%s3 + $0x38] sm:$0xff]
  %v87 = vld [vmem:[%s3 + $0x40] sm:$0xff]
  %v88 = vld [vmem:[%s3 + $0x48] sm:$0xff]
  %v89 = vld [vmem:[%s3 + $0x50] sm:$0xff]
  %v90 = vld [vmem:[%s3 + $0x58] sm:$0xff]
  %v91 = vld [vmem:[%s3 + $0x60] sm:$0xff]
  %v92 = vld [vmem:[%s3 + $0x68] sm:$0xff]
  %v93 = vld [vmem:[%s3 + $0x70] sm:$0xff]
  %v94 = vld [vmem:[%s3 + $0x78] sm:$0xff]
  %v95 = vadd.f32 %v63, %v79
  %v96 = vadd.f32 %v64, %v80
  %v97 = vadd.f32 %v65, %v81
  %v98 = vadd.f32 %v66, %v82
  %v99 = vadd.f32 %v67, %v83
  %v100 = vadd.f32 %v68, %v84
  %v101 = vadd.f32 %v69, %v85
  %v102 = vadd.f32 %v70, %v86
  %v103 = vadd.f32 %v71, %v87
  %v104 = vadd.f32 %v72, %v88
  %v105 = vadd.f32 %v73, %v89
  %v106 = vadd.f32 %v74, %v90
  %v107 = vadd.f32 %v75, %v91
  %v108 = vadd.f32 %v76, %v92
  %v109 = vadd.f32 %v77, %v93
  %v110 = vadd.f32 %v78, %v94
  %v111 = vmax.f32 %v95, 0.0
  %v112 = vmax.f32 %v96, 0.0
  %v113 = vmax.f32 %v97, 0.0
  %v114 = vmax.f32 %v98, 0.0
  %v115 = vmax.f32 %v99, 0.0
  %v116 = vmax.f32 %v100, 0.0
  %v117 = vmax.f32 %v101, 0.0
  %v118 = vmax.f32 %v102, 0.0
  %v119 = vmax.f32 %v103, 0.0
  %v120 = vmax.f32 %v104, 0.0
  %v121 = vmax.f32 %v105, 0.0
  %v122 = vmax.f32 %v106, 0.0
  %v123 = vmax.f32 %v107, 0.0
  %v124 = vmax.f32 %v108, 0.0
  %v125 = vmax.f32 %v109, 0.0
  %v126 = vmax.f32 %v110, 0.0
  %127 = vst [vmem:[%s4] sm:$0xff] %v111
  %128 = vst [vmem:[%s4 + $0x8] sm:$0xff] %v112
  %129 = vst [vmem:[%s4 + $0x10] sm:$0xff] %v113
  %130 = vst [vmem:[%s4 + $0x18] sm:$0xff] %v114
  %131 = vst [vmem:[%s4 + $0x20] sm:$0xff] %v115
  %132 = vst [vmem:[%s4 + $0x28] sm:$0xff] %v116
  %133 = vst [vmem:[%s4 + $0x30] sm:$0xff] %v117
  %134 = vst [vmem:[%s4 + $0x38] sm:$0xff] %v118
  %135 = vst [vmem:[%s4 + $0x40] sm:$0xff] %v119
  %136 = vst [vmem:[%s4 + $0x48] sm:$0xff] %v120
  %137 = vst [vmem:[%s4 + $0x50] sm:$0xff] %v121
  %138 = vst [vmem:[%s4 + $0x58] sm:$0xff] %v122
  %139 = vst [vmem:[%s4 + $0x60] sm:$0xff] %v123
  %140 = vst [vmem:[%s4 + $0x68] sm:$0xff] %v124
  %141 = vst [vmem:[%s4 + $0x70] sm:$0xff] %v125
  %142 = vst [vmem:[%s4 + $0x78] sm:$0xff] %v126
  // Predicated region
  $region18: #{resnet_forward.47} parent=0 // pred_check
    _
  $region19: #{resnet_forward.47} parent=0 // pred_check_branch
    %144 = sbr.rel (0) target = $region21
  $region20: #{resnet_forward.47} parent=0 // pred_region
    _
  $region21: #{resnet_forward.47} parent=0 // pred_fallthru
    _
  // Predicated region
  $region22: #{resnet_forward.47} parent=0 // pred_check
    _
  $region23: #{resnet_forward.47} parent=0 // pred_check_branch
    %146 = sbr.rel (0) target = $region25
  $region24: #{resnet_forward.47} parent=0 // pred_region
    _
  $region25: #{resnet_forward.47} parent=0 // pred_fallthru
    _

// kernel: tile.253
$region0: #{tile.253}
  #allocation0 [shape = 's32[1]{0}', space=sflag, size = 0x4, scoped, tag = 'scoped memory for tile.253']
  %s0 = inlined_call_operand.vmem [shape: f32[64], index: 0, kind: input, shape index: {}]
  %s1 = inlined_call_operand.vmem [shape: f32[2,64], index: 1, kind: output, shape index: {}]
  // Predicated region
  $region2: #{tile.253} parent=0 // pred_check
    _
  $region3: #{tile.253} parent=0 // pred_check_branch
    %3 = sbr.rel (0) target = $region5
  $region4: #{tile.253} parent=0 // pred_region
    _
  $region5: #{tile.253} parent=0 // pred_fallthru
    _
  %v4 = vld [vmem:[%s0] ss:$0 sm:$0xff]
  %5 = vst [vmem:[%s1] sm:$0x3] %v4

// kernel: tile.254
$region0: #{tile.254}
  %s0 = inlined_call_operand.vmem [shape: f32[2,64], index: 0, kind: input, shape index: {}]
  %s1 = inlined_call_operand.vmem [shape: f32[1,128], index: 1, kind: output, shape index: {}]
  $region1: #{tile.254} parent=0
    #allocation0 [shape = 'u8[4096]{0}', space=vmem, size = 0x1000, scoped, tag = 'scoped mem for output reshape']
    #allocation1 [shape = 'u8[4096]{0}', space=vmem, size = 0x1000, scoped, tag = 'scoped mem for input reshape']
    %s3 = sshll.u32 1, 2
    %s4 = ssub.s32 %s3, 1
    %v5 = vld [vmem:[%s0] sm:%s4]
    %6 = vst [vmem:[#allocation1] sm:%s4] %v5
    %v7 = vld [vmem:[#allocation1] sm:$0x1]
    %vm8 = vcmask 523264
    %9 = vst.msk [vmem:[#allocation0] sm:$0x1] %vm8, %v7
    %s10 = scalar_lea.vmem [#allocation1], 1
    %v11 = vld [vmem:[%s10] sm:$0x1]
    %12 = vrot.lane.b32.xlu0 %v11, 64
    %v13 = vpop.permute.xlu0 %12
    %vm14 = vcmask 1048064
    %15 = vst.msk [vmem:[#allocation0] sm:$0x1] %vm14, %v13
    %s17 = sshll.u32 1, 1
    %s18 = ssub.s32 %s17, 1
    %v20 = vld [vmem:[#allocation0] sm:%s18]
    %s21 = sshll.u32 1, 1
    %s22 = ssub.s32 %s21, 1
    %23 = vst [vmem:[%s1] sm:%s22] %v20

// kernel: resnet_forward.53
$region0: #{resnet_forward.53}
  #allocation0 [shape = 'u32[]', space=smem, size = 0x4, offset = 0x4, fixed_abs, tag = 'smem constant byte address 0x4 - core index']
  #allocation1 [shape = 'u32[144,128]{1,0:T(1,128)}', space=vmem, size = 0x12000, scoped, tag = 'internal scratch']
  %s0 = inlined_call_operand.vmem [shape: f32[64,128], index: 0, kind: input, shape index: {}]
  %s1 = inlined_call_operand.vmem [shape: f32[1,128], index: 1, kind: input, shape index: {}]
  %s2 = inlined_call_operand.vmem [shape: f32[1,128], index: 2, kind: input, shape index: {}]
  %s3 = inlined_call_operand.vmem [shape: f32[64,128], index: 3, kind: output, shape index: {}]
  %s4 = sld [smem:[#allocation0]]
  $region22: #{resnet_forward.53} parent=0
    _
  %s6 = ssub.s32 1, %s4
  %s7 = scalar_select 0, %s6, %s4
  // Predicated region
  $region2: #{resnet_forward.53} parent=0 // pred_check
    _
  $region3: #{resnet_forward.53} parent=0 // pred_check_branch
    %9 = sbr.rel (0) target = $region5
  $region4: #{resnet_forward.53} parent=0 // pred_region
    _
  $region5: #{resnet_forward.53} parent=0 // pred_fallthru
    _
  // Predicated region
  $region6: #{resnet_forward.53} parent=0 // pred_check
    _
  $region7: #{resnet_forward.53} parent=0 // pred_check_branch
    %11 = sbr.rel (0) target = $region9
  $region8: #{resnet_forward.53} parent=0 // pred_region
    _
  $region9: #{resnet_forward.53} parent=0 // pred_fallthru
    _
  // Predicated region
  $region10: #{resnet_forward.53} parent=0 // pred_check
    _
  $region11: #{resnet_forward.53} parent=0 // pred_check_branch
    %13 = sbr.rel (0) target = $region13
  $region12: #{resnet_forward.53} parent=0 // pred_region
    _
  $region13: #{resnet_forward.53} parent=0 // pred_fallthru
    _
  %v14 = vld [vmem:[%s0] sm:$0xff]
  %v15 = vld [vmem:[%s0 + $0x8] sm:$0xff]
  %v16 = vld [vmem:[%s0 + $0x10] sm:$0xff]
  %v17 = vld [vmem:[%s0 + $0x18] sm:$0xff]
  %v18 = vld [vmem:[%s0 + $0x20] sm:$0xff]
  %v19 = vld [vmem:[%s0 + $0x28] sm:$0xff]
  %v20 = vld [vmem:[%s0 + $0x30] sm:$0xff]
  %v21 = vld [vmem:[%s0 + $0x38] sm:$0xff]
  %v22 = vld [vmem:[%s1] sm:$0x1]
  %v24 = vlaneseq
  %v25 = vshrl.u32 %v24, 7
  %v26 = vsub.s32 0, %v25
  %v27 = vrot.slane %v22, %v26
  %v29 = vmul.f32 %v14, %v27
  %v30 = vmul.f32 %v15, %v27
  %v31 = vmul.f32 %v16, %v27
  %v32 = vmul.f32 %v17, %v27
  %v33 = vmul.f32 %v18, %v27
  %v34 = vmul.f32 %v19, %v27
  %v35 = vmul.f32 %v20, %v27
  %v36 = vmul.f32 %v21, %v27
  %v37 = vld [vmem:[%s2] sm:$0x1]
  %v39 = vlaneseq
  %v40 = vshrl.u32 %v39, 7
  %v41 = vsub.s32 0, %v40
  %v42 = vrot.slane %v37, %v41
  %v44 = vadd.f32 %v29, %v42
  %v45 = vadd.f32 %v30, %v42
  %v46 = vadd.f32 %v31, %v42
  %v47 = vadd.f32 %v32, %v42
  %v48 = vadd.f32 %v33, %v42
  %v49 = vadd.f32 %v34, %v42
  %v50 = vadd.f32 %v35, %v42
  %v51 = vadd.f32 %v36, %v42
  %v52 = vmax.f32 %v44, 0.0
  %v53 = vmax.f32 %v45, 0.0
  %v54 = vmax.f32 %v46, 0.0
  %v55 = vmax.f32 %v47, 0.0
  %v56 = vmax.f32 %v48, 0.0
  %v57 = vmax.f32 %v49, 0.0
  %v58 = vmax.f32 %v50, 0.0
  %v59 = vmax.f32 %v51, 0.0
  %60 = vst [vmem:[%s3] sm:$0xff] %v52
  %61 = vst [vmem:[%s3 + $0x8] sm:$0xff] %v53
  %62 = vst [vmem:[%s3 + $0x10] sm:$0xff] %v54
  %63 = vst [vmem:[%s3 + $0x18] sm:$0xff] %v55
  %64 = vst [vmem:[%s3 + $0x20] sm:$0xff] %v56
  %65 = vst [vmem:[%s3 + $0x28] sm:$0xff] %v57
  %66 = vst [vmem:[%s3 + $0x30] sm:$0xff] %v58
  %67 = vst [vmem:[%s3 + $0x38] sm:$0xff] %v59
  // Predicated region
  $region14: #{resnet_forward.53} parent=0 // pred_check
    _
  $region15: #{resnet_forward.53} parent=0 // pred_check_branch
    %69 = sbr.rel (0) target = $region17
  $region16: #{resnet_forward.53} parent=0 // pred_region
    _
  $region17: #{resnet_forward.53} parent=0 // pred_fallthru
    _
  // Predicated region
  $region18: #{resnet_forward.53} parent=0 // pred_check
    _
  $region19: #{resnet_forward.53} parent=0 // pred_check_branch
    %71 = sbr.rel (0) target = $region21
  $region20: #{resnet_forward.53} parent=0 // pred_region
    _
  $region21: #{resnet_forward.53} parent=0 // pred_fallthru
    _

// kernel: resnet_forward.52
$region0: #{resnet_forward.52}
  #allocation0 [shape = 'u32[]', space=smem, size = 0x4, offset = 0x4, fixed_abs, tag = 'smem constant byte address 0x4 - core index']
  #allocation1 [shape = 'u32[144,128]{1,0:T(1,128)}', space=vmem, size = 0x12000, scoped, tag = 'internal scratch']
  %s0 = inlined_call_operand.vmem [shape: bf16[128,384], index: 0, kind: input, shape index: {}]
  %s1 = inlined_call_operand.vmem [shape: bf16[384,128], index: 1, kind: input, shape index: {}]
  %s2 = inlined_call_operand.vmem [shape: f32[128,128], index: 2, kind: output, shape index: {}]
  %s3 = sld [smem:[#allocation0]]
  $region18: #{resnet_forward.52} parent=0
    _
  %s5 = ssub.s32 1, %s3
  %s6 = scalar_select 0, %s5, %s3
  // Predicated region
  $region2: #{resnet_forward.52} parent=0 // pred_check
    _
  $region3: #{resnet_forward.52} parent=0 // pred_check_branch
    %8 = sbr.rel (0) target = $region5
  $region4: #{resnet_forward.52} parent=0 // pred_region
    _
  $region5: #{resnet_forward.52} parent=0 // pred_fallthru
    _
  // Predicated region
  $region6: #{resnet_forward.52} parent=0 // pred_check
    _
  $region7: #{resnet_forward.52} parent=0 // pred_check_branch
    %10 = sbr.rel (0) target = $region9
  $region8: #{resnet_forward.52} parent=0 // pred_region
    _
  $region9: #{resnet_forward.52} parent=0 // pred_fallthru
    _
  %v12 = vld [vmem:[%s0] sm:$0xff]
  %v13 = vld [vmem:[%s0 + $0x8] sm:$0xf]
  %v14 = vld [vmem:[%s0 + $0xc] sm:$0xff]
  %v15 = vld [vmem:[%s0 + $0x14] sm:$0xf]
  %v16 = vld [vmem:[%s0 + $0x18] sm:$0xff]
  %v17 = vld [vmem:[%s0 + $0x20] sm:$0xf]
  %v18 = vld [vmem:[%s0 + $0x24] sm:$0xff]
  %v19 = vld [vmem:[%s0 + $0x2c] sm:$0xf]
  %v20 = vld [vmem:[%s0 + $0x30] sm:$0xff]
  %v21 = vld [vmem:[%s0 + $0x38] sm:$0xf]
  %v22 = vld [vmem:[%s0 + $0x3c] sm:$0xff]
  %v23 = vld [vmem:[%s0 + $0x44] sm:$0xf]
  %v24 = vld [vmem:[%s0 + $0x48] sm:$0xff]
  %v25 = vld [vmem:[%s0 + $0x50] sm:$0xf]
  %v26 = vld [vmem:[%s0 + $0x54] sm:$0xff]
  %v27 = vld [vmem:[%s0 + $0x5c] sm:$0xf]
  %v28 = vld [vmem:[%s0 + $0x60] sm:$0xff]
  %v29 = vld [vmem:[%s0 + $0x68] sm:$0xf]
  %v30 = vld [vmem:[%s0 + $0x6c] sm:$0xff]
  %v31 = vld [vmem:[%s0 + $0x74] sm:$0xf]
  %v32 = vld [vmem:[%s0 + $0x78] sm:$0xff]
  %v33 = vld [vmem:[%s0 + $0x80] sm:$0xf]
  %v34 = vld [vmem:[%s0 + $0x84] sm:$0xff]
  %v35 = vld [vmem:[%s0 + $0x8c] sm:$0xf]
  %v36 = vld [vmem:[%s0 + $0x90] sm:$0xff]
  %v37 = vld [vmem:[%s0 + $0x98] sm:$0xf]
  %v38 = vld [vmem:[%s0 + $0x9c] sm:$0xff]
  %v39 = vld [vmem:[%s0 + $0xa4] sm:$0xf]
  %v40 = vld [vmem:[%s0 + $0xa8] sm:$0xff]
  %v41 = vld [vmem:[%s0 + $0xb0] sm:$0xf]
  %v42 = vld [vmem:[%s0 + $0xb4] sm:$0xff]
  %v43 = vld [vmem:[%s0 + $0xbc] sm:$0xf]
  %v44 = vld [vmem:[%s1] sm:$0xf]
  %v45 = vld [vmem:[%s1 + $0x4] sm:$0xf]
  %v46 = vld [vmem:[%s1 + $0x8] sm:$0xf]
  %v47 = vld [vmem:[%s1 + $0xc] sm:$0xf]
  %v48 = vld [vmem:[%s1 + $0x10] sm:$0xf]
  %v49 = vld [vmem:[%s1 + $0x14] sm:$0xf]
  %v50 = vld [vmem:[%s1 + $0x18] sm:$0xf]
  %v51 = vld [vmem:[%s1 + $0x1c] sm:$0xf]
  %v52 = vld [vmem:[%s1 + $0x20] sm:$0xf]
  %v53 = vld [vmem:[%s1 + $0x24] sm:$0xf]
  %v54 = vld [vmem:[%s1 + $0x28] sm:$0xf]
  %v55 = vld [vmem:[%s1 + $0x2c] sm:$0xf]
  %v56 = vld [vmem:[%s1 + $0x30] sm:$0xf]
  %v57 = vld [vmem:[%s1 + $0x34] sm:$0xf]
  %v58 = vld [vmem:[%s1 + $0x38] sm:$0xf]
  %v59 = vld [vmem:[%s1 + $0x3c] sm:$0xf]
  %v60 = vld [vmem:[%s1 + $0x40] sm:$0xf]
  %v61 = vld [vmem:[%s1 + $0x44] sm:$0xf]
  %v62 = vld [vmem:[%s1 + $0x48] sm:$0xf]
  %v63 = vld [vmem:[%s1 + $0x4c] sm:$0xf]
  %v64 = vld [vmem:[%s1 + $0x50] sm:$0xf]
  %v65 = vld [vmem:[%s1 + $0x54] sm:$0xf]
  %v66 = vld [vmem:[%s1 + $0x58] sm:$0xf]
  %v67 = vld [vmem:[%s1 + $0x5c] sm:$0xf]
  %v68 = vld [vmem:[%s1 + $0x60] sm:$0xf]
  %v69 = vld [vmem:[%s1 + $0x64] sm:$0xf]
  %v70 = vld [vmem:[%s1 + $0x68] sm:$0xf]
  %v71 = vld [vmem:[%s1 + $0x6c] sm:$0xf]
  %v72 = vld [vmem:[%s1 + $0x70] sm:$0xf]
  %v73 = vld [vmem:[%s1 + $0x74] sm:$0xf]
  %v74 = vld [vmem:[%s1 + $0x78] sm:$0xf]
  %v75 = vld [vmem:[%s1 + $0x7c] sm:$0xf]
  %v76 = vld [vmem:[%s1 + $0x80] sm:$0xf]
  %v77 = vld [vmem:[%s1 + $0x84] sm:$0xf]
  %v78 = vld [vmem:[%s1 + $0x88] sm:$0xf]
  %v79 = vld [vmem:[%s1 + $0x8c] sm:$0xf]
  %v80 = vld [vmem:[%s1 + $0x90] sm:$0xf]
  %v81 = vld [vmem:[%s1 + $0x94] sm:$0xf]
  %v82 = vld [vmem:[%s1 + $0x98] sm:$0xf]
  %v83 = vld [vmem:[%s1 + $0x9c] sm:$0xf]
  %v84 = vld [vmem:[%s1 + $0xa0] sm:$0xf]
  %v85 = vld [vmem:[%s1 + $0xa4] sm:$0xf]
  %v86 = vld [vmem:[%s1 + $0xa8] sm:$0xf]
  %v87 = vld [vmem:[%s1 + $0xac] sm:$0xf]
  %v88 = vld [vmem:[%s1 + $0xb0] sm:$0xf]
  %v89 = vld [vmem:[%s1 + $0xb4] sm:$0xf]
  %v90 = vld [vmem:[%s1 + $0xb8] sm:$0xf]
  %v91 = vld [vmem:[%s1 + $0xbc] sm:$0xf]
  %v124 = vunpack.c.l.b16 %v12
  %v125 = vunpack.c.h.b16 %v12
  %v126 = vunpack.c.l.b16 %v13
  %v127 = vunpack.c.l.b16 %v14
  %v128 = vunpack.c.h.b16 %v14
  %v129 = vunpack.c.l.b16 %v15
  %v130 = vunpack.c.l.b16 %v16
  %v131 = vunpack.c.h.b16 %v16
  %v132 = vunpack.c.l.b16 %v17
  %v133 = vunpack.c.l.b16 %v18
  %v134 = vunpack.c.h.b16 %v18
  %v135 = vunpack.c.l.b16 %v19
  %v136 = vunpack.c.l.b16 %v20
  %v137 = vunpack.c.h.b16 %v20
  %v138 = vunpack.c.l.b16 %v21
  %v139 = vunpack.c.l.b16 %v22
  %v140 = vunpack.c.h.b16 %v22
  %v141 = vunpack.c.l.b16 %v23
  %v142 = vunpack.c.l.b16 %v24
  %v143 = vunpack.c.h.b16 %v24
  %v144 = vunpack.c.l.b16 %v25
  %v145 = vunpack.c.l.b16 %v26
  %v146 = vunpack.c.h.b16 %v26
  %v147 = vunpack.c.l.b16 %v27
  %v148 = vunpack.c.l.b16 %v28
  %v149 = vunpack.c.h.b16 %v28
  %v150 = vunpack.c.l.b16 %v29
  %v151 = vunpack.c.l.b16 %v30
  %v152 = vunpack.c.h.b16 %v30
  %v153 = vunpack.c.l.b16 %v31
  %v154 = vunpack.c.l.b16 %v32
  %v155 = vunpack.c.h.b16 %v32
  %v156 = vunpack.c.l.b16 %v33
  %v157 = vunpack.c.l.b16 %v34
  %v158 = vunpack.c.h.b16 %v34
  %v159 = vunpack.c.l.b16 %v35
  %v160 = vunpack.c.l.b16 %v36
  %v161 = vunpack.c.h.b16 %v36
  %v162 = vunpack.c.l.b16 %v37
  %v163 = vunpack.c.l.b16 %v38
  %v164 = vunpack.c.h.b16 %v38
  %v165 = vunpack.c.l.b16 %v39
  %v166 = vunpack.c.l.b16 %v40
  %v167 = vunpack.c.h.b16 %v40
  %v168 = vunpack.c.l.b16 %v41
  %v169 = vunpack.c.l.b16 %v42
  %v170 = vunpack.c.h.b16 %v42
  %v171 = vunpack.c.l.b16 %v43
  %v172 = vpack.c.b16 %v127, %v124
  %v173 = vpack.c.b16 %v128, %v125
  %v174 = vpack.c.b16 %v129, %v126
  %v175 = vpack.c.b16 %v133, %v130
  %v176 = vpack.c.b16 %v134, %v131
  %v177 = vpack.c.b16 %v135, %v132
  %v178 = vpack.c.b16 %v139, %v136
  %v179 = vpack.c.b16 %v140, %v137
  %v180 = vpack.c.b16 %v141, %v138
  %v181 = vpack.c.b16 %v145, %v142
  %v182 = vpack.c.b16 %v146, %v143
  %v183 = vpack.c.b16 %v147, %v144
  %v184 = vpack.c.b16 %v151, %v148
  %v185 = vpack.c.b16 %v152, %v149
  %v186 = vpack.c.b16 %v153, %v150
  %v187 = vpack.c.b16 %v157, %v154
  %v188 = vpack.c.b16 %v158, %v155
  %v189 = vpack.c.b16 %v159, %v156
  %v190 = vpack.c.b16 %v163, %v160
  %v191 = vpack.c.b16 %v164, %v161
  %v192 = vpack.c.b16 %v165, %v162
  %v193 = vpack.c.b16 %v169, %v166
  %v194 = vpack.c.b16 %v170, %v167
  %v195 = vpack.c.b16 %v171, %v168
  %v268 = vunpack.c.l.b16 %v44
  %v269 = vunpack.c.l.b16 %v45
  %v270 = vunpack.c.l.b16 %v46
  %v271 = vunpack.c.l.b16 %v47
  %v272 = vunpack.c.l.b16 %v48
  %v273 = vunpack.c.l.b16 %v49
  %v274 = vunpack.c.l.b16 %v50
  %v275 = vunpack.c.l.b16 %v51
  %v276 = vunpack.c.l.b16 %v52
  %v277 = vunpack.c.l.b16 %v53
  %v278 = vunpack.c.l.b16 %v54
  %v279 = vunpack.c.l.b16 %v55
  %v280 = vunpack.c.l.b16 %v56
  %v281 = vunpack.c.l.b16 %v57
  %v282 = vunpack.c.l.b16 %v58
  %v283 = vunpack.c.l.b16 %v59
  %v284 = vunpack.c.l.b16 %v60
  %v285 = vunpack.c.l.b16 %v61
  %v286 = vunpack.c.l.b16 %v62
  %v287 = vunpack.c.l.b16 %v63
  %v288 = vunpack.c.l.b16 %v64
  %v289 = vunpack.c.l.b16 %v65
  %v290 = vunpack.c.l.b16 %v66
  %v291 = vunpack.c.l.b16 %v67
  %v292 = vunpack.c.l.b16 %v68
  %v293 = vunpack.c.l.b16 %v69
  %v294 = vunpack.c.l.b16 %v70
  %v295 = vunpack.c.l.b16 %v71
  %v296 = vunpack.c.l.b16 %v72
  %v297 = vunpack.c.l.b16 %v73
  %v298 = vunpack.c.l.b16 %v74
  %v299 = vunpack.c.l.b16 %v75
  %v300 = vunpack.c.l.b16 %v76
  %v301 = vunpack.c.l.b16 %v77
  %v302 = vunpack.c.l.b16 %v78
  %v303 = vunpack.c.l.b16 %v79
  %v304 = vunpack.c.l.b16 %v80
  %v305 = vunpack.c.l.b16 %v81
  %v306 = vunpack.c.l.b16 %v82
  %v307 = vunpack.c.l.b16 %v83
  %v308 = vunpack.c.l.b16 %v84
  %v309 = vunpack.c.l.b16 %v85
  %v310 = vunpack.c.l.b16 %v86
  %v311 = vunpack.c.l.b16 %v87
  %v312 = vunpack.c.l.b16 %v88
  %v313 = vunpack.c.l.b16 %v89
  %v314 = vunpack.c.l.b16 %v90
  %v315 = vunpack.c.l.b16 %v91
  %v316 = vpack.c.b16 %v269, %v268
  %v317 = vpack.c.b16 %v271, %v270
  %v318 = vpack.c.b16 %v273, %v272
  %v319 = vpack.c.b16 %v275, %v274
  %v320 = vpack.c.b16 %v277, %v276
  %v321 = vpack.c.b16 %v279, %v278
  %v322 = vpack.c.b16 %v281, %v280
  %v323 = vpack.c.b16 %v283, %v282
  %v324 = vpack.c.b16 %v285, %v284
  %v325 = vpack.c.b16 %v287, %v286
  %v326 = vpack.c.b16 %v289, %v288
  %v327 = vpack.c.b16 %v291, %v290
  %v328 = vpack.c.b16 %v293, %v292
  %v329 = vpack.c.b16 %v295, %v294
  %v330 = vpack.c.b16 %v297, %v296
  %v331 = vpack.c.b16 %v299, %v298
  %v332 = vpack.c.b16 %v301, %v300
  %v333 = vpack.c.b16 %v303, %v302
  %v334 = vpack.c.b16 %v305, %v304
  %v335 = vpack.c.b16 %v307, %v306
  %v336 = vpack.c.b16 %v309, %v308
  %v337 = vpack.c.b16 %v311, %v310
  %v338 = vpack.c.b16 %v313, %v312
  %v339 = vpack.c.b16 %v315, %v314
  %364 = vmatprep.subr.bf16.mxu0 0
  %365 = vmatpush1.bf16.msra.mxu0 %v323
  %366 = vmatprep.subr.bf16.mxu0 0
  %367 = vmatpush1.bf16.msra.mxu0 %v322
  %368 = vmatprep.subr.bf16.mxu0 0
  %369 = vmatpush1.bf16.msra.mxu0 %v321
  %370 = vmatprep.subr.bf16.mxu0 0
  %371 = vmatpush1.bf16.msra.mxu0 %v320
  %372 = vmatprep.subr.bf16.mxu0 0
  %373 = vmatpush1.bf16.msra.mxu0 %v319
  %374 = vmatprep.subr.bf16.mxu0 0
  %375 = vmatpush1.bf16.msra.mxu0 %v318
  %376 = vmatprep.subr.bf16.mxu0 0
  %377 = vmatpush1.bf16.msra.mxu0 %v317
  %378 = vmatprep.subr.bf16.mxu0 0
  %379 = vmatpush1.bf16.msra.mxu0 %v316
  %380 = vmatprep.subr.bf16.mxu0 0
  %381 = vmatpush2.bf16.msra.mxu0 %v331
  %382 = vmatprep.subr.bf16.mxu0 0
  %383 = vmatpush2.bf16.msra.mxu0 %v330
  %384 = vmatprep.subr.bf16.mxu0 0
  %385 = vmatpush2.bf16.msra.mxu0 %v329
  %386 = vmatprep.subr.bf16.mxu0 0
  %387 = vmatpush2.bf16.msra.mxu0 %v328
  %388 = vmatprep.subr.bf16.mxu0 0
  %389 = vmatpush2.bf16.msra.mxu0 %v327
  %390 = vmatprep.subr.bf16.mxu0 0
  %391 = vmatpush2.bf16.msra.mxu0 %v326
  %392 = vmatprep.subr.bf16.mxu0 0
  %393 = vmatpush2.bf16.msra.mxu0 %v325
  %394 = vmatprep.subr.bf16.mxu0 0
  %395 = vmatpush2.bf16.msra.mxu0 %v324
  %396 = vmatprep.mubr.bf16.mxu0 %v173
  %397 = vmatmul.mubr.bf16.gmra.mxu0 %v172
  %v398 = vpop.f32.mrf.mxu0
  %v399 = vadd.f32 0.0, %v398
  %v400 = vpop.f32.mrf.mxu0
  %v401 = vpop.f32.mrf.mxu0
  %v402 = vadd.f32 0.0, %v401
  %v403 = vpop.f32.mrf.mxu0
  %404 = vmatprep.mubr.bf16.mxu0 %v176
  %405 = vmatmul.mubr.bf16.gmra.mxu0 %v175
  %v406 = vpop.f32.mrf.mxu0
  %v407 = vadd.f32 0.0, %v406
  %v408 = vpop.f32.mrf.mxu0
  %v409 = vpop.f32.mrf.mxu0
  %v410 = vadd.f32 0.0, %v409
  %v411 = vpop.f32.mrf.mxu0
  %412 = vmatprep.mubr.bf16.mxu0 %v179
  %413 = vmatmul.mubr.bf16.gmra.mxu0 %v178
  %v414 = vpop.f32.mrf.mxu0
  %v415 = vadd.f32 0.0, %v414
  %v416 = vpop.f32.mrf.mxu0
  %v417 = vpop.f32.mrf.mxu0
  %v418 = vadd.f32 0.0, %v417
  %v419 = vpop.f32.mrf.mxu0
  %420 = vmatprep.mubr.bf16.mxu0 %v182
  %421 = vmatmul.mubr.bf16.gmra.mxu0 %v181
  %v422 = vpop.f32.mrf.mxu0
  %v423 = vadd.f32 0.0, %v422
  %v424 = vpop.f32.mrf.mxu0
  %v425 = vpop.f32.mrf.mxu0
  %v426 = vadd.f32 0.0, %v425
  %v427 = vpop.f32.mrf.mxu0
  %428 = vmatprep.mubr.bf16.mxu0 %v185
  %429 = vmatmul.mubr.bf16.gmra.mxu0 %v184
  %v430 = vpop.f32.mrf.mxu0
  %v431 = vadd.f32 0.0, %v430
  %v432 = vpop.f32.mrf.mxu0
  %v433 = vpop.f32.mrf.mxu0
  %v434 = vadd.f32 0.0, %v433
  %v435 = vpop.f32.mrf.mxu0
  %436 = vmatprep.mubr.bf16.mxu0 %v188
  %437 = vmatmul.mubr.bf16.gmra.mxu0 %v187
  %v438 = vpop.f32.mrf.mxu0
  %v439 = vadd.f32 0.0, %v438
  %v440 = vpop.f32.mrf.mxu0
  %v441 = vpop.f32.mrf.mxu0
  %v442 = vadd.f32 0.0, %v441
  %v443 = vpop.f32.mrf.mxu0
  %444 = vmatprep.mubr.bf16.mxu0 %v191
  %445 = vmatmul.mubr.bf16.gmra.mxu0 %v190
  %v446 = vpop.f32.mrf.mxu0
  %v447 = vadd.f32 0.0, %v446
  %v448 = vpop.f32.mrf.mxu0
  %v449 = vpop.f32.mrf.mxu0
  %v450 = vadd.f32 0.0, %v449
  %v451 = vpop.f32.mrf.mxu0
  %452 = vmatprep.mubr.bf16.mxu0 %v194
  %453 = vmatmul.mubr.bf16.gmra.mxu0 %v193
  %v454 = vpop.f32.mrf.mxu0
  %v455 = vadd.f32 0.0, %v454
  %v456 = vpop.f32.mrf.mxu0
  %v457 = vpop.f32.mrf.mxu0
  %v458 = vadd.f32 0.0, %v457
  %v459 = vpop.f32.mrf.mxu0
  %460 = vdwg.mxu0
  %461 = vmatprep.subr.bf16.mxu0 0
  %462 = vmatpush1.bf16.msra.mxu0 %v339
  %463 = vmatprep.subr.bf16.mxu0 0
  %464 = vmatpush1.bf16.msra.mxu0 %v338
  %465 = vmatprep.subr.bf16.mxu0 0
  %466 = vmatpush1.bf16.msra.mxu0 %v337
  %467 = vmatprep.subr.bf16.mxu0 0
  %468 = vmatpush1.bf16.msra.mxu0 %v336
  %469 = vmatprep.subr.bf16.mxu0 0
  %470 = vmatpush1.bf16.msra.mxu0 %v335
  %471 = vmatprep.subr.bf16.mxu0 0
  %472 = vmatpush1.bf16.msra.mxu0 %v334
  %473 = vmatprep.subr.bf16.mxu0 0
  %474 = vmatpush1.bf16.msra.mxu0 %v333
  %475 = vmatprep.subr.bf16.mxu0 0
  %476 = vmatpush1.bf16.msra.mxu0 %v332
  %477 = vmatprep.subr.bf16.mxu0 0
  %478 = vmatpush2.bf16.msra.mxu0 0
  %479 = vmatprep.subr.bf16.mxu0 0
  %480 = vmatpush2.bf16.msra.mxu0 0
  %481 = vmatprep.subr.bf16.mxu0 0
  %482 = vmatpush2.bf16.msra.mxu0 0
  %483 = vmatprep.subr.bf16.mxu0 0
  %484 = vmatpush2.bf16.msra.mxu0 0
  %485 = vmatprep.subr.bf16.mxu0 0
  %486 = vmatpush2.bf16.msra.mxu0 0
  %487 = vmatprep.subr.bf16.mxu0 0
  %488 = vmatpush2.bf16.msra.mxu0 0
  %489 = vmatprep.subr.bf16.mxu0 0
  %490 = vmatpush2.bf16.msra.mxu0 0
  %491 = vmatprep.subr.bf16.mxu0 0
  %492 = vmatpush2.bf16.msra.mxu0 0
  %493 = vmatprep.mubr.bf16.mxu0 0
  %494 = vmatmul.mubr.bf16.gmra.mxu0 %v174
  %v495 = vpop.f32.mrf.mxu0
  %v496 = vadd.f32 %v399, %v495
  %v497 = vpop.f32.mrf.mxu0
  %v498 = vpop.f32.mrf.mxu0
  %v499 = vadd.f32 %v402, %v498
  %v500 = vpop.f32.mrf.mxu0
  %501 = vmatprep.mubr.bf16.mxu0 0
  %502 = vmatmul.mubr.bf16.gmra.mxu0 %v177
  %v503 = vpop.f32.mrf.mxu0
  %v504 = vadd.f32 %v407, %v503
  %v505 = vpop.f32.mrf.mxu0
  %v506 = vpop.f32.mrf.mxu0
  %v507 = vadd.f32 %v410, %v506
  %v508 = vpop.f32.mrf.mxu0
  %509 = vmatprep.mubr.bf16.mxu0 0
  %510 = vmatmul.mubr.bf16.gmra.mxu0 %v180
  %v511 = vpop.f32.mrf.mxu0
  %v512 = vadd.f32 %v415, %v511
  %v513 = vpop.f32.mrf.mxu0
  %v514 = vpop.f32.mrf.mxu0
  %v515 = vadd.f32 %v418, %v514
  %v516 = vpop.f32.mrf.mxu0
  %517 = vmatprep.mubr.bf16.mxu0 0
  %518 = vmatmul.mubr.bf16.gmra.mxu0 %v183
  %v519 = vpop.f32.mrf.mxu0
  %v520 = vadd.f32 %v423, %v519
  %v521 = vpop.f32.mrf.mxu0
  %v522 = vpop.f32.mrf.mxu0
  %v523 = vadd.f32 %v426, %v522
  %v524 = vpop.f32.mrf.mxu0
  %525 = vmatprep.mubr.bf16.mxu0 0
  %526 = vmatmul.mubr.bf16.gmra.mxu0 %v186
  %v527 = vpop.f32.mrf.mxu0
  %v528 = vadd.f32 %v431, %v527
  %v529 = vpop.f32.mrf.mxu0
  %v530 = vpop.f32.mrf.mxu0
  %v531 = vadd.f32 %v434, %v530
  %v532 = vpop.f32.mrf.mxu0
  %533 = vmatprep.mubr.bf16.mxu0 0
  %534 = vmatmul.mubr.bf16.gmra.mxu0 %v189
  %v535 = vpop.f32.mrf.mxu0
  %v536 = vadd.f32 %v439, %v535
  %v537 = vpop.f32.mrf.mxu0
  %v538 = vpop.f32.mrf.mxu0
  %v539 = vadd.f32 %v442, %v538
  %v540 = vpop.f32.mrf.mxu0
  %541 = vmatprep.mubr.bf16.mxu0 0
  %542 = vmatmul.mubr.bf16.gmra.mxu0 %v192
  %v543 = vpop.f32.mrf.mxu0
  %v544 = vadd.f32 %v447, %v543
  %v545 = vpop.f32.mrf.mxu0
  %v546 = vpop.f32.mrf.mxu0
  %v547 = vadd.f32 %v450, %v546
  %v548 = vpop.f32.mrf.mxu0
  %549 = vmatprep.mubr.bf16.mxu0 0
  %550 = vmatmul.mubr.bf16.gmra.mxu0 %v195
  %v551 = vpop.f32.mrf.mxu0
  %v552 = vadd.f32 %v455, %v551
  %v553 = vpop.f32.mrf.mxu0
  %v554 = vpop.f32.mrf.mxu0
  %v555 = vadd.f32 %v458, %v554
  %v556 = vpop.f32.mrf.mxu0
  %557 = vdwg.mxu0
  %558 = vst [vmem:[%s2] sm:$0xff] %v496
  %559 = vst [vmem:[%s2 + $0x8] sm:$0xff] %v499
  %560 = vst [vmem:[%s2 + $0x10] sm:$0xff] %v504
  %561 = vst [vmem:[%s2 + $0x18] sm:$0xff] %v507
  %562 = vst [vmem:[%s2 + $0x20] sm:$0xff] %v512
  %563 = vst [vmem:[%s2 + $0x28] sm:$0xff] %v515
  %564 = vst [vmem:[%s2 + $0x30] sm:$0xff] %v520
  %565 = vst [vmem:[%s2 + $0x38] sm:$0xff] %v523
  %566 = vst [vmem:[%s2 + $0x40] sm:$0xff] %v528
  %567 = vst [vmem:[%s2 + $0x48] sm:$0xff] %v531
  %568 = vst [vmem:[%s2 + $0x50] sm:$0xff] %v536
  %569 = vst [vmem:[%s2 + $0x58] sm:$0xff] %v539
  %570 = vst [vmem:[%s2 + $0x60] sm:$0xff] %v544
  %571 = vst [vmem:[%s2 + $0x68] sm:$0xff] %v547
  %572 = vst [vmem:[%s2 + $0x70] sm:$0xff] %v552
  %573 = vst [vmem:[%s2 + $0x78] sm:$0xff] %v555
  // Predicated region
  $region10: #{resnet_forward.52} parent=0 // pred_check
    _
  $region11: #{resnet_forward.52} parent=0 // pred_check_branch
    %575 = sbr.rel (0) target = $region13
  $region12: #{resnet_forward.52} parent=0 // pred_region
    _
  $region13: #{resnet_forward.52} parent=0 // pred_fallthru
    _
  // Predicated region
  $region14: #{resnet_forward.52} parent=0 // pred_check
    _
  $region15: #{resnet_forward.52} parent=0 // pred_check_branch
    %577 = sbr.rel (0) target = $region17
  $region16: #{resnet_forward.52} parent=0 // pred_region
    _
  $region17: #{resnet_forward.52} parent=0 // pred_fallthru
    _

// kernel: resnet_forward.54
$region0: #{resnet_forward.54}
  #allocation0 [shape = 'u32[]', space=smem, size = 0x4, offset = 0x4, fixed_abs, tag = 'smem constant byte address 0x4 - core index']
  #allocation1 [shape = 'u32[144,128]{1,0:T(1,128)}', space=vmem, size = 0x12000, scoped, tag = 'internal scratch']
  %s0 = inlined_call_operand.vmem [shape: bf16[128,640], index: 0, kind: input, shape index: {}]
  %s1 = inlined_call_operand.vmem [shape: bf16[640,128], index: 1, kind: input, shape index: {}]
  %s2 = inlined_call_operand.vmem [shape: f32[128,128], index: 2, kind: output, shape index: {}]
  %s3 = sld [smem:[#allocation0]]
  $region18: #{resnet_forward.54} parent=0
    _
  %s5 = ssub.s32 1, %s3
  %s6 = scalar_select 0, %s5, %s3
  // Predicated region
  $region2: #{resnet_forward.54} parent=0 // pred_check
    _
  $region3: #{resnet_forward.54} parent=0 // pred_check_branch
    %8 = sbr.rel (0) target = $region5
  $region4: #{resnet_forward.54} parent=0 // pred_region
    _
  $region5: #{resnet_forward.54} parent=0 // pred_fallthru
    _
  // Predicated region
  $region6: #{resnet_forward.54} parent=0 // pred_check
    _
  $region7: #{resnet_forward.54} parent=0 // pred_check_branch
    %10 = sbr.rel (0) target = $region9
  $region8: #{resnet_forward.54} parent=0 // pred_region
    _
  $region9: #{resnet_forward.54} parent=0 // pred_fallthru
    _
  %v12 = vld [vmem:[%s0] sm:$0xff]
  %v13 = vld [vmem:[%s0 + $0x8] sm:$0xff]
  %v14 = vld [vmem:[%s0 + $0x10] sm:$0xf]
  %v15 = vld [vmem:[%s0 + $0x14] sm:$0xff]
  %v16 = vld [vmem:[%s0 + $0x1c] sm:$0xff]
  %v17 = vld [vmem:[%s0 + $0x24] sm:$0xf]
  %v18 = vld [vmem:[%s0 + $0x28] sm:$0xff]
  %v19 = vld [vmem:[%s0 + $0x30] sm:$0xff]
  %v20 = vld [vmem:[%s0 + $0x38] sm:$0xf]
  %v21 = vld [vmem:[%s0 + $0x3c] sm:$0xff]
  %v22 = vld [vmem:[%s0 + $0x44] sm:$0xff]
  %v23 = vld [vmem:[%s0 + $0x4c] sm:$0xf]
  %v24 = vld [vmem:[%s0 + $0x50] sm:$0xff]
  %v25 = vld [vmem:[%s0 + $0x58] sm:$0xff]
  %v26 = vld [vmem:[%s0 + $0x60] sm:$0xf]
  %v27 = vld [vmem:[%s0 + $0x64] sm:$0xff]
  %v28 = vld [vmem:[%s0 + $0x6c] sm:$0xff]
  %v29 = vld [vmem:[%s0 + $0x74] sm:$0xf]
  %v30 = vld [vmem:[%s0 + $0x78] sm:$0xff]
  %v31 = vld [vmem:[%s0 + $0x80] sm:$0xff]
  %v32 = vld [vmem:[%s0 + $0x88] sm:$0xf]
  %v33 = vld [vmem:[%s0 + $0x8c] sm:$0xff]
  %v34 = vld [vmem:[%s0 + $0x94] sm:$0xff]
  %v35 = vld [vmem:[%s0 + $0x9c] sm:$0xf]
  %v36 = vld [vmem:[%s0 + $0xa0] sm:$0xff]
  %v37 = vld [vmem:[%s0 + $0xa8] sm:$0xff]
  %v38 = vld [vmem:[%s0 + $0xb0] sm:$0xf]
  %v39 = vld [vmem:[%s0 + $0xb4] sm:$0xff]
  %v40 = vld [vmem:[%s0 + $0xbc] sm:$0xff]
  %v41 = vld [vmem:[%s0 + $0xc4] sm:$0xf]
  %v42 = vld [vmem:[%s0 + $0xc8] sm:$0xff]
  %v43 = vld [vmem:[%s0 + $0xd0] sm:$0xff]
  %v44 = vld [vmem:[%s0 + $0xd8] sm:$0xf]
  %v45 = vld [vmem:[%s0 + $0xdc] sm:$0xff]
  %v46 = vld [vmem:[%s0 + $0xe4] sm:$0xff]
  %v47 = vld [vmem:[%s0 + $0xec] sm:$0xf]
  %v48 = vld [vmem:[%s0 + $0xf0] sm:$0xff]
  %v49 = vld [vmem:[%s0 + $0xf8] sm:$0xff]
  %v50 = vld [vmem:[%s0 + $0x100] sm:$0xf]
  %v51 = vld [vmem:[%s0 + $0x104] sm:$0xff]
  %v52 = vld [vmem:[%s0 + $0x10c] sm:$0xff]
  %v53 = vld [vmem:[%s0 + $0x114] sm:$0xf]
  %v54 = vld [vmem:[%s0 + $0x118] sm:$0xff]
  %v55 = vld [vmem:[%s0 + $0x120] sm:$0xff]
  %v56 = vld [vmem:[%s0 + $0x128] sm:$0xf]
  %v57 = vld [vmem:[%s0 + $0x12c] sm:$0xff]
  %v58 = vld [vmem:[%s0 + $0x134] sm:$0xff]
  %v59 = vld [vmem:[%s0 + $0x13c] sm:$0xf]
  %v60 = vld [vmem:[%s1] sm:$0xf]
  %v61 = vld [vmem:[%s1 + $0x4] sm:$0xf]
  %v62 = vld [vmem:[%s1 + $0x8] sm:$0xf]
  %v63 = vld [vmem:[%s1 + $0xc] sm:$0xf]
  %v64 = vld [vmem:[%s1 + $0x10] sm:$0xf]
  %v65 = vld [vmem:[%s1 + $0x14] sm:$0xf]
  %v66 = vld [vmem:[%s1 + $0x18] sm:$0xf]
  %v67 = vld [vmem:[%s1 + $0x1c] sm:$0xf]
  %v68 = vld [vmem:[%s1 + $0x20] sm:$0xf]
  %v69 = vld [vmem:[%s1 + $0x24] sm:$0xf]
  %v70 = vld [vmem:[%s1 + $0x28] sm:$0xf]
  %v71 = vld [vmem:[%s1 + $0x2c] sm:$0xf]
  %v72 = vld [vmem:[%s1 + $0x30] sm:$0xf]
  %v73 = vld [vmem:[%s1 + $0x34] sm:$0xf]
  %v74 = vld [vmem:[%s1 + $0x38] sm:$0xf]
  %v75 = vld [vmem:[%s1 + $0x3c] sm:$0xf]
  %v76 = vld [vmem:[%s1 + $0x40] sm:$0xf]
  %v77 = vld [vmem:[%s1 + $0x44] sm:$0xf]
  %v78 = vld [vmem:[%s1 + $0x48] sm:$0xf]
  %v79 = vld [vmem:[%s1 + $0x4c] sm:$0xf]
  %v80 = vld [vmem:[%s1 + $0x50] sm:$0xf]
  %v81 = vld [vmem:[%s1 + $0x54] sm:$0xf]
  %v82 = vld [vmem:[%s1 + $0x58] sm:$0xf]
  %v83 = vld [vmem:[%s1 + $0x5c] sm:$0xf]
  %v84 = vld [vmem:[%s1 + $0x60] sm:$0xf]
  %v85 = vld [vmem:[%s1 + $0x64] sm:$0xf]
  %v86 = vld [vmem:[%s1 + $0x68] sm:$0xf]
  %v87 = vld [vmem:[%s1 + $0x6c] sm:$0xf]
  %v88 = vld [vmem:[%s1 + $0x70] sm:$0xf]
  %v89 = vld [vmem:[%s1 + $0x74] sm:$0xf]
  %v90 = vld [vmem:[%s1 + $0x78] sm:$0xf]
  %v91 = vld [vmem:[%s1 + $0x7c] sm:$0xf]
  %v92 = vld [vmem:[%s1 + $0x80] sm:$0xf]
  %v93 = vld [vmem:[%s1 + $0x84] sm:$0xf]
  %v94 = vld [vmem:[%s1 + $0x88] sm:$0xf]
  %v95 = vld [vmem:[%s1 + $0x8c] sm:$0xf]
  %v96 = vld [vmem:[%s1 + $0x90] sm:$0xf]
  %v97 = vld [vmem:[%s1 + $0x94] sm:$0xf]
  %v98 = vld [vmem:[%s1 + $0x98] sm:$0xf]
  %v99 = vld [vmem:[%s1 + $0x9c] sm:$0xf]
  %v100 = vld [vmem:[%s1 + $0xa0] sm:$0xf]
  %v101 = vld [vmem:[%s1 + $0xa4] sm:$0xf]
  %v102 = vld [vmem:[%s1 + $0xa8] sm:$0xf]
  %v103 = vld [vmem:[%s1 + $0xac] sm:$0xf]
  %v104 = vld [vmem:[%s1 + $0xb0] sm:$0xf]
  %v105 = vld [vmem:[%s1 + $0xb4] sm:$0xf]
  %v106 = vld [vmem:[%s1 + $0xb8] sm:$0xf]
  %v107 = vld [vmem:[%s1 + $0xbc] sm:$0xf]
  %v108 = vld [vmem:[%s1 + $0xc0] sm:$0xf]
  %v109 = vld [vmem:[%s1 + $0xc4] sm:$0xf]
  %v110 = vld [vmem:[%s1 + $0xc8] sm:$0xf]
  %v111 = vld [vmem:[%s1 + $0xcc] sm:$0xf]
  %v112 = vld [vmem:[%s1 + $0xd0] sm:$0xf]
  %v113 = vld [vmem:[%s1 + $0xd4] sm:$0xf]
  %v114 = vld [vmem:[%s1 + $0xd8] sm:$0xf]
  %v115 = vld [vmem:[%s1 + $0xdc] sm:$0xf]
  %v116 = vld [vmem:[%s1 + $0xe0] sm:$0xf]
  %v117 = vld [vmem:[%s1 + $0xe4] sm:$0xf]
  %v118 = vld [vmem:[%s1 + $0xe8] sm:$0xf]
  %v119 = vld [vmem:[%s1 + $0xec] sm:$0xf]
  %v120 = vld [vmem:[%s1 + $0xf0] sm:$0xf]
  %v121 = vld [vmem:[%s1 + $0xf4] sm:$0xf]
  %v122 = vld [vmem:[%s1 + $0xf8] sm:$0xf]
  %v123 = vld [vmem:[%s1 + $0xfc] sm:$0xf]
  %v124 = vld [vmem:[%s1 + $0x100] sm:$0xf]
  %v125 = vld [vmem:[%s1 + $0x104] sm:$0xf]
  %v126 = vld [vmem:[%s1 + $0x108] sm:$0xf]
  %v127 = vld [vmem:[%s1 + $0x10c] sm:$0xf]
  %v128 = vld [vmem:[%s1 + $0x110] sm:$0xf]
  %v129 = vld [vmem:[%s1 + $0x114] sm:$0xf]
  %v130 = vld [vmem:[%s1 + $0x118] sm:$0xf]
  %v131 = vld [vmem:[%s1 + $0x11c] sm:$0xf]
  %v132 = vld [vmem:[%s1 + $0x120] sm:$0xf]
  %v133 = vld [vmem:[%s1 + $0x124] sm:$0xf]
  %v134 = vld [vmem:[%s1 + $0x128] sm:$0xf]
  %v135 = vld [vmem:[%s1 + $0x12c] sm:$0xf]
  %v136 = vld [vmem:[%s1 + $0x130] sm:$0xf]
  %v137 = vld [vmem:[%s1 + $0x134] sm:$0xf]
  %v138 = vld [vmem:[%s1 + $0x138] sm:$0xf]
  %v139 = vld [vmem:[%s1 + $0x13c] sm:$0xf]
  %v188 = vunpack.c.l.b16 %v12
  %v189 = vunpack.c.h.b16 %v12
  %v190 = vunpack.c.l.b16 %v13
  %v191 = vunpack.c.h.b16 %v13
  %v192 = vunpack.c.l.b16 %v14
  %v193 = vunpack.c.l.b16 %v15
  %v194 = vunpack.c.h.b16 %v15
  %v195 = vunpack.c.l.b16 %v16
  %v196 = vunpack.c.h.b16 %v16
  %v197 = vunpack.c.l.b16 %v17
  %v198 = vunpack.c.l.b16 %v18
  %v199 = vunpack.c.h.b16 %v18
  %v200 = vunpack.c.l.b16 %v19
  %v201 = vunpack.c.h.b16 %v19
  %v202 = vunpack.c.l.b16 %v20
  %v203 = vunpack.c.l.b16 %v21
  %v204 = vunpack.c.h.b16 %v21
  %v205 = vunpack.c.l.b16 %v22
  %v206 = vunpack.c.h.b16 %v22
  %v207 = vunpack.c.l.b16 %v23
  %v208 = vunpack.c.l.b16 %v24
  %v209 = vunpack.c.h.b16 %v24
  %v210 = vunpack.c.l.b16 %v25
  %v211 = vunpack.c.h.b16 %v25
  %v212 = vunpack.c.l.b16 %v26
  %v213 = vunpack.c.l.b16 %v27
  %v214 = vunpack.c.h.b16 %v27
  %v215 = vunpack.c.l.b16 %v28
  %v216 = vunpack.c.h.b16 %v28
  %v217 = vunpack.c.l.b16 %v29
  %v218 = vunpack.c.l.b16 %v30
  %v219 = vunpack.c.h.b16 %v30
  %v220 = vunpack.c.l.b16 %v31
  %v221 = vunpack.c.h.b16 %v31
  %v222 = vunpack.c.l.b16 %v32
  %v223 = vunpack.c.l.b16 %v33
  %v224 = vunpack.c.h.b16 %v33
  %v225 = vunpack.c.l.b16 %v34
  %v226 = vunpack.c.h.b16 %v34
  %v227 = vunpack.c.l.b16 %v35
  %v228 = vunpack.c.l.b16 %v36
  %v229 = vunpack.c.h.b16 %v36
  %v230 = vunpack.c.l.b16 %v37
  %v231 = vunpack.c.h.b16 %v37
  %v232 = vunpack.c.l.b16 %v38
  %v233 = vunpack.c.l.b16 %v39
  %v234 = vunpack.c.h.b16 %v39
  %v235 = vunpack.c.l.b16 %v40
  %v236 = vunpack.c.h.b16 %v40
  %v237 = vunpack.c.l.b16 %v41
  %v238 = vunpack.c.l.b16 %v42
  %v239 = vunpack.c.h.b16 %v42
  %v240 = vunpack.c.l.b16 %v43
  %v241 = vunpack.c.h.b16 %v43
  %v242 = vunpack.c.l.b16 %v44
  %v243 = vunpack.c.l.b16 %v45
  %v244 = vunpack.c.h.b16 %v45
  %v245 = vunpack.c.l.b16 %v46
  %v246 = vunpack.c.h.b16 %v46
  %v247 = vunpack.c.l.b16 %v47
  %v248 = vunpack.c.l.b16 %v48
  %v249 = vunpack.c.h.b16 %v48
  %v250 = vunpack.c.l.b16 %v49
  %v251 = vunpack.c.h.b16 %v49
  %v252 = vunpack.c.l.b16 %v50
  %v253 = vunpack.c.l.b16 %v51
  %v254 = vunpack.c.h.b16 %v51
  %v255 = vunpack.c.l.b16 %v52
  %v256 = vunpack.c.h.b16 %v52
  %v257 = vunpack.c.l.b16 %v53
  %v258 = vunpack.c.l.b16 %v54
  %v259 = vunpack.c.h.b16 %v54
  %v260 = vunpack.c.l.b16 %v55
  %v261 = vunpack.c.h.b16 %v55
  %v262 = vunpack.c.l.b16 %v56
  %v263 = vunpack.c.l.b16 %v57
  %v264 = vunpack.c.h.b16 %v57
  %v265 = vunpack.c.l.b16 %v58
  %v266 = vunpack.c.h.b16 %v58
  %v267 = vunpack.c.l.b16 %v59
  %v268 = vpack.c.b16 %v193, %v188
  %v269 = vpack.c.b16 %v194, %v189
  %v270 = vpack.c.b16 %v195, %v190
  %v271 = vpack.c.b16 %v196, %v191
  %v272 = vpack.c.b16 %v197, %v192
  %v273 = vpack.c.b16 %v203, %v198
  %v274 = vpack.c.b16 %v204, %v199
  %v275 = vpack.c.b16 %v205, %v200
  %v276 = vpack.c.b16 %v206, %v201
  %v277 = vpack.c.b16 %v207, %v202
  %v278 = vpack.c.b16 %v213, %v208
  %v279 = vpack.c.b16 %v214, %v209
  %v280 = vpack.c.b16 %v215, %v210
  %v281 = vpack.c.b16 %v216, %v211
  %v282 = vpack.c.b16 %v217, %v212
  %v283 = vpack.c.b16 %v223, %v218
  %v284 = vpack.c.b16 %v224, %v219
  %v285 = vpack.c.b16 %v225, %v220
  %v286 = vpack.c.b16 %v226, %v221
  %v287 = vpack.c.b16 %v227, %v222
  %v288 = vpack.c.b16 %v233, %v228
  %v289 = vpack.c.b16 %v234, %v229
  %v290 = vpack.c.b16 %v235, %v230
  %v291 = vpack.c.b16 %v236, %v231
  %v292 = vpack.c.b16 %v237, %v232
  %v293 = vpack.c.b16 %v243, %v238
  %v294 = vpack.c.b16 %v244, %v239
  %v295 = vpack.c.b16 %v245, %v240
  %v296 = vpack.c.b16 %v246, %v241
  %v297 = vpack.c.b16 %v247, %v242
  %v298 = vpack.c.b16 %v253, %v248
  %v299 = vpack.c.b16 %v254, %v249
  %v300 = vpack.c.b16 %v255, %v250
  %v301 = vpack.c.b16 %v256, %v251
  %v302 = vpack.c.b16 %v257, %v252
  %v303 = vpack.c.b16 %v263, %v258
  %v304 = vpack.c.b16 %v264, %v259
  %v305 = vpack.c.b16 %v265, %v260
  %v306 = vpack.c.b16 %v266, %v261
  %v307 = vpack.c.b16 %v267, %v262
  %v428 = vunpack.c.l.b16 %v60
  %v429 = vunpack.c.l.b16 %v61
  %v430 = vunpack.c.l.b16 %v62
  %v431 = vunpack.c.l.b16 %v63
  %v432 = vunpack.c.l.b16 %v64
  %v433 = vunpack.c.l.b16 %v65
  %v434 = vunpack.c.l.b16 %v66
  %v435 = vunpack.c.l.b16 %v67
  %v436 = vunpack.c.l.b16 %v68
  %v437 = vunpack.c.l.b16 %v69
  %v438 = vunpack.c.l.b16 %v70
  %v439 = vunpack.c.l.b16 %v71
  %v440 = vunpack.c.l.b16 %v72
  %v441 = vunpack.c.l.b16 %v73
  %v442 = vunpack.c.l.b16 %v74
  %v443 = vunpack.c.l.b16 %v75
  %v444 = vunpack.c.l.b16 %v76
  %v445 = vunpack.c.l.b16 %v77
  %v446 = vunpack.c.l.b16 %v78
  %v447 = vunpack.c.l.b16 %v79
  %v448 = vunpack.c.l.b16 %v80
  %v449 = vunpack.c.l.b16 %v81
  %v450 = vunpack.c.l.b16 %v82
  %v451 = vunpack.c.l.b16 %v83
  %v452 = vunpack.c.l.b16 %v84
  %v453 = vunpack.c.l.b16 %v85
  %v454 = vunpack.c.l.b16 %v86
  %v455 = vunpack.c.l.b16 %v87
  %v456 = vunpack.c.l.b16 %v88
  %v457 = vunpack.c.l.b16 %v89
  %v458 = vunpack.c.l.b16 %v90
  %v459 = vunpack.c.l.b16 %v91
  %v460 = vunpack.c.l.b16 %v92
  %v461 = vunpack.c.l.b16 %v93
  %v462 = vunpack.c.l.b16 %v94
  %v463 = vunpack.c.l.b16 %v95
  %v464 = vunpack.c.l.b16 %v96
  %v465 = vunpack.c.l.b16 %v97
  %v466 = vunpack.c.l.b16 %v98
  %v467 = vunpack.c.l.b16 %v99
  %v468 = vunpack.c.l.b16 %v100
  %v469 = vunpack.c.l.b16 %v101
  %v470 = vunpack.c.l.b16 %v102
  %v471 = vunpack.c.l.b16 %v103
  %v472 = vunpack.c.l.b16 %v104
  %v473 = vunpack.c.l.b16 %v105
  %v474 = vunpack.c.l.b16 %v106
  %v475 = vunpack.c.l.b16 %v107
  %v476 = vunpack.c.l.b16 %v108
  %v477 = vunpack.c.l.b16 %v109
  %v478 = vunpack.c.l.b16 %v110
  %v479 = vunpack.c.l.b16 %v111
  %v480 = vunpack.c.l.b16 %v112
  %v481 = vunpack.c.l.b16 %v113
  %v482 = vunpack.c.l.b16 %v114
  %v483 = vunpack.c.l.b16 %v115
  %v484 = vunpack.c.l.b16 %v116
  %v485 = vunpack.c.l.b16 %v117
  %v486 = vunpack.c.l.b16 %v118
  %v487 = vunpack.c.l.b16 %v119
  %v488 = vunpack.c.l.b16 %v120
  %v489 = vunpack.c.l.b16 %v121
  %v490 = vunpack.c.l.b16 %v122
  %v491 = vunpack.c.l.b16 %v123
  %v492 = vunpack.c.l.b16 %v124
  %v493 = vunpack.c.l.b16 %v125
  %v494 = vunpack.c.l.b16 %v126
  %v495 = vunpack.c.l.b16 %v127
  %v496 = vunpack.c.l.b16 %v128
  %v497 = vunpack.c.l.b16 %v129
  %v498 = vunpack.c.l.b16 %v130
  %v499 = vunpack.c.l.b16 %v131
  %v500 = vunpack.c.l.b16 %v132
  %v501 = vunpack.c.l.b16 %v133
  %v502 = vunpack.c.l.b16 %v134
  %v503 = vunpack.c.l.b16 %v135
  %v504 = vunpack.c.l.b16 %v136
  %v505 = vunpack.c.l.b16 %v137
  %v506 = vunpack.c.l.b16 %v138
  %v507 = vunpack.c.l.b16 %v139
  %v508 = vpack.c.b16 %v429, %v428
  %v509 = vpack.c.b16 %v431, %v430
  %v510 = vpack.c.b16 %v433, %v432
  %v511 = vpack.c.b16 %v435, %v434
  %v512 = vpack.c.b16 %v437, %v436
  %v513 = vpack.c.b16 %v439, %v438
  %v514 = vpack.c.b16 %v441, %v440
  %v515 = vpack.c.b16 %v443, %v442
  %v516 = vpack.c.b16 %v445, %v444
  %v517 = vpack.c.b16 %v447, %v446
  %v518 = vpack.c.b16 %v449, %v448
  %v519 = vpack.c.b16 %v451, %v450
  %v520 = vpack.c.b16 %v453, %v452
  %v521 = vpack.c.b16 %v455, %v454
  %v522 = vpack.c.b16 %v457, %v456
  %v523 = vpack.c.b16 %v459, %v458
  %v524 = vpack.c.b16 %v461, %v460
  %v525 = vpack.c.b16 %v463, %v462
  %v526 = vpack.c.b16 %v465, %v464
  %v527 = vpack.c.b16 %v467, %v466
  %v528 = vpack.c.b16 %v469, %v468
  %v529 = vpack.c.b16 %v471, %v470
  %v530 = vpack.c.b16 %v473, %v472
  %v531 = vpack.c.b16 %v475, %v474
  %v532 = vpack.c.b16 %v477, %v476
  %v533 = vpack.c.b16 %v479, %v478
  %v534 = vpack.c.b16 %v481, %v480
  %v535 = vpack.c.b16 %v483, %v482
  %v536 = vpack.c.b16 %v485, %v484
  %v537 = vpack.c.b16 %v487, %v486
  %v538 = vpack.c.b16 %v489, %v488
  %v539 = vpack.c.b16 %v491, %v490
  %v540 = vpack.c.b16 %v493, %v492
  %v541 = vpack.c.b16 %v495, %v494
  %v542 = vpack.c.b16 %v497, %v496
  %v543 = vpack.c.b16 %v499, %v498
  %v544 = vpack.c.b16 %v501, %v500
  %v545 = vpack.c.b16 %v503, %v502
  %v546 = vpack.c.b16 %v505, %v504
  %v547 = vpack.c.b16 %v507, %v506
  %588 = vmatprep.subr.bf16.mxu0 0
  %589 = vmatpush1.bf16.msra.mxu0 %v515
  %590 = vmatprep.subr.bf16.mxu0 0
  %591 = vmatpush1.bf16.msra.mxu0 %v514
  %592 = vmatprep.subr.bf16.mxu0 0
  %593 = vmatpush1.bf16.msra.mxu0 %v513
  %594 = vmatprep.subr.bf16.mxu0 0
  %595 = vmatpush1.bf16.msra.mxu0 %v512
  %596 = vmatprep.subr.bf16.mxu0 0
  %597 = vmatpush1.bf16.msra.mxu0 %v511
  %598 = vmatprep.subr.bf16.mxu0 0
  %599 = vmatpush1.bf16.msra.mxu0 %v510
  %600 = vmatprep.subr.bf16.mxu0 0
  %601 = vmatpush1.bf16.msra.mxu0 %v509
  %602 = vmatprep.subr.bf16.mxu0 0
  %603 = vmatpush1.bf16.msra.mxu0 %v508
  %604 = vmatprep.subr.bf16.mxu0 0
  %605 = vmatpush2.bf16.msra.mxu0 %v523
  %606 = vmatprep.subr.bf16.mxu0 0
  %607 = vmatpush2.bf16.msra.mxu0 %v522
  %608 = vmatprep.subr.bf16.mxu0 0
  %609 = vmatpush2.bf16.msra.mxu0 %v521
  %610 = vmatprep.subr.bf16.mxu0 0
  %611 = vmatpush2.bf16.msra.mxu0 %v520
  %612 = vmatprep.subr.bf16.mxu0 0
  %613 = vmatpush2.bf16.msra.mxu0 %v519
  %614 = vmatprep.subr.bf16.mxu0 0
  %615 = vmatpush2.bf16.msra.mxu0 %v518
  %616 = vmatprep.subr.bf16.mxu0 0
  %617 = vmatpush2.bf16.msra.mxu0 %v517
  %618 = vmatprep.subr.bf16.mxu0 0
  %619 = vmatpush2.bf16.msra.mxu0 %v516
  %620 = vmatprep.mubr.bf16.mxu0 %v269
  %621 = vmatmul.mubr.bf16.gmra.mxu0 %v268
  %v622 = vpop.f32.mrf.mxu0
  %v623 = vadd.f32 0.0, %v622
  %v624 = vpop.f32.mrf.mxu0
  %v625 = vpop.f32.mrf.mxu0
  %v626 = vadd.f32 0.0, %v625
  %v627 = vpop.f32.mrf.mxu0
  %628 = vmatprep.mubr.bf16.mxu0 %v274
  %629 = vmatmul.mubr.bf16.gmra.mxu0 %v273
  %v630 = vpop.f32.mrf.mxu0
  %v631 = vadd.f32 0.0, %v630
  %v632 = vpop.f32.mrf.mxu0
  %v633 = vpop.f32.mrf.mxu0
  %v634 = vadd.f32 0.0, %v633
  %v635 = vpop.f32.mrf.mxu0
  %636 = vmatprep.mubr.bf16.mxu0 %v279
  %637 = vmatmul.mubr.bf16.gmra.mxu0 %v278
  %v638 = vpop.f32.mrf.mxu0
  %v639 = vadd.f32 0.0, %v638
  %v640 = vpop.f32.mrf.mxu0
  %v641 = vpop.f32.mrf.mxu0
  %v642 = vadd.f32 0.0, %v641
  %v643 = vpop.f32.mrf.mxu0
  %644 = vmatprep.mubr.bf16.mxu0 %v284
  %645 = vmatmul.mubr.bf16.gmra.mxu0 %v283
  %v646 = vpop.f32.mrf.mxu0
  %v647 = vadd.f32 0.0, %v646
  %v648 = vpop.f32.mrf.mxu0
  %v649 = vpop.f32.mrf.mxu0
  %v650 = vadd.f32 0.0, %v649
  %v651 = vpop.f32.mrf.mxu0
  %652 = vmatprep.mubr.bf16.mxu0 %v289
  %653 = vmatmul.mubr.bf16.gmra.mxu0 %v288
  %v654 = vpop.f32.mrf.mxu0
  %v655 = vadd.f32 0.0, %v654
  %v656 = vpop.f32.mrf.mxu0
  %v657 = vpop.f32.mrf.mxu0
  %v658 = vadd.f32 0.0, %v657
  %v659 = vpop.f32.mrf.mxu0
  %660 = vmatprep.mubr.bf16.mxu0 %v294
  %661 = vmatmul.mubr.bf16.gmra.mxu0 %v293
  %v662 = vpop.f32.mrf.mxu0
  %v663 = vadd.f32 0.0, %v662
  %v664 = vpop.f32.mrf.mxu0
  %v665 = vpop.f32.mrf.mxu0
  %v666 = vadd.f32 0.0, %v665
  %v667 = vpop.f32.mrf.mxu0
  %668 = vmatprep.mubr.bf16.mxu0 %v299
  %669 = vmatmul.mubr.bf16.gmra.mxu0 %v298
  %v670 = vpop.f32.mrf.mxu0
  %v671 = vadd.f32 0.0, %v670
  %v672 = vpop.f32.mrf.mxu0
  %v673 = vpop.f32.mrf.mxu0
  %v674 = vadd.f32 0.0, %v673
  %v675 = vpop.f32.mrf.mxu0
  %676 = vmatprep.mubr.bf16.mxu0 %v304
  %677 = vmatmul.mubr.bf16.gmra.mxu0 %v303
  %v678 = vpop.f32.mrf.mxu0
  %v679 = vadd.f32 0.0, %v678
  %v680 = vpop.f32.mrf.mxu0
  %v681 = vpop.f32.mrf.mxu0
  %v682 = vadd.f32 0.0, %v681
  %v683 = vpop.f32.mrf.mxu0
  %684 = vdwg.mxu0
  %685 = vmatprep.subr.bf16.mxu0 0
  %686 = vmatpush1.bf16.msra.mxu0 %v531
  %687 = vmatprep.subr.bf16.mxu0 0
  %688 = vmatpush1.bf16.msra.mxu0 %v530
  %689 = vmatprep.subr.bf16.mxu0 0
  %690 = vmatpush1.bf16.msra.mxu0 %v529
  %691 = vmatprep.subr.bf16.mxu0 0
  %692 = vmatpush1.bf16.msra.mxu0 %v528
  %693 = vmatprep.subr.bf16.mxu0 0
  %694 = vmatpush1.bf16.msra.mxu0 %v527
  %695 = vmatprep.subr.bf16.mxu0 0
  %696 = vmatpush1.bf16.msra.mxu0 %v526
  %697 = vmatprep.subr.bf16.mxu0 0
  %698 = vmatpush1.bf16.msra.mxu0 %v525
  %699 = vmatprep.subr.bf16.mxu0 0
  %700 = vmatpush1.bf16.msra.mxu0 %v524
  %701 = vmatprep.subr.bf16.mxu0 0
  %702 = vmatpush2.bf16.msra.mxu0 %v539
  %703 = vmatprep.subr.bf16.mxu0 0
  %704 = vmatpush2.bf16.msra.mxu0 %v538
  %705 = vmatprep.subr.bf16.mxu0 0
  %706 = vmatpush2.bf16.msra.mxu0 %v537
  %707 = vmatprep.subr.bf16.mxu0 0
  %708 = vmatpush2.bf16.msra.mxu0 %v536
  %709 = vmatprep.subr.bf16.mxu0 0
  %710 = vmatpush2.bf16.msra.mxu0 %v535
  %711 = vmatprep.subr.bf16.mxu0 0
  %712 = vmatpush2.bf16.msra.mxu0 %v534
  %713 = vmatprep.subr.bf16.mxu0 0
  %714 = vmatpush2.bf16.msra.mxu0 %v533
  %715 = vmatprep.subr.bf16.mxu0 0
  %716 = vmatpush2.bf16.msra.mxu0 %v532
  %717 = vmatprep.mubr.bf16.mxu0 %v271
  %718 = vmatmul.mubr.bf16.gmra.mxu0 %v270
  %v719 = vpop.f32.mrf.mxu0
  %v720 = vadd.f32 %v623, %v719
  %v721 = vpop.f32.mrf.mxu0
  %v722 = vpop.f32.mrf.mxu0
  %v723 = vadd.f32 %v626, %v722
  %v724 = vpop.f32.mrf.mxu0
  %725 = vmatprep.mubr.bf16.mxu0 %v276
  %726 = vmatmul.mubr.bf16.gmra.mxu0 %v275
  %v727 = vpop.f32.mrf.mxu0
  %v728 = vadd.f32 %v631, %v727
  %v729 = vpop.f32.mrf.mxu0
  %v730 = vpop.f32.mrf.mxu0
  %v731 = vadd.f32 %v634, %v730
  %v732 = vpop.f32.mrf.mxu0
  %733 = vmatprep.mubr.bf16.mxu0 %v281
  %734 = vmatmul.mubr.bf16.gmra.mxu0 %v280
  %v735 = vpop.f32.mrf.mxu0
  %v736 = vadd.f32 %v639, %v735
  %v737 = vpop.f32.mrf.mxu0
  %v738 = vpop.f32.mrf.mxu0
  %v739 = vadd.f32 %v642, %v738
  %v740 = vpop.f32.mrf.mxu0
  %741 = vmatprep.mubr.bf16.mxu0 %v286
  %742 = vmatmul.mubr.bf16.gmra.mxu0 %v285
  %v743 = vpop.f32.mrf.mxu0
  %v744 = vadd.f32 %v647, %v743
  %v745 = vpop.f32.mrf.mxu0
  %v746 = vpop.f32.mrf.mxu0
  %v747 = vadd.f32 %v650, %v746
  %v748 = vpop.f32.mrf.mxu0
  %749 = vmatprep.mubr.bf16.mxu0 %v291
  %750 = vmatmul.mubr.bf16.gmra.mxu0 %v290
  %v751 = vpop.f32.mrf.mxu0
  %v752 = vadd.f32 %v655, %v751
  %v753 = vpop.f32.mrf.mxu0
  %v754 = vpop.f32.mrf.mxu0
  %v755 = vadd.f32 %v658, %v754
  %v756 = vpop.f32.mrf.mxu0
  %757 = vmatprep.mubr.bf16.mxu0 %v296
  %758 = vmatmul.mubr.bf16.gmra.mxu0 %v295
  %v759 = vpop.f32.mrf.mxu0
  %v760 = vadd.f32 %v663, %v759
  %v761 = vpop.f32.mrf.mxu0
  %v762 = vpop.f32.mrf.mxu0
  %v763 = vadd.f32 %v666, %v762
  %v764 = vpop.f32.mrf.mxu0
  %765 = vmatprep.mubr.bf16.mxu0 %v301
  %766 = vmatmul.mubr.bf16.gmra.mxu0 %v300
  %v767 = vpop.f32.mrf.mxu0
  %v768 = vadd.f32 %v671, %v767
  %v769 = vpop.f32.mrf.mxu0
  %v770 = vpop.f32.mrf.mxu0
  %v771 = vadd.f32 %v674, %v770
  %v772 = vpop.f32.mrf.mxu0
  %773 = vmatprep.mubr.bf16.mxu0 %v306
  %774 = vmatmul.mubr.bf16.gmra.mxu0 %v305
  %v775 = vpop.f32.mrf.mxu0
  %v776 = vadd.f32 %v679, %v775
  %v777 = vpop.f32.mrf.mxu0
  %v778 = vpop.f32.mrf.mxu0
  %v779 = vadd.f32 %v682, %v778
  %v780 = vpop.f32.mrf.mxu0
  %781 = vdwg.mxu0
  %782 = vmatprep.subr.bf16.mxu0 0
  %783 = vmatpush1.bf16.msra.mxu0 %v547
  %784 = vmatprep.subr.bf16.mxu0 0
  %785 = vmatpush1.bf16.msra.mxu0 %v546
  %786 = vmatprep.subr.bf16.mxu0 0
  %787 = vmatpush1.bf16.msra.mxu0 %v545
  %788 = vmatprep.subr.bf16.mxu0 0
  %789 = vmatpush1.bf16.msra.mxu0 %v544
  %790 = vmatprep.subr.bf16.mxu0 0
  %791 = vmatpush1.bf16.msra.mxu0 %v543
  %792 = vmatprep.subr.bf16.mxu0 0
  %793 = vmatpush1.bf16.msra.mxu0 %v542
  %794 = vmatprep.subr.bf16.mxu0 0
  %795 = vmatpush1.bf16.msra.mxu0 %v541
  %796 = vmatprep.subr.bf16.mxu0 0
  %797 = vmatpush1.bf16.msra.mxu0 %v540
  %798 = vmatprep.subr.bf16.mxu0 0
  %799 = vmatpush2.bf16.msra.mxu0 0
  %800 = vmatprep.subr.bf16.mxu0 0
  %801 = vmatpush2.bf16.msra.mxu0 0
  %802 = vmatprep.subr.bf16.mxu0 0
  %803 = vmatpush2.bf16.msra.mxu0 0
  %804 = vmatprep.subr.bf16.mxu0 0
  %805 = vmatpush2.bf16.msra.mxu0 0
  %806 = vmatprep.subr.bf16.mxu0 0
  %807 = vmatpush2.bf16.msra.mxu0 0
  %808 = vmatprep.subr.bf16.mxu0 0
  %809 = vmatpush2.bf16.msra.mxu0 0
  %810 = vmatprep.subr.bf16.mxu0 0
  %811 = vmatpush2.bf16.msra.mxu0 0
  %812 = vmatprep.subr.bf16.mxu0 0
  %813 = vmatpush2.bf16.msra.mxu0 0
  %814 = vmatprep.mubr.bf16.mxu0 0
  %815 = vmatmul.mubr.bf16.gmra.mxu0 %v272
  %v816 = vpop.f32.mrf.mxu0
  %v817 = vadd.f32 %v720, %v816
  %v818 = vpop.f32.mrf.mxu0
  %v819 = vpop.f32.mrf.mxu0
  %v820 = vadd.f32 %v723, %v819
  %v821 = vpop.f32.mrf.mxu0
  %822 = vmatprep.mubr.bf16.mxu0 0
  %823 = vmatmul.mubr.bf16.gmra.mxu0 %v277
  %v824 = vpop.f32.mrf.mxu0
  %v825 = vadd.f32 %v728, %v824
  %v826 = vpop.f32.mrf.mxu0
  %v827 = vpop.f32.mrf.mxu0
  %v828 = vadd.f32 %v731, %v827
  %v829 = vpop.f32.mrf.mxu0
  %830 = vmatprep.mubr.bf16.mxu0 0
  %831 = vmatmul.mubr.bf16.gmra.mxu0 %v282
  %v832 = vpop.f32.mrf.mxu0
  %v833 = vadd.f32 %v736, %v832
  %v834 = vpop.f32.mrf.mxu0
  %v835 = vpop.f32.mrf.mxu0
  %v836 = vadd.f32 %v739, %v835
  %v837 = vpop.f32.mrf.mxu0
  %838 = vmatprep.mubr.bf16.mxu0 0
  %839 = vmatmul.mubr.bf16.gmra.mxu0 %v287
  %v840 = vpop.f32.mrf.mxu0
  %v841 = vadd.f32 %v744, %v840
  %v842 = vpop.f32.mrf.mxu0
  %v843 = vpop.f32.mrf.mxu0
  %v844 = vadd.f32 %v747, %v843
  %v845 = vpop.f32.mrf.mxu0
  %846 = vmatprep.mubr.bf16.mxu0 0
  %847 = vmatmul.mubr.bf16.gmra.mxu0 %v292
  %v848 = vpop.f32.mrf.mxu0
  %v849 = vadd.f32 %v752, %v848
  %v850 = vpop.f32.mrf.mxu0
  %v851 = vpop.f32.mrf.mxu0
  %v852 = vadd.f32 %v755, %v851
  %v853 = vpop.f32.mrf.mxu0
  %854 = vmatprep.mubr.bf16.mxu0 0
  %855 = vmatmul.mubr.bf16.gmra.mxu0 %v297
  %v856 = vpop.f32.mrf.mxu0
  %v857 = vadd.f32 %v760, %v856
  %v858 = vpop.f32.mrf.mxu0
  %v859 = vpop.f32.mrf.mxu0
  %v860 = vadd.f32 %v763, %v859
  %v861 = vpop.f32.mrf.mxu0
  %862 = vmatprep.mubr.bf16.mxu0 0
  %863 = vmatmul.mubr.bf16.gmra.mxu0 %v302
  %v864 = vpop.f32.mrf.mxu0
  %v865 = vadd.f32 %v768, %v864
  %v866 = vpop.f32.mrf.mxu0
  %v867 = vpop.f32.mrf.mxu0
  %v868 = vadd.f32 %v771, %v867
  %v869 = vpop.f32.mrf.mxu0
  %870 = vmatprep.mubr.bf16.mxu0 0
  %871 = vmatmul.mubr.bf16.gmra.mxu0 %v307
  %v872 = vpop.f32.mrf.mxu0
  %v873 = vadd.f32 %v776, %v872
  %v874 = vpop.f32.mrf.mxu0
  %v875 = vpop.f32.mrf.mxu0
  %v876 = vadd.f32 %v779, %v875
  %v877 = vpop.f32.mrf.mxu0
  %878 = vdwg.mxu0
  %879 = vst [vmem:[%s2] sm:$0xff] %v817
  %880 = vst [vmem:[%s2 + $0x8] sm:$0xff] %v820
  %881 = vst [vmem:[%s2 + $0x10] sm:$0xff] %v825
  %882 = vst [vmem:[%s2 + $0x18] sm:$0xff] %v828
  %883 = vst [vmem:[%s2 + $0x20] sm:$0xff] %v833
  %884 = vst [vmem:[%s2 + $0x28] sm:$0xff] %v836
  %885 = vst [vmem:[%s2 + $0x30] sm:$0xff] %v841
  %886 = vst [vmem:[%s2 + $0x38] sm:$0xff] %v844
  %887 = vst [vmem:[%s2 + $0x40] sm:$0xff] %v849
  %888 = vst [vmem:[%s2 + $0x48] sm:$0xff] %v852
  %889 = vst [vmem:[%s2 + $0x50] sm:$0xff] %v857
  %890 = vst [vmem:[%s2 + $0x58] sm:$0xff] %v860
  %891 = vst [vmem:[%s2 + $0x60] sm:$0xff] %v865
  %892 = vst [vmem:[%s2 + $0x68] sm:$0xff] %v868
  %893 = vst [vmem:[%s2 + $0x70] sm:$0xff] %v873
  %894 = vst [vmem:[%s2 + $0x78] sm:$0xff] %v876
  // Predicated region
  $region10: #{resnet_forward.54} parent=0 // pred_check
    _
  $region11: #{resnet_forward.54} parent=0 // pred_check_branch
    %896 = sbr.rel (0) target = $region13
  $region12: #{resnet_forward.54} parent=0 // pred_region
    _
  $region13: #{resnet_forward.54} parent=0 // pred_fallthru
    _
  // Predicated region
  $region14: #{resnet_forward.54} parent=0 // pred_check
    _
  $region15: #{resnet_forward.54} parent=0 // pred_check_branch
    %898 = sbr.rel (0) target = $region17
  $region16: #{resnet_forward.54} parent=0 // pred_region
    _
  $region17: #{resnet_forward.54} parent=0 // pred_fallthru
    _

// kernel: resnet_forward.56
$region0: #{resnet_forward.56}
  #allocation0 [shape = 'u32[]', space=smem, size = 0x4, offset = 0x4, fixed_abs, tag = 'smem constant byte address 0x4 - core index']
  #allocation1 [shape = 'u32[144,128]{1,0:T(1,128)}', space=vmem, size = 0x12000, scoped, tag = 'internal scratch']
  %s0 = inlined_call_operand.vmem [shape: f32[64,128], index: 0, kind: input, shape index: {}]
  %s1 = inlined_call_operand.vmem [shape: f32[1,128], index: 1, kind: input, shape index: {}]
  %s2 = inlined_call_operand.vmem [shape: f32[1,128], index: 2, kind: input, shape index: {}]
  %s3 = inlined_call_operand.vmem [shape: f32[64,128], index: 3, kind: output, shape index: {}]
  %s4 = sld [smem:[#allocation0]]
  $region22: #{resnet_forward.56} parent=0
    _
  %s6 = ssub.s32 1, %s4
  %s7 = scalar_select 0, %s6, %s4
  // Predicated region
  $region2: #{resnet_forward.56} parent=0 // pred_check
    _
  $region3: #{resnet_forward.56} parent=0 // pred_check_branch
    %9 = sbr.rel (0) target = $region5
  $region4: #{resnet_forward.56} parent=0 // pred_region
    _
  $region5: #{resnet_forward.56} parent=0 // pred_fallthru
    _
  // Predicated region
  $region6: #{resnet_forward.56} parent=0 // pred_check
    _
  $region7: #{resnet_forward.56} parent=0 // pred_check_branch
    %11 = sbr.rel (0) target = $region9
  $region8: #{resnet_forward.56} parent=0 // pred_region
    _
  $region9: #{resnet_forward.56} parent=0 // pred_fallthru
    _
  // Predicated region
  $region10: #{resnet_forward.56} parent=0 // pred_check
    _
  $region11: #{resnet_forward.56} parent=0 // pred_check_branch
    %13 = sbr.rel (0) target = $region13
  $region12: #{resnet_forward.56} parent=0 // pred_region
    _
  $region13: #{resnet_forward.56} parent=0 // pred_fallthru
    _
  %v14 = vld [vmem:[%s0] sm:$0xff]
  %v15 = vld [vmem:[%s0 + $0x8] sm:$0xff]
  %v16 = vld [vmem:[%s0 + $0x10] sm:$0xff]
  %v17 = vld [vmem:[%s0 + $0x18] sm:$0xff]
  %v18 = vld [vmem:[%s0 + $0x20] sm:$0xff]
  %v19 = vld [vmem:[%s0 + $0x28] sm:$0xff]
  %v20 = vld [vmem:[%s0 + $0x30] sm:$0xff]
  %v21 = vld [vmem:[%s0 + $0x38] sm:$0xff]
  %v22 = vld [vmem:[%s1] sm:$0x1]
  %v24 = vlaneseq
  %v25 = vshrl.u32 %v24, 7
  %v26 = vsub.s32 0, %v25
  %v27 = vrot.slane %v22, %v26
  %v29 = vmul.f32 %v14, %v27
  %v30 = vmul.f32 %v15, %v27
  %v31 = vmul.f32 %v16, %v27
  %v32 = vmul.f32 %v17, %v27
  %v33 = vmul.f32 %v18, %v27
  %v34 = vmul.f32 %v19, %v27
  %v35 = vmul.f32 %v20, %v27
  %v36 = vmul.f32 %v21, %v27
  %v37 = vld [vmem:[%s2] sm:$0x1]
  %v39 = vlaneseq
  %v40 = vshrl.u32 %v39, 7
  %v41 = vsub.s32 0, %v40
  %v42 = vrot.slane %v37, %v41
  %v44 = vadd.f32 %v29, %v42
  %v45 = vadd.f32 %v30, %v42
  %v46 = vadd.f32 %v31, %v42
  %v47 = vadd.f32 %v32, %v42
  %v48 = vadd.f32 %v33, %v42
  %v49 = vadd.f32 %v34, %v42
  %v50 = vadd.f32 %v35, %v42
  %v51 = vadd.f32 %v36, %v42
  %52 = vst [vmem:[%s3] sm:$0xff] %v44
  %53 = vst [vmem:[%s3 + $0x8] sm:$0xff] %v45
  %54 = vst [vmem:[%s3 + $0x10] sm:$0xff] %v46
  %55 = vst [vmem:[%s3 + $0x18] sm:$0xff] %v47
  %56 = vst [vmem:[%s3 + $0x20] sm:$0xff] %v48
  %57 = vst [vmem:[%s3 + $0x28] sm:$0xff] %v49
  %58 = vst [vmem:[%s3 + $0x30] sm:$0xff] %v50
  %59 = vst [vmem:[%s3 + $0x38] sm:$0xff] %v51
  // Predicated region
  $region14: #{resnet_forward.56} parent=0 // pred_check
    _
  $region15: #{resnet_forward.56} parent=0 // pred_check_branch
    %61 = sbr.rel (0) target = $region17
  $region16: #{resnet_forward.56} parent=0 // pred_region
    _
  $region17: #{resnet_forward.56} parent=0 // pred_fallthru
    _
  // Predicated region
  $region18: #{resnet_forward.56} parent=0 // pred_check
    _
  $region19: #{resnet_forward.56} parent=0 // pred_check_branch
    %63 = sbr.rel (0) target = $region21
  $region20: #{resnet_forward.56} parent=0 // pred_region
    _
  $region21: #{resnet_forward.56} parent=0 // pred_fallthru
    _

// kernel: resnet_forward.57
$region0: #{resnet_forward.57}
  #allocation0 [shape = 'u32[]', space=smem, size = 0x4, offset = 0x4, fixed_abs, tag = 'smem constant byte address 0x4 - core index']
  #allocation1 [shape = 'u32[144,128]{1,0:T(1,128)}', space=vmem, size = 0x12000, scoped, tag = 'internal scratch']
  %s0 = inlined_call_operand.vmem [shape: f32[64,128], index: 0, kind: input, shape index: {}]
  %s1 = inlined_call_operand.vmem [shape: f32[1,128], index: 1, kind: input, shape index: {}]
  %s2 = inlined_call_operand.vmem [shape: f32[1,128], index: 2, kind: input, shape index: {}]
  %s3 = inlined_call_operand.vmem [shape: f32[64,128], index: 3, kind: input, shape index: {}]
  %s4 = inlined_call_operand.vmem [shape: f32[64,128], index: 4, kind: output, shape index: {}]
  %s5 = sld [smem:[#allocation0]]
  $region26: #{resnet_forward.57} parent=0
    _
  %s7 = ssub.s32 1, %s5
  %s8 = scalar_select 0, %s7, %s5
  // Predicated region
  $region2: #{resnet_forward.57} parent=0 // pred_check
    _
  $region3: #{resnet_forward.57} parent=0 // pred_check_branch
    %10 = sbr.rel (0) target = $region5
  $region4: #{resnet_forward.57} parent=0 // pred_region
    _
  $region5: #{resnet_forward.57} parent=0 // pred_fallthru
    _
  // Predicated region
  $region6: #{resnet_forward.57} parent=0 // pred_check
    _
  $region7: #{resnet_forward.57} parent=0 // pred_check_branch
    %12 = sbr.rel (0) target = $region9
  $region8: #{resnet_forward.57} parent=0 // pred_region
    _
  $region9: #{resnet_forward.57} parent=0 // pred_fallthru
    _
  // Predicated region
  $region10: #{resnet_forward.57} parent=0 // pred_check
    _
  $region11: #{resnet_forward.57} parent=0 // pred_check_branch
    %14 = sbr.rel (0) target = $region13
  $region12: #{resnet_forward.57} parent=0 // pred_region
    _
  $region13: #{resnet_forward.57} parent=0 // pred_fallthru
    _
  // Predicated region
  $region14: #{resnet_forward.57} parent=0 // pred_check
    _
  $region15: #{resnet_forward.57} parent=0 // pred_check_branch
    %16 = sbr.rel (0) target = $region17
  $region16: #{resnet_forward.57} parent=0 // pred_region
    _
  $region17: #{resnet_forward.57} parent=0 // pred_fallthru
    _
  %v17 = vld [vmem:[%s0] sm:$0xff]
  %v18 = vld [vmem:[%s0 + $0x8] sm:$0xff]
  %v19 = vld [vmem:[%s0 + $0x10] sm:$0xff]
  %v20 = vld [vmem:[%s0 + $0x18] sm:$0xff]
  %v21 = vld [vmem:[%s0 + $0x20] sm:$0xff]
  %v22 = vld [vmem:[%s0 + $0x28] sm:$0xff]
  %v23 = vld [vmem:[%s0 + $0x30] sm:$0xff]
  %v24 = vld [vmem:[%s0 + $0x38] sm:$0xff]
  %v25 = vld [vmem:[%s1] sm:$0x1]
  %v27 = vlaneseq
  %v28 = vshrl.u32 %v27, 7
  %v29 = vsub.s32 0, %v28
  %v30 = vrot.slane %v25, %v29
  %v32 = vmul.f32 %v17, %v30
  %v33 = vmul.f32 %v18, %v30
  %v34 = vmul.f32 %v19, %v30
  %v35 = vmul.f32 %v20, %v30
  %v36 = vmul.f32 %v21, %v30
  %v37 = vmul.f32 %v22, %v30
  %v38 = vmul.f32 %v23, %v30
  %v39 = vmul.f32 %v24, %v30
  %v40 = vld [vmem:[%s2] sm:$0x1]
  %v42 = vlaneseq
  %v43 = vshrl.u32 %v42, 7
  %v44 = vsub.s32 0, %v43
  %v45 = vrot.slane %v40, %v44
  %v47 = vadd.f32 %v32, %v45
  %v48 = vadd.f32 %v33, %v45
  %v49 = vadd.f32 %v34, %v45
  %v50 = vadd.f32 %v35, %v45
  %v51 = vadd.f32 %v36, %v45
  %v52 = vadd.f32 %v37, %v45
  %v53 = vadd.f32 %v38, %v45
  %v54 = vadd.f32 %v39, %v45
  %v55 = vld [vmem:[%s3] sm:$0xff]
  %v56 = vld [vmem:[%s3 + $0x8] sm:$0xff]
  %v57 = vld [vmem:[%s3 + $0x10] sm:$0xff]
  %v58 = vld [vmem:[%s3 + $0x18] sm:$0xff]
  %v59 = vld [vmem:[%s3 + $0x20] sm:$0xff]
  %v60 = vld [vmem:[%s3 + $0x28] sm:$0xff]
  %v61 = vld [vmem:[%s3 + $0x30] sm:$0xff]
  %v62 = vld [vmem:[%s3 + $0x38] sm:$0xff]
  %v63 = vadd.f32 %v47, %v55
  %v64 = vadd.f32 %v48, %v56
  %v65 = vadd.f32 %v49, %v57
  %v66 = vadd.f32 %v50, %v58
  %v67 = vadd.f32 %v51, %v59
  %v68 = vadd.f32 %v52, %v60
  %v69 = vadd.f32 %v53, %v61
  %v70 = vadd.f32 %v54, %v62
  %v71 = vmax.f32 %v63, 0.0
  %v72 = vmax.f32 %v64, 0.0
  %v73 = vmax.f32 %v65, 0.0
  %v74 = vmax.f32 %v66, 0.0
  %v75 = vmax.f32 %v67, 0.0
  %v76 = vmax.f32 %v68, 0.0
  %v77 = vmax.f32 %v69, 0.0
  %v78 = vmax.f32 %v70, 0.0
  %79 = vst [vmem:[%s4] sm:$0xff] %v71
  %80 = vst [vmem:[%s4 + $0x8] sm:$0xff] %v72
  %81 = vst [vmem:[%s4 + $0x10] sm:$0xff] %v73
  %82 = vst [vmem:[%s4 + $0x18] sm:$0xff] %v74
  %83 = vst [vmem:[%s4 + $0x20] sm:$0xff] %v75
  %84 = vst [vmem:[%s4 + $0x28] sm:$0xff] %v76
  %85 = vst [vmem:[%s4 + $0x30] sm:$0xff] %v77
  %86 = vst [vmem:[%s4 + $0x38] sm:$0xff] %v78
  // Predicated region
  $region18: #{resnet_forward.57} parent=0 // pred_check
    _
  $region19: #{resnet_forward.57} parent=0 // pred_check_branch
    %88 = sbr.rel (0) target = $region21
  $region20: #{resnet_forward.57} parent=0 // pred_region
    _
  $region21: #{resnet_forward.57} parent=0 // pred_fallthru
    _
  // Predicated region
  $region22: #{resnet_forward.57} parent=0 // pred_check
    _
  $region23: #{resnet_forward.57} parent=0 // pred_check_branch
    %90 = sbr.rel (0) target = $region25
  $region24: #{resnet_forward.57} parent=0 // pred_region
    _
  $region25: #{resnet_forward.57} parent=0 // pred_fallthru
    _

// kernel: resnet_forward.62
$region0: #{resnet_forward.62}
  #allocation0 [shape = 'u32[]', space=smem, size = 0x4, offset = 0x4, fixed_abs, tag = 'smem constant byte address 0x4 - core index']
  #allocation1 [shape = 'u32[144,128]{1,0:T(1,128)}', space=vmem, size = 0x12000, scoped, tag = 'internal scratch']
  %s0 = inlined_call_operand.vmem [shape: f32[2,64,64], index: 0, kind: input, shape index: {}]
  %s1 = inlined_call_operand.vmem [shape: f32[2,1,64], index: 1, kind: output, shape index: {}]
  %s2 = sld [smem:[#allocation0]]
  $region14: #{resnet_forward.62} parent=0
    _
  %s4 = ssub.s32 1, %s2
  %s5 = scalar_select 0, %s4, %s2
  // Predicated region
  $region2: #{resnet_forward.62} parent=0 // pred_check
    _
  $region3: #{resnet_forward.62} parent=0 // pred_check_branch
    %7 = sbr.rel (0) target = $region5
  $region4: #{resnet_forward.62} parent=0 // pred_region
    _
  $region5: #{resnet_forward.62} parent=0 // pred_fallthru
    _
  %v8 = vld [vmem:[%s0] sm:$0xff]
  %v9 = vld [vmem:[%s0 + $0x8] sm:$0xff]
  %v10 = vld [vmem:[%s0 + $0x10] sm:$0xff]
  %v11 = vld [vmem:[%s0 + $0x18] sm:$0xff]
  %v12 = vld [vmem:[%s0 + $0x20] sm:$0xff]
  %v13 = vld [vmem:[%s0 + $0x28] sm:$0xff]
  %v14 = vld [vmem:[%s0 + $0x30] sm:$0xff]
  %v15 = vld [vmem:[%s0 + $0x38] sm:$0xff]
  %v16 = vld [vmem:[%s0 + $0x40] sm:$0xff]
  %v17 = vld [vmem:[%s0 + $0x48] sm:$0xff]
  %v18 = vld [vmem:[%s0 + $0x50] sm:$0xff]
  %v19 = vld [vmem:[%s0 + $0x58] sm:$0xff]
  %v20 = vld [vmem:[%s0 + $0x60] sm:$0xff]
  %v21 = vld [vmem:[%s0 + $0x68] sm:$0xff]
  %v22 = vld [vmem:[%s0 + $0x70] sm:$0xff]
  %v23 = vld [vmem:[%s0 + $0x78] sm:$0xff]
  %vm24 = vcmask 523264
  %v25 = vsel %vm24, %v8, 0.0
  %v26 = vsel %vm24, %v9, 0.0
  %v27 = vadd.f32 %v25, %v26
  %v28 = vsel %vm24, %v10, 0.0
  %v29 = vadd.f32 %v27, %v28
  %v30 = vsel %vm24, %v11, 0.0
  %v31 = vadd.f32 %v29, %v30
  %v32 = vsel %vm24, %v12, 0.0
  %v33 = vadd.f32 %v31, %v32
  %v34 = vsel %vm24, %v13, 0.0
  %v35 = vadd.f32 %v33, %v34
  %v36 = vsel %vm24, %v14, 0.0
  %v37 = vadd.f32 %v35, %v36
  %v38 = vsel %vm24, %v15, 0.0
  %v39 = vadd.f32 %v37, %v38
  %v40 = vrot.slane %v39, 4
  %v41 = vadd.f32 %v39, %v40
  %v42 = vrot.slane %v41, 2
  %v43 = vadd.f32 %v41, %v42
  %v44 = vrot.slane %v43, 1
  %v45 = vadd.f32 %v43, %v44
  %v46 = vsel %vm24, %v16, 0.0
  %v47 = vsel %vm24, %v17, 0.0
  %v48 = vadd.f32 %v46, %v47
  %v49 = vsel %vm24, %v18, 0.0
  %v50 = vadd.f32 %v48, %v49
  %v51 = vsel %vm24, %v19, 0.0
  %v52 = vadd.f32 %v50, %v51
  %v53 = vsel %vm24, %v20, 0.0
  %v54 = vadd.f32 %v52, %v53
  %v55 = vsel %vm24, %v21, 0.0
  %v56 = vadd.f32 %v54, %v55
  %v57 = vsel %vm24, %v22, 0.0
  %v58 = vadd.f32 %v56, %v57
  %v59 = vsel %vm24, %v23, 0.0
  %v60 = vadd.f32 %v58, %v59
  %v61 = vrot.slane %v60, 4
  %v62 = vadd.f32 %v60, %v61
  %v63 = vrot.slane %v62, 2
  %v64 = vadd.f32 %v62, %v63
  %v65 = vrot.slane %v64, 1
  %v66 = vadd.f32 %v64, %v65
  %v67 = vrcp.pop 64.0
  %v68 = vmul.f32 %v45, %v67
  %v69 = vmul.f32 %v66, %v67
  %vm70 = vcmask 516096
  %71 = vst.msk [vmem:[%s1] sm:$0x1] %vm70, %v68
  %72 = vst.msk [vmem:[%s1 + $0x1] sm:$0x1] %vm70, %v69
  // Predicated region
  $region6: #{resnet_forward.62} parent=0 // pred_check
    _
  $region7: #{resnet_forward.62} parent=0 // pred_check_branch
    %74 = sbr.rel (0) target = $region9
  $region8: #{resnet_forward.62} parent=0 // pred_region
    _
  $region9: #{resnet_forward.62} parent=0 // pred_fallthru
    _
  // Predicated region
  $region10: #{resnet_forward.62} parent=0 // pred_check
    _
  $region11: #{resnet_forward.62} parent=0 // pred_check_branch
    %76 = sbr.rel (0) target = $region13
  $region12: #{resnet_forward.62} parent=0 // pred_region
    _
  $region13: #{resnet_forward.62} parent=0 // pred_fallthru
    _

// kernel: resnet_forward.63
$region0: #{resnet_forward.63}
  #allocation0 [shape = 'u32[]', space=smem, size = 0x4, offset = 0x4, fixed_abs, tag = 'smem constant byte address 0x4 - core index']
  #allocation1 [shape = 'u32[144,128]{1,0:T(1,128)}', space=vmem, size = 0x12000, scoped, tag = 'internal scratch']
  %s0 = inlined_call_operand.vmem [shape: bf16[8,128], index: 0, kind: input, shape index: {}]
  %s1 = inlined_call_operand.vmem [shape: bf16[128,128], index: 1, kind: input, shape index: {}]
  %s2 = inlined_call_operand.vmem [shape: f32[1,128], index: 2, kind: input, shape index: {}]
  %s3 = inlined_call_operand.vmem [shape: f32[8,128], index: 3, kind: output, shape index: {}]
  %s4 = sld [smem:[#allocation0]]
  $region22: #{resnet_forward.63} parent=0
    _
  %s6 = ssub.s32 1, %s4
  %s7 = scalar_select 0, %s6, %s4
  // Predicated region
  $region2: #{resnet_forward.63} parent=0 // pred_check
    _
  $region3: #{resnet_forward.63} parent=0 // pred_check_branch
    %9 = sbr.rel (0) target = $region5
  $region4: #{resnet_forward.63} parent=0 // pred_region
    _
  $region5: #{resnet_forward.63} parent=0 // pred_fallthru
    _
  // Predicated region
  $region6: #{resnet_forward.63} parent=0 // pred_check
    _
  $region7: #{resnet_forward.63} parent=0 // pred_check_branch
    %11 = sbr.rel (0) target = $region9
  $region8: #{resnet_forward.63} parent=0 // pred_region
    _
  $region9: #{resnet_forward.63} parent=0 // pred_fallthru
    _
  // Predicated region
  $region10: #{resnet_forward.63} parent=0 // pred_check
    _
  $region11: #{resnet_forward.63} parent=0 // pred_check_branch
    %13 = sbr.rel (0) target = $region13
  $region12: #{resnet_forward.63} parent=0 // pred_region
    _
  $region13: #{resnet_forward.63} parent=0 // pred_fallthru
    _
  %v15 = vld [vmem:[%s0] sm:$0xf]
  %v16 = vld [vmem:[%s1] sm:$0xf]
  %v17 = vld [vmem:[%s1 + $0x4] sm:$0xf]
  %v18 = vld [vmem:[%s1 + $0x8] sm:$0xf]
  %v19 = vld [vmem:[%s1 + $0xc] sm:$0xf]
  %v20 = vld [vmem:[%s1 + $0x10] sm:$0xf]
  %v21 = vld [vmem:[%s1 + $0x14] sm:$0xf]
  %v22 = vld [vmem:[%s1 + $0x18] sm:$0xf]
  %v23 = vld [vmem:[%s1 + $0x1c] sm:$0xf]
  %v24 = vld [vmem:[%s1 + $0x20] sm:$0xf]
  %v25 = vld [vmem:[%s1 + $0x24] sm:$0xf]
  %v26 = vld [vmem:[%s1 + $0x28] sm:$0xf]
  %v27 = vld [vmem:[%s1 + $0x2c] sm:$0xf]
  %v28 = vld [vmem:[%s1 + $0x30] sm:$0xf]
  %v29 = vld [vmem:[%s1 + $0x34] sm:$0xf]
  %v30 = vld [vmem:[%s1 + $0x38] sm:$0xf]
  %v31 = vld [vmem:[%s1 + $0x3c] sm:$0xf]
  %v32 = vld [vmem:[%s2] sm:$0x1]
  %v34 = vlaneseq
  %v35 = vshrl.u32 %v34, 7
  %v36 = vsub.s32 0, %v35
  %v37 = vrot.slane %v32, %v36
  %v55 = vunpack.c.l.b16 %v16
  %v56 = vunpack.c.l.b16 %v17
  %v57 = vunpack.c.l.b16 %v18
  %v58 = vunpack.c.l.b16 %v19
  %v59 = vunpack.c.l.b16 %v20
  %v60 = vunpack.c.l.b16 %v21
  %v61 = vunpack.c.l.b16 %v22
  %v62 = vunpack.c.l.b16 %v23
  %v63 = vunpack.c.l.b16 %v24
  %v64 = vunpack.c.l.b16 %v25
  %v65 = vunpack.c.l.b16 %v26
  %v66 = vunpack.c.l.b16 %v27
  %v67 = vunpack.c.l.b16 %v28
  %v68 = vunpack.c.l.b16 %v29
  %v69 = vunpack.c.l.b16 %v30
  %v70 = vunpack.c.l.b16 %v31
  %v71 = vpack.c.b16 %v56, %v55
  %v72 = vpack.c.b16 %v58, %v57
  %v73 = vpack.c.b16 %v60, %v59
  %v74 = vpack.c.b16 %v62, %v61
  %v75 = vpack.c.b16 %v64, %v63
  %v76 = vpack.c.b16 %v66, %v65
  %v77 = vpack.c.b16 %v68, %v67
  %v78 = vpack.c.b16 %v70, %v69
  %87 = vmatprep.subr.bf16.mxu0 0
  %88 = vmatpush1.bf16.msra.mxu0 %v78
  %89 = vmatprep.subr.bf16.mxu0 0
  %90 = vmatpush1.bf16.msra.mxu0 %v77
  %91 = vmatprep.subr.bf16.mxu0 0
  %92 = vmatpush1.bf16.msra.mxu0 %v76
  %93 = vmatprep.subr.bf16.mxu0 0
  %94 = vmatpush1.bf16.msra.mxu0 %v75
  %95 = vmatprep.subr.bf16.mxu0 0
  %96 = vmatpush1.bf16.msra.mxu0 %v74
  %97 = vmatprep.subr.bf16.mxu0 0
  %98 = vmatpush1.bf16.msra.mxu0 %v73
  %99 = vmatprep.subr.bf16.mxu0 0
  %100 = vmatpush1.bf16.msra.mxu0 %v72
  %101 = vmatprep.subr.bf16.mxu0 0
  %102 = vmatpush1.bf16.msra.mxu0 %v71
  %103 = vmatprep.subr.bf16.mxu0 0
  %104 = vmatpush2.bf16.msra.mxu0 0
  %105 = vmatprep.subr.bf16.mxu0 0
  %106 = vmatpush2.bf16.msra.mxu0 0
  %107 = vmatprep.subr.bf16.mxu0 0
  %108 = vmatpush2.bf16.msra.mxu0 0
  %109 = vmatprep.subr.bf16.mxu0 0
  %110 = vmatpush2.bf16.msra.mxu0 0
  %111 = vmatprep.subr.bf16.mxu0 0
  %112 = vmatpush2.bf16.msra.mxu0 0
  %113 = vmatprep.subr.bf16.mxu0 0
  %114 = vmatpush2.bf16.msra.mxu0 0
  %115 = vmatprep.subr.bf16.mxu0 0
  %116 = vmatpush2.bf16.msra.mxu0 0
  %117 = vmatprep.subr.bf16.mxu0 0
  %118 = vmatpush2.bf16.msra.mxu0 0
  %119 = vmatprep.mubr.bf16.mxu0 0
  %120 = vmatmul.mubr.bf16.gmra.mxu0 %v15
  %v121 = vpop.f32.mrf.mxu0
  %v122 = vadd.f32 %v37, %v121
  %v123 = vpop.f32.mrf.mxu0
  %v124 = vpop.f32.mrf.mxu0
  %v125 = vpop.f32.mrf.mxu0
  %126 = vdwg.mxu0
  %127 = vst [vmem:[%s3] sm:$0xff] %v122
  // Predicated region
  $region14: #{resnet_forward.63} parent=0 // pred_check
    _
  $region15: #{resnet_forward.63} parent=0 // pred_check_branch
    %129 = sbr.rel (0) target = $region17
  $region16: #{resnet_forward.63} parent=0 // pred_region
    _
  $region17: #{resnet_forward.63} parent=0 // pred_fallthru
    _
  // Predicated region
  $region18: #{resnet_forward.63} parent=0 // pred_check
    _
  $region19: #{resnet_forward.63} parent=0 // pred_check_branch
    %131 = sbr.rel (0) target = $region21
  $region20: #{resnet_forward.63} parent=0 // pred_region
    _
  $region21: #{resnet_forward.63} parent=0 // pred_fallthru
    _

</llo_original>
